<compile_context>
chip_gen: v7x
topology: tpu7x:2x2x1
jax: 0.10.0
libtpu: 0.0.40
codegen_flags: <defaults>
</compile_context>

<pallas_src>
import functools
import math

import jax
import jax.numpy as jnp
from jax.experimental import pallas as pl
from jax.experimental.pallas import tpu as pltpu


# ------------------------------ fused kernel --------------------------------

def _fused_denoiser_kernel(
    xcat_ref, tsin_ref, bias_ref, qpos_ref,
    t1w_ref, t1b_ref, t2w_ref, t2b_ref,
    inw_ref, inb_ref, outw_ref, outb_ref,
    wqkv_ref, bqkv_ref, wo_ref, bo_ref,
    ln1g_ref, ln1b_ref, w1_ref, b1_ref,
    w2_ref, b2_ref, ln2g_ref, ln2b_ref,
    o_ref,
    xbuf, abuf, qkvbuf,
    *, num_heads, num_layers, seq):
    """Whole ConditionalDenoiser forward for one batch element (grid over batch)."""
    D = qpos_ref.shape[-1]
    hd = D // num_heads
    S = seq
    S1 = seq + 1
    scale = 1.0 / math.sqrt(hd)

    def gelu(y):
        # TODO(synk): PyTorch nn.GELU() default is the exact erf form; tanh
        # approximation used for guaranteed Mosaic lowering (diff ~1e-3).
        c = 0.7978845608028654  # sqrt(2/pi)
        return 0.5 * y * (1.0 + jnp.tanh(c * (y + 0.044715 * y * y * y)))

    def layernorm(v, g, b):
        mu = jnp.mean(v, axis=-1, keepdims=True)
        var = jnp.mean((v - mu) * (v - mu), axis=-1, keepdims=True)
        return (v - mu) * jax.lax.rsqrt(var + 1e-5) * g + b

    # ---- time embedding MLP: sinusoidal(t) -> Linear -> GELU -> Linear ------
    t = tsin_ref[0]                                                   # (1, D)
    t = gelu(jnp.dot(t, t1w_ref[...], preferred_element_type=jnp.float32)
             + t1b_ref[...])
    t = jnp.dot(t, t2w_ref[...], preferred_element_type=jnp.float32) + t2b_ref[...]

    # ---- input projection of concat([x, cond]) ------------------------------
    xc = xcat_ref[0]                                                  # (S, C)
    xp = jnp.dot(xc, inw_ref[...], preferred_element_type=jnp.float32) + inb_ref[...]

    # ---- build sequence slab [frames..., time-token] + query-pos embedding ---
    xbuf[0:S, :] = xp
    xbuf[S:S1, :] = t
    x = xbuf[...] + qpos_ref[...]                                     # (S1, D)

    bias = bias_ref[0]                                                # (1, S1) key bias

    # ---- transformer encoder stack (post-norm), all weights VMEM-resident ----
    for l in range(num_layers):
        # packed Q/K/V projection: one (D, 3D) GEMM
        qkvbuf[...] = (jnp.dot(x, wqkv_ref[l], preferred_element_type=jnp.float32)
                       + bqkv_ref[l])
        # per-head attention (static unroll, everything stays in VMEM/vregs)
        for h in range(num_heads):
            qh = qkvbuf[:, h * hd:(h + 1) * hd]                       # (S1, hd)
            kh = qkvbuf[:, D + h * hd:D + (h + 1) * hd]
            vh = qkvbuf[:, 2 * D + h * hd:2 * D + (h + 1) * hd]
            s = jax.lax.dot_general(
                qh, kh, (((1,), (1,)), ((), ())),
                preferred_element_type=jnp.float32) * scale + bias    # (S1, S1)
            s = s - jnp.max(s, axis=-1, keepdims=True)
            p = jnp.exp(s)
            num = jnp.dot(p, vh, preferred_element_type=jnp.float32)
            inv = pl.reciprocal(jnp.sum(p, axis=-1, keepdims=True), approx=True)
            abuf[:, h * hd:(h + 1) * hd] = num * inv
        attn = (jnp.dot(abuf[...], wo_ref[l], preferred_element_type=jnp.float32)
                + bo_ref[l])
        # residual fused into LayerNorm
        x = layernorm(x + attn, ln1g_ref[l], ln1b_ref[l])
        # feed-forward block
        h1 = gelu(jnp.dot(x, w1_ref[l], preferred_element_type=jnp.float32)
                  + b1_ref[l])
        ff = jnp.dot(h1, w2_ref[l], preferred_element_type=jnp.float32) + b2_ref[l]
        x = layernorm(x + ff, ln2g_ref[l], ln2b_ref[l])

    # ---- output projection on the frame tokens (drop the time token) --------
    o_ref[0] = (jnp.dot(x[0:S, :], outw_ref[...],
                        preferred_element_type=jnp.float32) + outb_ref[...])


# ------------------------------ host-side glue -------------------------------

def sinusoidal_position_embedding(timestep, dmodel):
    # TODO(synk): exact SinusoidalPositionEmbedding definition not provided;
    # standard sin/cos timestep embedding assumed.
    half = dmodel // 2
    freqs = jnp.exp(-math.log(10000.0) * jnp.arange(half, dtype=jnp.float32) / half)
    args = timestep.astype(jnp.float32)[:, None] * freqs[None, :]
    return jnp.concatenate([jnp.sin(args), jnp.cos(args)], axis=-1)


def conditional_denoiser_forward(params, x, cond, timestep, key_padding_mask,
                                 num_heads):
    B, S, nfeats = x.shape
    D = params["time1_w"].shape[0]
    L = params["wqkv"].shape[0]
    S1 = S + 1

    # concat conditioning (batch-first already matches per-batch kernel layout)
    xcat = jnp.concatenate([x, cond], axis=-1).astype(jnp.float32)    # (B, S, C)

    # sinusoidal timestep embedding (tiny, computed on host)
    tsin = sinusoidal_position_embedding(timestep, D).reshape(B, 1, D)

    # additive key-padding bias; kernel slab order = [frames..., time-token]
    pad_bias = jnp.where(key_padding_mask, -1e9, 0.0).astype(jnp.float32)  # (B, S)
    bias = jnp.concatenate([pad_bias, jnp.zeros((B, 1), jnp.float32)],
                           axis=-1).reshape(B, 1, S1)

    # learned query positional embedding, reordered to kernel slab order
    qpos = params["query_pos"][:S1]                                   # (S1, D)
    qpos = jnp.concatenate([qpos[1:S1], qpos[0:1]], axis=0)           # frames..., token

    kernel = functools.partial(_fused_denoiser_kernel,
                               num_heads=num_heads, num_layers=L, seq=S)

    def bspec(arr):   # per-batch block
        nd = arr.ndim
        return pl.BlockSpec((1,) + arr.shape[1:],
                            lambda i, nd=nd: (i,) + (0,) * (nd - 1))

    def fspec(arr):   # full-array, batch-invariant block (weights etc.)
        nd = arr.ndim
        return pl.BlockSpec(arr.shape, lambda i, nd=nd: (0,) * nd)

    inputs = (xcat, tsin, bias, qpos,
              params["time1_w"], params["time1_b"],
              params["time2_w"], params["time2_b"],
              params["in_w"], params["in_b"],
              params["out_w"], params["out_b"],
              params["wqkv"], params["bqkv"], params["wo"], params["bo"],
              params["ln1_g"], params["ln1_b"], params["w1"], params["b1"],
              params["w2"], params["b2"], params["ln2_g"], params["ln2_b"])

    in_specs = [bspec(xcat), bspec(tsin), bspec(bias)] + [fspec(a) for a in inputs[3:]]

    out = pl.pallas_call(
        kernel,
        grid=(B,),
        in_specs=in_specs,
        out_specs=pl.BlockSpec((1, S, nfeats), lambda i: (i, 0, 0)),
        out_shape=jax.ShapeDtypeStruct((B, S, nfeats), jnp.float32),
        scratch_shapes=[
            pltpu.VMEM((S1, D), jnp.float32),       # sequence slab
            pltpu.VMEM((S1, D), jnp.float32),       # attention head outputs
            pltpu.VMEM((S1, 3 * D), jnp.float32),   # packed Q/K/V
        ],
        compiler_params=pltpu.CompilerParams(
            dimension_semantics=("parallel",)),     # batch across TCs on v7x
    )(*inputs)

    # output[key_padding_mask] = 0 (reference semantics), already batch-first
    out = jnp.where(key_padding_mask[:, :, None], 0.0, out)
    return out                                                        # (B, S, nfeats)


# ------------------------------ parameter init -------------------------------

def _dense_init(key, in_dim, out_dim, scale=0.05):
    # pre-transposed (in, out) layout + row-vector bias (no per-call W.T)
    return (scale * jax.random.normal(key, (in_dim, out_dim), jnp.float32),
            jnp.zeros((1, out_dim), jnp.float32))


def init_params(key, nfeats, cond_dim, dmodel, ff_size, num_layers, max_len=64):
    keys = jax.random.split(key, 6 + num_layers)
    t1w, t1b = _dense_init(keys[0], dmodel, dmodel)
    t2w, t2b = _dense_init(keys[1], dmodel, dmodel)
    inw, inb = _dense_init(keys[2], nfeats + cond_dim, dmodel)
    outw, outb = _dense_init(keys[3], dmodel, nfeats)
    qpos = 0.02 * jax.random.normal(keys[4], (max_len, dmodel), jnp.float32)

    wqkv, bqkv, wo, bo = [], [], [], []
    w1, b1, w2, b2 = [], [], [], []
    ln1g, ln1b, ln2g, ln2b = [], [], [], []
    for li in range(num_layers):
        lk = jax.random.split(keys[6 + li - 1], 6)
        wq, bq = _dense_init(lk[0], dmodel, dmodel)
        wk, bk = _dense_init(lk[1], dmodel, dmodel)
        wv, bv = _dense_init(lk[2], dmodel, dmodel)
        wqkv.append(jnp.concatenate([wq, wk, wv], axis=-1))           # (D, 3D)
        bqkv.append(jnp.concatenate([bq, bk, bv], axis=-1))           # (1, 3D)
        w, b = _dense_init(lk[3], dmodel, dmodel); wo.append(w); bo.append(b)
        w, b = _dense_init(lk[4], dmodel, ff_size); w1.append(w); b1.append(b)
        w, b = _dense_init(lk[5], ff_size, dmodel); w2.append(w); b2.append(b)
        ln1g.append(jnp.ones((1, dmodel), jnp.float32))
        ln1b.append(jnp.zeros((1, dmodel), jnp.float32))
        ln2g.append(jnp.ones((1, dmodel), jnp.float32))
        ln2b.append(jnp.zeros((1, dmodel), jnp.float32))

    stk = lambda xs: jnp.stack(xs, axis=0)
    return {
        "time1_w": t1w, "time1_b": t1b,
        "time2_w": t2w, "time2_b": t2b,
        "in_w": inw, "in_b": inb,
        "out_w": outw, "out_b": outb,
        "query_pos": qpos,
        "wqkv": stk(wqkv), "bqkv": stk(bqkv),
        "wo": stk(wo), "bo": stk(bo),
        "ln1_g": stk(ln1g), "ln1_b": stk(ln1b),
        "w1": stk(w1), "b1": stk(b1),
        "w2": stk(w2), "b2": stk(b2),
        "ln2_g": stk(ln2g), "ln2_b": stk(ln2b),
    }


# ----------------------------------- main ------------------------------------

if __name__ == "__main__":
    bs, seq = 2, 8
    nfeats, cond_dim = 4, 4
    dmodel, num_heads, ff_size, num_layers = 32, 4, 64, 2

    root = jax.random.PRNGKey(0)
    kx, kc, kp = jax.random.split(root, 3)

    x = jax.random.normal(kx, (bs, seq, nfeats), jnp.float32)
    cond = jax.random.normal(kc, (bs, seq, cond_dim), jnp.float32)
    timestep = jnp.array([3, 17], dtype=jnp.int32)
    key_padding_mask = jnp.array(
        [[False] * seq, [False] * (seq - 2) + [True] * 2], dtype=bool
    )

    params = init_params(kp, nfeats, cond_dim, dmodel, ff_size, num_layers)

    out = conditional_denoiser_forward(
        params, x, cond, timestep, key_padding_mask, num_heads
    )
    out = jax.block_until_ready(out)

    assert out.shape == (bs, seq, nfeats), out.shape
    assert bool(jnp.all(out[1, -2:] == 0.0))   # padded positions zeroed
    assert bool(jnp.all(jnp.isfinite(out)))
    print("KERNEL_OK")
</pallas_src>

<mosaic_0001>
module attributes {stable_mosaic.version = 11 : i64} {
  func.func @_fused_denoiser_kernel(%arg0: i32, %arg1: memref<1x8x8xf32, #tpu.memory_space<vmem>>, %arg2: memref<1x1x32xf32, #tpu.memory_space<vmem>>, %arg3: memref<1x1x9xf32, #tpu.memory_space<vmem>>, %arg4: memref<9x32xf32, #tpu.memory_space<vmem>>, %arg5: memref<32x32xf32, #tpu.memory_space<vmem>>, %arg6: memref<1x32xf32, #tpu.memory_space<vmem>>, %arg7: memref<32x32xf32, #tpu.memory_space<vmem>>, %arg8: memref<1x32xf32, #tpu.memory_space<vmem>>, %arg9: memref<8x32xf32, #tpu.memory_space<vmem>>, %arg10: memref<1x32xf32, #tpu.memory_space<vmem>>, %arg11: memref<32x4xf32, #tpu.memory_space<vmem>>, %arg12: memref<1x4xf32, #tpu.memory_space<vmem>>, %arg13: memref<2x32x96xf32, #tpu.memory_space<vmem>>, %arg14: memref<2x1x96xf32, #tpu.memory_space<vmem>>, %arg15: memref<2x32x32xf32, #tpu.memory_space<vmem>>, %arg16: memref<2x1x32xf32, #tpu.memory_space<vmem>>, %arg17: memref<2x1x32xf32, #tpu.memory_space<vmem>>, %arg18: memref<2x1x32xf32, #tpu.memory_space<vmem>>, %arg19: memref<2x32x64xf32, #tpu.memory_space<vmem>>, %arg20: memref<2x1x64xf32, #tpu.memory_space<vmem>>, %arg21: memref<2x64x32xf32, #tpu.memory_space<vmem>>, %arg22: memref<2x1x32xf32, #tpu.memory_space<vmem>>, %arg23: memref<2x1x32xf32, #tpu.memory_space<vmem>>, %arg24: memref<2x1x32xf32, #tpu.memory_space<vmem>>, %arg25: memref<1x8x4xf32, #tpu.memory_space<vmem>>, %arg26: memref<9x32xf32, #tpu.memory_space<vmem>>, %arg27: memref<9x32xf32, #tpu.memory_space<vmem>>, %arg28: memref<9x96xf32, #tpu.memory_space<vmem>>) attributes {dimension_semantics = [#tpu.dimension_semantics<parallel>], iteration_bounds = array<i64: 2>, scalar_prefetch = 0 : i64, scratch_operands = 3 : i64, tpu.core_type = #tpu.core_type<tc>, window_params = [{transform_indices = @transform_0, window_bounds = array<i64: 1, 8, 8>}, {transform_indices = @transform_1, window_bounds = array<i64: 1, 1, 32>}, {transform_indices = @transform_2, window_bounds = array<i64: 1, 1, 9>}, {pipeline_mode = #tpu.pipeline_mode<synchronous>, transform_indices = @transform_3, window_bounds = array<i64: 9, 32>}, {pipeline_mode = #tpu.pipeline_mode<synchronous>, transform_indices = @transform_4, window_bounds = array<i64: 32, 32>}, {pipeline_mode = #tpu.pipeline_mode<synchronous>, transform_indices = @transform_5, window_bounds = array<i64: 1, 32>}, {pipeline_mode = #tpu.pipeline_mode<synchronous>, transform_indices = @transform_6, window_bounds = array<i64: 32, 32>}, {pipeline_mode = #tpu.pipeline_mode<synchronous>, transform_indices = @transform_7, window_bounds = array<i64: 1, 32>}, {pipeline_mode = #tpu.pipeline_mode<synchronous>, transform_indices = @transform_8, window_bounds = array<i64: 8, 32>}, {pipeline_mode = #tpu.pipeline_mode<synchronous>, transform_indices = @transform_9, window_bounds = array<i64: 1, 32>}, {pipeline_mode = #tpu.pipeline_mode<synchronous>, transform_indices = @transform_10, window_bounds = array<i64: 32, 4>}, {pipeline_mode = #tpu.pipeline_mode<synchronous>, transform_indices = @transform_11, window_bounds = array<i64: 1, 4>}, {pipeline_mode = #tpu.pipeline_mode<synchronous>, transform_indices = @transform_12, window_bounds = array<i64: 2, 32, 96>}, {pipeline_mode = #tpu.pipeline_mode<synchronous>, transform_indices = @transform_13, window_bounds = array<i64: 2, 1, 96>}, {pipeline_mode = #tpu.pipeline_mode<synchronous>, transform_indices = @transform_14, window_bounds = array<i64: 2, 32, 32>}, {pipeline_mode = #tpu.pipeline_mode<synchronous>, transform_indices = @transform_15, window_bounds = array<i64: 2, 1, 32>}, {pipeline_mode = #tpu.pipeline_mode<synchronous>, transform_indices = @transform_16, window_bounds = array<i64: 2, 1, 32>}, {pipeline_mode = #tpu.pipeline_mode<synchronous>, transform_indices = @transform_17, window_bounds = array<i64: 2, 1, 32>}, {pipeline_mode = #tpu.pipeline_mode<synchronous>, transform_indices = @transform_18, window_bounds = array<i64: 2, 32, 64>}, {pipeline_mode = #tpu.pipeline_mode<synchronous>, transform_indices = @transform_19, window_bounds = array<i64: 2, 1, 64>}, {pipeline_mode = #tpu.pipeline_mode<synchronous>, transform_indices = @transform_20, window_bounds = array<i64: 2, 64, 32>}, {pipeline_mode = #tpu.pipeline_mode<synchronous>, transform_indices = @transform_21, window_bounds = array<i64: 2, 1, 32>}, {pipeline_mode = #tpu.pipeline_mode<synchronous>, transform_indices = @transform_22, window_bounds = array<i64: 2, 1, 32>}, {pipeline_mode = #tpu.pipeline_mode<synchronous>, transform_indices = @transform_23, window_bounds = array<i64: 2, 1, 32>}, {transform_indices = @transform_24, window_bounds = array<i64: 1, 8, 4>}]} {
    %c0 = arith.constant 0 : index
    %c0_0 = arith.constant 0 : index
    %c0_1 = arith.constant 0 : index
    %0 = vector.load %arg2[%c0, %c0_0, %c0_1] : memref<1x1x32xf32, #tpu.memory_space<vmem>>, vector<1x1x32xf32>
    %1 = vector.shape_cast %0 : vector<1x1x32xf32> to vector<1x32xf32>
    %c0_2 = arith.constant 0 : index
    %c0_3 = arith.constant 0 : index
    %2 = vector.load %arg5[%c0_2, %c0_3] : memref<32x32xf32, #tpu.memory_space<vmem>>, vector<32x32xf32>
    %cst = arith.constant dense<0.000000e+00> : vector<1x32xf32>
    %3 = tpu.matmul %1, %2, %cst {dimension_numbers = #tpu.dot_dimension_numbers<[1], [0], [0], [1], [0, 0, 1, 1], [], []>} : vector<1x32xf32>, vector<32x32xf32>, vector<1x32xf32> -> vector<1x32xf32>
    %c0_4 = arith.constant 0 : index
    %c0_5 = arith.constant 0 : index
    %4 = vector.load %arg6[%c0_4, %c0_5] : memref<1x32xf32, #tpu.memory_space<vmem>>, vector<1x32xf32>
    %5 = arith.addf %3, %4 : vector<1x32xf32>
    %cst_6 = arith.constant 5.000000e-01 : f32
    %6 = vector.broadcast %cst_6 : f32 to vector<1x32xf32>
    %7 = arith.mulf %6, %5 : vector<1x32xf32>
    %cst_7 = arith.constant 4.471500e-02 : f32
    %8 = vector.broadcast %cst_7 : f32 to vector<1x32xf32>
    %9 = arith.mulf %8, %5 : vector<1x32xf32>
    %10 = arith.mulf %9, %5 : vector<1x32xf32>
    %11 = arith.mulf %10, %5 : vector<1x32xf32>
    %12 = arith.addf %5, %11 : vector<1x32xf32>
    %cst_8 = arith.constant 0.797884583 : f32
    %13 = vector.broadcast %cst_8 : f32 to vector<1x32xf32>
    %14 = arith.mulf %13, %12 : vector<1x32xf32>
    %15 = math.tanh %14 : vector<1x32xf32>
    %cst_9 = arith.constant 1.000000e+00 : f32
    %16 = vector.broadcast %cst_9 : f32 to vector<1x32xf32>
    %17 = arith.addf %16, %15 : vector<1x32xf32>
    %18 = arith.mulf %7, %17 : vector<1x32xf32>
    %c0_10 = arith.constant 0 : index
    %c0_11 = arith.constant 0 : index
    %19 = vector.load %arg7[%c0_10, %c0_11] : memref<32x32xf32, #tpu.memory_space<vmem>>, vector<32x32xf32>
    %cst_12 = arith.constant dense<0.000000e+00> : vector<1x32xf32>
    %20 = tpu.matmul %18, %19, %cst_12 {dimension_numbers = #tpu.dot_dimension_numbers<[1], [0], [0], [1], [0, 0, 1, 1], [], []>} : vector<1x32xf32>, vector<32x32xf32>, vector<1x32xf32> -> vector<1x32xf32>
    %c0_13 = arith.constant 0 : index
    %c0_14 = arith.constant 0 : index
    %21 = vector.load %arg8[%c0_13, %c0_14] : memref<1x32xf32, #tpu.memory_space<vmem>>, vector<1x32xf32>
    %22 = arith.addf %20, %21 : vector<1x32xf32>
    %c0_15 = arith.constant 0 : index
    %c0_16 = arith.constant 0 : index
    %c0_17 = arith.constant 0 : index
    %23 = vector.load %arg1[%c0_15, %c0_16, %c0_17] : memref<1x8x8xf32, #tpu.memory_space<vmem>>, vector<1x8x8xf32>
    %24 = vector.shape_cast %23 : vector<1x8x8xf32> to vector<8x8xf32>
    %c0_18 = arith.constant 0 : index
    %c0_19 = arith.constant 0 : index
    %25 = vector.load %arg9[%c0_18, %c0_19] : memref<8x32xf32, #tpu.memory_space<vmem>>, vector<8x32xf32>
    %cst_20 = arith.constant dense<0.000000e+00> : vector<8x32xf32>
    %26 = tpu.matmul %24, %25, %cst_20 {dimension_numbers = #tpu.dot_dimension_numbers<[1], [0], [0], [1], [0, 0, 1, 1], [], []>} : vector<8x8xf32>, vector<8x32xf32>, vector<8x32xf32> -> vector<8x32xf32>
    %c0_21 = arith.constant 0 : index
    %c0_22 = arith.constant 0 : index
    %27 = vector.load %arg10[%c0_21, %c0_22] : memref<1x32xf32, #tpu.memory_space<vmem>>, vector<1x32xf32>
    %28 = vector.broadcast %27 : vector<1x32xf32> to vector<8x32xf32>
    %29 = arith.addf %26, %28 : vector<8x32xf32>
    %c0_23 = arith.constant 0 : index
    %c0_24 = arith.constant 0 : index
    %30 = vector.load %arg26[%c0_23, %c0_24] : memref<9x32xf32, #tpu.memory_space<vmem>>, vector<8x32xf32>
    tpu.vector_store %arg26[%c0_23, %c0_24], %29 {strides = array<i32>} : memref<9x32xf32, #tpu.memory_space<vmem>>, vector<8x32xf32>,
    %c8 = arith.constant 8 : index
    %c0_25 = arith.constant 0 : index
    %31 = vector.load %arg26[%c8, %c0_25] : memref<9x32xf32, #tpu.memory_space<vmem>>, vector<1x32xf32>
    tpu.vector_store %arg26[%c8, %c0_25], %22 {strides = array<i32>} : memref<9x32xf32, #tpu.memory_space<vmem>>, vector<1x32xf32>,
    %c0_26 = arith.constant 0 : index
    %c0_27 = arith.constant 0 : index
    %32 = vector.load %arg26[%c0_26, %c0_27] : memref<9x32xf32, #tpu.memory_space<vmem>>, vector<9x32xf32>
    %c0_28 = arith.constant 0 : index
    %c0_29 = arith.constant 0 : index
    %33 = vector.load %arg4[%c0_28, %c0_29] : memref<9x32xf32, #tpu.memory_space<vmem>>, vector<9x32xf32>
    %34 = arith.addf %32, %33 : vector<9x32xf32>
    %c0_30 = arith.constant 0 : index
    %c0_31 = arith.constant 0 : index
    %c0_32 = arith.constant 0 : index
    %35 = vector.load %arg3[%c0_30, %c0_31, %c0_32] : memref<1x1x9xf32, #tpu.memory_space<vmem>>, vector<1x1x9xf32>
    %36 = vector.shape_cast %35 : vector<1x1x9xf32> to vector<1x9xf32>
    %c0_33 = arith.constant 0 : index
    %c0_34 = arith.constant 0 : index
    %c0_35 = arith.constant 0 : index
    %37 = vector.load %arg13[%c0_33, %c0_34, %c0_35] : memref<2x32x96xf32, #tpu.memory_space<vmem>>, vector<1x32x96xf32>
    %38 = vector.shape_cast %37 : vector<1x32x96xf32> to vector<32x96xf32>
    %cst_36 = arith.constant dense<0.000000e+00> : vector<9x96xf32>
    %39 = tpu.matmul %34, %38, %cst_36 {dimension_numbers = #tpu.dot_dimension_numbers<[1], [0], [0], [1], [0, 0, 1, 1], [], []>} : vector<9x32xf32>, vector<32x96xf32>, vector<9x96xf32> -> vector<9x96xf32>
    %c0_37 = arith.constant 0 : index
    %c0_38 = arith.constant 0 : index
    %c0_39 = arith.constant 0 : index
    %40 = vector.load %arg14[%c0_37, %c0_38, %c0_39] : memref<2x1x96xf32, #tpu.memory_space<vmem>>, vector<1x1x96xf32>
    %41 = vector.shape_cast %40 : vector<1x1x96xf32> to vector<1x96xf32>
    %42 = vector.broadcast %41 : vector<1x96xf32> to vector<9x96xf32>
    %43 = arith.addf %39, %42 : vector<9x96xf32>
    %c0_40 = arith.constant 0 : index
    %c0_41 = arith.constant 0 : index
    %44 = vector.load %arg28[%c0_40, %c0_41] : memref<9x96xf32, #tpu.memory_space<vmem>>, vector<9x96xf32>
    tpu.vector_store %arg28[%c0_40, %c0_41], %43 {strides = array<i32>} : memref<9x96xf32, #tpu.memory_space<vmem>>, vector<9x96xf32>,
    %c0_42 = arith.constant 0 : index
    %c0_43 = arith.constant 0 : index
    %45 = vector.load %arg28[%c0_42, %c0_43] : memref<9x96xf32, #tpu.memory_space<vmem>>, vector<9x8xf32>
    %c0_44 = arith.constant 0 : index
    %c32 = arith.constant 32 : index
    %46 = vector.load %arg28[%c0_44, %c32] : memref<9x96xf32, #tpu.memory_space<vmem>>, vector<9x8xf32>
    %c0_45 = arith.constant 0 : index
    %c64 = arith.constant 64 : index
    %47 = vector.load %arg28[%c0_45, %c64] : memref<9x96xf32, #tpu.memory_space<vmem>>, vector<9x8xf32>
    %cst_46 = arith.constant dense<0.000000e+00> : vector<9x9xf32>
    %48 = tpu.matmul %45, %46, %cst_46 {dimension_numbers = #tpu.dot_dimension_numbers<[1], [1], [0], [0], [0, 0, 1, 0], [], []>} : vector<9x8xf32>, vector<9x8xf32>, vector<9x9xf32> -> vector<9x9xf32>
    %cst_47 = arith.constant 0.353553385 : f32
    %49 = vector.broadcast %cst_47 : f32 to vector<9x9xf32>
    %50 = arith.mulf %48, %49 : vector<9x9xf32>
    %51 = vector.broadcast %36 : vector<1x9xf32> to vector<9x9xf32>
    %52 = arith.addf %50, %51 : vector<9x9xf32>
    %cst_48 = arith.constant dense<0xFF800000> : vector<9xf32>
    %53 = vector.multi_reduction <maximumf>, %52, %cst_48 [1] : vector<9x9xf32> to vector<9xf32>
    %54 = vector.shape_cast %53 : vector<9xf32> to vector<9x1xf32>
    %55 = vector.broadcast %54 : vector<9x1xf32> to vector<9x9xf32>
    %56 = arith.subf %52, %55 : vector<9x9xf32>
    %57 = math.exp %56 : vector<9x9xf32>
    %cst_49 = arith.constant dense<0.000000e+00> : vector<9x8xf32>
    %58 = tpu.matmul %57, %47, %cst_49 {dimension_numbers = #tpu.dot_dimension_numbers<[1], [0], [0], [1], [0, 0, 1, 1], [], []>} : vector<9x9xf32>, vector<9x8xf32>, vector<9x8xf32> -> vector<9x8xf32>
    %cst_50 = arith.constant dense<0.000000e+00> : vector<9xf32>
    %59 = vector.multi_reduction <add>, %57, %cst_50 [1] : vector<9x9xf32> to vector<9xf32>
    %60 = vector.shape_cast %59 : vector<9xf32> to vector<9x1xf32>
    %61 = tpu.reciprocal %60 {approx = true} : vector<9x1xf32> -> vector<9x1xf32>
    %62 = vector.broadcast %61 : vector<9x1xf32> to vector<9x8xf32>
    %63 = arith.mulf %58, %62 : vector<9x8xf32>
    %c0_51 = arith.constant 0 : index
    %c0_52 = arith.constant 0 : index
    %64 = vector.load %arg27[%c0_51, %c0_52] : memref<9x32xf32, #tpu.memory_space<vmem>>, vector<9x8xf32>
    tpu.vector_store %arg27[%c0_51, %c0_52], %63 {strides = array<i32>} : memref<9x32xf32, #tpu.memory_space<vmem>>, vector<9x8xf32>,
    %c0_53 = arith.constant 0 : index
    %c8_54 = arith.constant 8 : index
    %65 = vector.load %arg28[%c0_53, %c8_54] : memref<9x96xf32, #tpu.memory_space<vmem>>, vector<9x8xf32>
    %c0_55 = arith.constant 0 : index
    %c40 = arith.constant 40 : index
    %66 = vector.load %arg28[%c0_55, %c40] : memref<9x96xf32, #tpu.memory_space<vmem>>, vector<9x8xf32>
    %c0_56 = arith.constant 0 : index
    %c72 = arith.constant 72 : index
    %67 = vector.load %arg28[%c0_56, %c72] : memref<9x96xf32, #tpu.memory_space<vmem>>, vector<9x8xf32>
    %cst_57 = arith.constant dense<0.000000e+00> : vector<9x9xf32>
    %68 = tpu.matmul %65, %66, %cst_57 {dimension_numbers = #tpu.dot_dimension_numbers<[1], [1], [0], [0], [0, 0, 1, 0], [], []>} : vector<9x8xf32>, vector<9x8xf32>, vector<9x9xf32> -> vector<9x9xf32>
    %cst_58 = arith.constant 0.353553385 : f32
    %69 = vector.broadcast %cst_58 : f32 to vector<9x9xf32>
    %70 = arith.mulf %68, %69 : vector<9x9xf32>
    %71 = vector.broadcast %36 : vector<1x9xf32> to vector<9x9xf32>
    %72 = arith.addf %70, %71 : vector<9x9xf32>
    %cst_59 = arith.constant dense<0xFF800000> : vector<9xf32>
    %73 = vector.multi_reduction <maximumf>, %72, %cst_59 [1] : vector<9x9xf32> to vector<9xf32>
    %74 = vector.shape_cast %73 : vector<9xf32> to vector<9x1xf32>
    %75 = vector.broadcast %74 : vector<9x1xf32> to vector<9x9xf32>
    %76 = arith.subf %72, %75 : vector<9x9xf32>
    %77 = math.exp %76 : vector<9x9xf32>
    %cst_60 = arith.constant dense<0.000000e+00> : vector<9x8xf32>
    %78 = tpu.matmul %77, %67, %cst_60 {dimension_numbers = #tpu.dot_dimension_numbers<[1], [0], [0], [1], [0, 0, 1, 1], [], []>} : vector<9x9xf32>, vector<9x8xf32>, vector<9x8xf32> -> vector<9x8xf32>
    %cst_61 = arith.constant dense<0.000000e+00> : vector<9xf32>
    %79 = vector.multi_reduction <add>, %77, %cst_61 [1] : vector<9x9xf32> to vector<9xf32>
    %80 = vector.shape_cast %79 : vector<9xf32> to vector<9x1xf32>
    %81 = tpu.reciprocal %80 {approx = true} : vector<9x1xf32> -> vector<9x1xf32>
    %82 = vector.broadcast %81 : vector<9x1xf32> to vector<9x8xf32>
    %83 = arith.mulf %78, %82 : vector<9x8xf32>
    %c0_62 = arith.constant 0 : index
    %c8_63 = arith.constant 8 : index
    %84 = vector.load %arg27[%c0_62, %c8_63] : memref<9x32xf32, #tpu.memory_space<vmem>>, vector<9x8xf32>
    tpu.vector_store %arg27[%c0_62, %c8_63], %83 {strides = array<i32>} : memref<9x32xf32, #tpu.memory_space<vmem>>, vector<9x8xf32>,
    %c0_64 = arith.constant 0 : index
    %c16 = arith.constant 16 : index
    %85 = vector.load %arg28[%c0_64, %c16] : memref<9x96xf32, #tpu.memory_space<vmem>>, vector<9x8xf32>
    %c0_65 = arith.constant 0 : index
    %c48 = arith.constant 48 : index
    %86 = vector.load %arg28[%c0_65, %c48] : memref<9x96xf32, #tpu.memory_space<vmem>>, vector<9x8xf32>
    %c0_66 = arith.constant 0 : index
    %c80 = arith.constant 80 : index
    %87 = vector.load %arg28[%c0_66, %c80] : memref<9x96xf32, #tpu.memory_space<vmem>>, vector<9x8xf32>
    %cst_67 = arith.constant dense<0.000000e+00> : vector<9x9xf32>
    %88 = tpu.matmul %85, %86, %cst_67 {dimension_numbers = #tpu.dot_dimension_numbers<[1], [1], [0], [0], [0, 0, 1, 0], [], []>} : vector<9x8xf32>, vector<9x8xf32>, vector<9x9xf32> -> vector<9x9xf32>
    %cst_68 = arith.constant 0.353553385 : f32
    %89 = vector.broadcast %cst_68 : f32 to vector<9x9xf32>
    %90 = arith.mulf %88, %89 : vector<9x9xf32>
    %91 = vector.broadcast %36 : vector<1x9xf32> to vector<9x9xf32>
    %92 = arith.addf %90, %91 : vector<9x9xf32>
    %cst_69 = arith.constant dense<0xFF800000> : vector<9xf32>
    %93 = vector.multi_reduction <maximumf>, %92, %cst_69 [1] : vector<9x9xf32> to vector<9xf32>
    %94 = vector.shape_cast %93 : vector<9xf32> to vector<9x1xf32>
    %95 = vector.broadcast %94 : vector<9x1xf32> to vector<9x9xf32>
    %96 = arith.subf %92, %95 : vector<9x9xf32>
    %97 = math.exp %96 : vector<9x9xf32>
    %cst_70 = arith.constant dense<0.000000e+00> : vector<9x8xf32>
    %98 = tpu.matmul %97, %87, %cst_70 {dimension_numbers = #tpu.dot_dimension_numbers<[1], [0], [0], [1], [0, 0, 1, 1], [], []>} : vector<9x9xf32>, vector<9x8xf32>, vector<9x8xf32> -> vector<9x8xf32>
    %cst_71 = arith.constant dense<0.000000e+00> : vector<9xf32>
    %99 = vector.multi_reduction <add>, %97, %cst_71 [1] : vector<9x9xf32> to vector<9xf32>
    %100 = vector.shape_cast %99 : vector<9xf32> to vector<9x1xf32>
    %101 = tpu.reciprocal %100 {approx = true} : vector<9x1xf32> -> vector<9x1xf32>
    %102 = vector.broadcast %101 : vector<9x1xf32> to vector<9x8xf32>
    %103 = arith.mulf %98, %102 : vector<9x8xf32>
    %c0_72 = arith.constant 0 : index
    %c16_73 = arith.constant 16 : index
    %104 = vector.load %arg27[%c0_72, %c16_73] : memref<9x32xf32, #tpu.memory_space<vmem>>, vector<9x8xf32>
    tpu.vector_store %arg27[%c0_72, %c16_73], %103 {strides = array<i32>} : memref<9x32xf32, #tpu.memory_space<vmem>>, vector<9x8xf32>,
    %c0_74 = arith.constant 0 : index
    %c24 = arith.constant 24 : index
    %105 = vector.load %arg28[%c0_74, %c24] : memref<9x96xf32, #tpu.memory_space<vmem>>, vector<9x8xf32>
    %c0_75 = arith.constant 0 : index
    %c56 = arith.constant 56 : index
    %106 = vector.load %arg28[%c0_75, %c56] : memref<9x96xf32, #tpu.memory_space<vmem>>, vector<9x8xf32>
    %c0_76 = arith.constant 0 : index
    %c88 = arith.constant 88 : index
    %107 = vector.load %arg28[%c0_76, %c88] : memref<9x96xf32, #tpu.memory_space<vmem>>, vector<9x8xf32>
    %cst_77 = arith.constant dense<0.000000e+00> : vector<9x9xf32>
    %108 = tpu.matmul %105, %106, %cst_77 {dimension_numbers = #tpu.dot_dimension_numbers<[1], [1], [0], [0], [0, 0, 1, 0], [], []>} : vector<9x8xf32>, vector<9x8xf32>, vector<9x9xf32> -> vector<9x9xf32>
    %cst_78 = arith.constant 0.353553385 : f32
    %109 = vector.broadcast %cst_78 : f32 to vector<9x9xf32>
    %110 = arith.mulf %108, %109 : vector<9x9xf32>
    %111 = vector.broadcast %36 : vector<1x9xf32> to vector<9x9xf32>
    %112 = arith.addf %110, %111 : vector<9x9xf32>
    %cst_79 = arith.constant dense<0xFF800000> : vector<9xf32>
    %113 = vector.multi_reduction <maximumf>, %112, %cst_79 [1] : vector<9x9xf32> to vector<9xf32>
    %114 = vector.shape_cast %113 : vector<9xf32> to vector<9x1xf32>
    %115 = vector.broadcast %114 : vector<9x1xf32> to vector<9x9xf32>
    %116 = arith.subf %112, %115 : vector<9x9xf32>
    %117 = math.exp %116 : vector<9x9xf32>
    %cst_80 = arith.constant dense<0.000000e+00> : vector<9x8xf32>
    %118 = tpu.matmul %117, %107, %cst_80 {dimension_numbers = #tpu.dot_dimension_numbers<[1], [0], [0], [1], [0, 0, 1, 1], [], []>} : vector<9x9xf32>, vector<9x8xf32>, vector<9x8xf32> -> vector<9x8xf32>
    %cst_81 = arith.constant dense<0.000000e+00> : vector<9xf32>
    %119 = vector.multi_reduction <add>, %117, %cst_81 [1] : vector<9x9xf32> to vector<9xf32>
    %120 = vector.shape_cast %119 : vector<9xf32> to vector<9x1xf32>
    %121 = tpu.reciprocal %120 {approx = true} : vector<9x1xf32> -> vector<9x1xf32>
    %122 = vector.broadcast %121 : vector<9x1xf32> to vector<9x8xf32>
    %123 = arith.mulf %118, %122 : vector<9x8xf32>
    %c0_82 = arith.constant 0 : index
    %c24_83 = arith.constant 24 : index
    %124 = vector.load %arg27[%c0_82, %c24_83] : memref<9x32xf32, #tpu.memory_space<vmem>>, vector<9x8xf32>
    tpu.vector_store %arg27[%c0_82, %c24_83], %123 {strides = array<i32>} : memref<9x32xf32, #tpu.memory_space<vmem>>, vector<9x8xf32>,
    %c0_84 = arith.constant 0 : index
    %c0_85 = arith.constant 0 : index
    %125 = vector.load %arg27[%c0_84, %c0_85] : memref<9x32xf32, #tpu.memory_space<vmem>>, vector<9x32xf32>
    %c0_86 = arith.constant 0 : index
    %c0_87 = arith.constant 0 : index
    %c0_88 = arith.constant 0 : index
    %126 = vector.load %arg15[%c0_86, %c0_87, %c0_88] : memref<2x32x32xf32, #tpu.memory_space<vmem>>, vector<1x32x32xf32>
    %127 = vector.shape_cast %126 : vector<1x32x32xf32> to vector<32x32xf32>
    %cst_89 = arith.constant dense<0.000000e+00> : vector<9x32xf32>
    %128 = tpu.matmul %125, %127, %cst_89 {dimension_numbers = #tpu.dot_dimension_numbers<[1], [0], [0], [1], [0, 0, 1, 1], [], []>} : vector<9x32xf32>, vector<32x32xf32>, vector<9x32xf32> -> vector<9x32xf32>
    %c0_90 = arith.constant 0 : index
    %c0_91 = arith.constant 0 : index
    %c0_92 = arith.constant 0 : index
    %129 = vector.load %arg16[%c0_90, %c0_91, %c0_92] : memref<2x1x32xf32, #tpu.memory_space<vmem>>, vector<1x1x32xf32>
    %130 = vector.shape_cast %129 : vector<1x1x32xf32> to vector<1x32xf32>
    %131 = vector.broadcast %130 : vector<1x32xf32> to vector<9x32xf32>
    %132 = arith.addf %128, %131 : vector<9x32xf32>
    %133 = arith.addf %34, %132 : vector<9x32xf32>
    %c0_93 = arith.constant 0 : index
    %c0_94 = arith.constant 0 : index
    %c0_95 = arith.constant 0 : index
    %134 = vector.load %arg17[%c0_93, %c0_94, %c0_95] : memref<2x1x32xf32, #tpu.memory_space<vmem>>, vector<1x1x32xf32>
    %135 = vector.shape_cast %134 : vector<1x1x32xf32> to vector<1x32xf32>
    %c0_96 = arith.constant 0 : index
    %c0_97 = arith.constant 0 : index
    %c0_98 = arith.constant 0 : index
    %136 = vector.load %arg18[%c0_96, %c0_97, %c0_98] : memref<2x1x32xf32, #tpu.memory_space<vmem>>, vector<1x1x32xf32>
    %137 = vector.shape_cast %136 : vector<1x1x32xf32> to vector<1x32xf32>
    %cst_99 = arith.constant dense<0.000000e+00> : vector<9xf32>
    %138 = vector.multi_reduction <add>, %133, %cst_99 [1] : vector<9x32xf32> to vector<9xf32>
    %139 = vector.shape_cast %138 : vector<9xf32> to vector<9x1xf32>
    %cst_100 = arith.constant 3.200000e+01 : f32
    %140 = vector.broadcast %cst_100 : f32 to vector<9x1xf32>
    %141 = arith.divf %139, %140 : vector<9x1xf32>
    %142 = vector.broadcast %141 : vector<9x1xf32> to vector<9x32xf32>
    %143 = arith.subf %133, %142 : vector<9x32xf32>
    %144 = vector.broadcast %141 : vector<9x1xf32> to vector<9x32xf32>
    %145 = arith.subf %133, %144 : vector<9x32xf32>
    %146 = arith.mulf %143, %145 : vector<9x32xf32>
    %cst_101 = arith.constant dense<0.000000e+00> : vector<9xf32>
    %147 = vector.multi_reduction <add>, %146, %cst_101 [1] : vector<9x32xf32> to vector<9xf32>
    %148 = vector.shape_cast %147 : vector<9xf32> to vector<9x1xf32>
    %cst_102 = arith.constant 3.200000e+01 : f32
    %149 = vector.broadcast %cst_102 : f32 to vector<9x1xf32>
    %150 = arith.divf %148, %149 : vector<9x1xf32>
    %151 = vector.broadcast %141 : vector<9x1xf32> to vector<9x32xf32>
    %152 = arith.subf %133, %151 : vector<9x32xf32>
    %cst_103 = arith.constant 9.99999974E-6 : f32
    %153 = vector.broadcast %cst_103 : f32 to vector<9x1xf32>
    %154 = arith.addf %150, %153 : vector<9x1xf32>
    %155 = math.rsqrt %154 : vector<9x1xf32>
    %156 = vector.broadcast %155 : vector<9x1xf32> to vector<9x32xf32>
    %157 = arith.mulf %152, %156 : vector<9x32xf32>
    %158 = vector.broadcast %135 : vector<1x32xf32> to vector<9x32xf32>
    %159 = arith.mulf %157, %158 : vector<9x32xf32>
    %160 = vector.broadcast %137 : vector<1x32xf32> to vector<9x32xf32>
    %161 = arith.addf %159, %160 : vector<9x32xf32>
    %c0_104 = arith.constant 0 : index
    %c0_105 = arith.constant 0 : index
    %c0_106 = arith.constant 0 : index
    %162 = vector.load %arg19[%c0_104, %c0_105, %c0_106] : memref<2x32x64xf32, #tpu.memory_space<vmem>>, vector<1x32x64xf32>
    %163 = vector.shape_cast %162 : vector<1x32x64xf32> to vector<32x64xf32>
    %cst_107 = arith.constant dense<0.000000e+00> : vector<9x64xf32>
    %164 = tpu.matmul %161, %163, %cst_107 {dimension_numbers = #tpu.dot_dimension_numbers<[1], [0], [0], [1], [0, 0, 1, 1], [], []>} : vector<9x32xf32>, vector<32x64xf32>, vector<9x64xf32> -> vector<9x64xf32>
    %c0_108 = arith.constant 0 : index
    %c0_109 = arith.constant 0 : index
    %c0_110 = arith.constant 0 : index
    %165 = vector.load %arg20[%c0_108, %c0_109, %c0_110] : memref<2x1x64xf32, #tpu.memory_space<vmem>>, vector<1x1x64xf32>
    %166 = vector.shape_cast %165 : vector<1x1x64xf32> to vector<1x64xf32>
    %167 = vector.broadcast %166 : vector<1x64xf32> to vector<9x64xf32>
    %168 = arith.addf %164, %167 : vector<9x64xf32>
    %cst_111 = arith.constant 5.000000e-01 : f32
    %169 = vector.broadcast %cst_111 : f32 to vector<9x64xf32>
    %170 = arith.mulf %169, %168 : vector<9x64xf32>
    %cst_112 = arith.constant 4.471500e-02 : f32
    %171 = vector.broadcast %cst_112 : f32 to vector<9x64xf32>
    %172 = arith.mulf %171, %168 : vector<9x64xf32>
    %173 = arith.mulf %172, %168 : vector<9x64xf32>
    %174 = arith.mulf %173, %168 : vector<9x64xf32>
    %175 = arith.addf %168, %174 : vector<9x64xf32>
    %cst_113 = arith.constant 0.797884583 : f32
    %176 = vector.broadcast %cst_113 : f32 to vector<9x64xf32>
    %177 = arith.mulf %176, %175 : vector<9x64xf32>
    %178 = math.tanh %177 : vector<9x64xf32>
    %cst_114 = arith.constant 1.000000e+00 : f32
    %179 = vector.broadcast %cst_114 : f32 to vector<9x64xf32>
    %180 = arith.addf %179, %178 : vector<9x64xf32>
    %181 = arith.mulf %170, %180 : vector<9x64xf32>
    %c0_115 = arith.constant 0 : index
    %c0_116 = arith.constant 0 : index
    %c0_117 = arith.constant 0 : index
    %182 = vector.load %arg21[%c0_115, %c0_116, %c0_117] : memref<2x64x32xf32, #tpu.memory_space<vmem>>, vector<1x64x32xf32>
    %183 = vector.shape_cast %182 : vector<1x64x32xf32> to vector<64x32xf32>
    %cst_118 = arith.constant dense<0.000000e+00> : vector<9x32xf32>
    %184 = tpu.matmul %181, %183, %cst_118 {dimension_numbers = #tpu.dot_dimension_numbers<[1], [0], [0], [1], [0, 0, 1, 1], [], []>} : vector<9x64xf32>, vector<64x32xf32>, vector<9x32xf32> -> vector<9x32xf32>
    %c0_119 = arith.constant 0 : index
    %c0_120 = arith.constant 0 : index
    %c0_121 = arith.constant 0 : index
    %185 = vector.load %arg22[%c0_119, %c0_120, %c0_121] : memref<2x1x32xf32, #tpu.memory_space<vmem>>, vector<1x1x32xf32>
    %186 = vector.shape_cast %185 : vector<1x1x32xf32> to vector<1x32xf32>
    %187 = vector.broadcast %186 : vector<1x32xf32> to vector<9x32xf32>
    %188 = arith.addf %184, %187 : vector<9x32xf32>
    %189 = arith.addf %161, %188 : vector<9x32xf32>
    %c0_122 = arith.constant 0 : index
    %c0_123 = arith.constant 0 : index
    %c0_124 = arith.constant 0 : index
    %190 = vector.load %arg23[%c0_122, %c0_123, %c0_124] : memref<2x1x32xf32, #tpu.memory_space<vmem>>, vector<1x1x32xf32>
    %191 = vector.shape_cast %190 : vector<1x1x32xf32> to vector<1x32xf32>
    %c0_125 = arith.constant 0 : index
    %c0_126 = arith.constant 0 : index
    %c0_127 = arith.constant 0 : index
    %192 = vector.load %arg24[%c0_125, %c0_126, %c0_127] : memref<2x1x32xf32, #tpu.memory_space<vmem>>, vector<1x1x32xf32>
    %193 = vector.shape_cast %192 : vector<1x1x32xf32> to vector<1x32xf32>
    %cst_128 = arith.constant dense<0.000000e+00> : vector<9xf32>
    %194 = vector.multi_reduction <add>, %189, %cst_128 [1] : vector<9x32xf32> to vector<9xf32>
    %195 = vector.shape_cast %194 : vector<9xf32> to vector<9x1xf32>
    %cst_129 = arith.constant 3.200000e+01 : f32
    %196 = vector.broadcast %cst_129 : f32 to vector<9x1xf32>
    %197 = arith.divf %195, %196 : vector<9x1xf32>
    %198 = vector.broadcast %197 : vector<9x1xf32> to vector<9x32xf32>
    %199 = arith.subf %189, %198 : vector<9x32xf32>
    %200 = vector.broadcast %197 : vector<9x1xf32> to vector<9x32xf32>
    %201 = arith.subf %189, %200 : vector<9x32xf32>
    %202 = arith.mulf %199, %201 : vector<9x32xf32>
    %cst_130 = arith.constant dense<0.000000e+00> : vector<9xf32>
    %203 = vector.multi_reduction <add>, %202, %cst_130 [1] : vector<9x32xf32> to vector<9xf32>
    %204 = vector.shape_cast %203 : vector<9xf32> to vector<9x1xf32>
    %cst_131 = arith.constant 3.200000e+01 : f32
    %205 = vector.broadcast %cst_131 : f32 to vector<9x1xf32>
    %206 = arith.divf %204, %205 : vector<9x1xf32>
    %207 = vector.broadcast %197 : vector<9x1xf32> to vector<9x32xf32>
    %208 = arith.subf %189, %207 : vector<9x32xf32>
    %cst_132 = arith.constant 9.99999974E-6 : f32
    %209 = vector.broadcast %cst_132 : f32 to vector<9x1xf32>
    %210 = arith.addf %206, %209 : vector<9x1xf32>
    %211 = math.rsqrt %210 : vector<9x1xf32>
    %212 = vector.broadcast %211 : vector<9x1xf32> to vector<9x32xf32>
    %213 = arith.mulf %208, %212 : vector<9x32xf32>
    %214 = vector.broadcast %191 : vector<1x32xf32> to vector<9x32xf32>
    %215 = arith.mulf %213, %214 : vector<9x32xf32>
    %216 = vector.broadcast %193 : vector<1x32xf32> to vector<9x32xf32>
    %217 = arith.addf %215, %216 : vector<9x32xf32>
    %c1 = arith.constant 1 : index
    %c0_133 = arith.constant 0 : index
    %c0_134 = arith.constant 0 : index
    %218 = vector.load %arg13[%c1, %c0_133, %c0_134] : memref<2x32x96xf32, #tpu.memory_space<vmem>>, vector<1x32x96xf32>
    %219 = vector.shape_cast %218 : vector<1x32x96xf32> to vector<32x96xf32>
    %cst_135 = arith.constant dense<0.000000e+00> : vector<9x96xf32>
    %220 = tpu.matmul %217, %219, %cst_135 {dimension_numbers = #tpu.dot_dimension_numbers<[1], [0], [0], [1], [0, 0, 1, 1], [], []>} : vector<9x32xf32>, vector<32x96xf32>, vector<9x96xf32> -> vector<9x96xf32>
    %c1_136 = arith.constant 1 : index
    %c0_137 = arith.constant 0 : index
    %c0_138 = arith.constant 0 : index
    %221 = vector.load %arg14[%c1_136, %c0_137, %c0_138] : memref<2x1x96xf32, #tpu.memory_space<vmem>>, vector<1x1x96xf32>
    %222 = vector.shape_cast %221 : vector<1x1x96xf32> to vector<1x96xf32>
    %223 = vector.broadcast %222 : vector<1x96xf32> to vector<9x96xf32>
    %224 = arith.addf %220, %223 : vector<9x96xf32>
    %c0_139 = arith.constant 0 : index
    %c0_140 = arith.constant 0 : index
    %225 = vector.load %arg28[%c0_139, %c0_140] : memref<9x96xf32, #tpu.memory_space<vmem>>, vector<9x96xf32>
    tpu.vector_store %arg28[%c0_139, %c0_140], %224 {strides = array<i32>} : memref<9x96xf32, #tpu.memory_space<vmem>>, vector<9x96xf32>,
    %c0_141 = arith.constant 0 : index
    %c0_142 = arith.constant 0 : index
    %226 = vector.load %arg28[%c0_141, %c0_142] : memref<9x96xf32, #tpu.memory_space<vmem>>, vector<9x8xf32>
    %c0_143 = arith.constant 0 : index
    %c32_144 = arith.constant 32 : index
    %227 = vector.load %arg28[%c0_143, %c32_144] : memref<9x96xf32, #tpu.memory_space<vmem>>, vector<9x8xf32>
    %c0_145 = arith.constant 0 : index
    %c64_146 = arith.constant 64 : index
    %228 = vector.load %arg28[%c0_145, %c64_146] : memref<9x96xf32, #tpu.memory_space<vmem>>, vector<9x8xf32>
    %cst_147 = arith.constant dense<0.000000e+00> : vector<9x9xf32>
    %229 = tpu.matmul %226, %227, %cst_147 {dimension_numbers = #tpu.dot_dimension_numbers<[1], [1], [0], [0], [0, 0, 1, 0], [], []>} : vector<9x8xf32>, vector<9x8xf32>, vector<9x9xf32> -> vector<9x9xf32>
    %cst_148 = arith.constant 0.353553385 : f32
    %230 = vector.broadcast %cst_148 : f32 to vector<9x9xf32>
    %231 = arith.mulf %229, %230 : vector<9x9xf32>
    %232 = vector.broadcast %36 : vector<1x9xf32> to vector<9x9xf32>
    %233 = arith.addf %231, %232 : vector<9x9xf32>
    %cst_149 = arith.constant dense<0xFF800000> : vector<9xf32>
    %234 = vector.multi_reduction <maximumf>, %233, %cst_149 [1] : vector<9x9xf32> to vector<9xf32>
    %235 = vector.shape_cast %234 : vector<9xf32> to vector<9x1xf32>
    %236 = vector.broadcast %235 : vector<9x1xf32> to vector<9x9xf32>
    %237 = arith.subf %233, %236 : vector<9x9xf32>
    %238 = math.exp %237 : vector<9x9xf32>
    %cst_150 = arith.constant dense<0.000000e+00> : vector<9x8xf32>
    %239 = tpu.matmul %238, %228, %cst_150 {dimension_numbers = #tpu.dot_dimension_numbers<[1], [0], [0], [1], [0, 0, 1, 1], [], []>} : vector<9x9xf32>, vector<9x8xf32>, vector<9x8xf32> -> vector<9x8xf32>
    %cst_151 = arith.constant dense<0.000000e+00> : vector<9xf32>
    %240 = vector.multi_reduction <add>, %238, %cst_151 [1] : vector<9x9xf32> to vector<9xf32>
    %241 = vector.shape_cast %240 : vector<9xf32> to vector<9x1xf32>
    %242 = tpu.reciprocal %241 {approx = true} : vector<9x1xf32> -> vector<9x1xf32>
    %243 = vector.broadcast %242 : vector<9x1xf32> to vector<9x8xf32>
    %244 = arith.mulf %239, %243 : vector<9x8xf32>
    %c0_152 = arith.constant 0 : index
    %c0_153 = arith.constant 0 : index
    %245 = vector.load %arg27[%c0_152, %c0_153] : memref<9x32xf32, #tpu.memory_space<vmem>>, vector<9x8xf32>
    tpu.vector_store %arg27[%c0_152, %c0_153], %244 {strides = array<i32>} : memref<9x32xf32, #tpu.memory_space<vmem>>, vector<9x8xf32>,
    %c0_154 = arith.constant 0 : index
    %c8_155 = arith.constant 8 : index
    %246 = vector.load %arg28[%c0_154, %c8_155] : memref<9x96xf32, #tpu.memory_space<vmem>>, vector<9x8xf32>
    %c0_156 = arith.constant 0 : index
    %c40_157 = arith.constant 40 : index
    %247 = vector.load %arg28[%c0_156, %c40_157] : memref<9x96xf32, #tpu.memory_space<vmem>>, vector<9x8xf32>
    %c0_158 = arith.constant 0 : index
    %c72_159 = arith.constant 72 : index
    %248 = vector.load %arg28[%c0_158, %c72_159] : memref<9x96xf32, #tpu.memory_space<vmem>>, vector<9x8xf32>
    %cst_160 = arith.constant dense<0.000000e+00> : vector<9x9xf32>
    %249 = tpu.matmul %246, %247, %cst_160 {dimension_numbers = #tpu.dot_dimension_numbers<[1], [1], [0], [0], [0, 0, 1, 0], [], []>} : vector<9x8xf32>, vector<9x8xf32>, vector<9x9xf32> -> vector<9x9xf32>
    %cst_161 = arith.constant 0.353553385 : f32
    %250 = vector.broadcast %cst_161 : f32 to vector<9x9xf32>
    %251 = arith.mulf %249, %250 : vector<9x9xf32>
    %252 = vector.broadcast %36 : vector<1x9xf32> to vector<9x9xf32>
    %253 = arith.addf %251, %252 : vector<9x9xf32>
    %cst_162 = arith.constant dense<0xFF800000> : vector<9xf32>
    %254 = vector.multi_reduction <maximumf>, %253, %cst_162 [1] : vector<9x9xf32> to vector<9xf32>
    %255 = vector.shape_cast %254 : vector<9xf32> to vector<9x1xf32>
    %256 = vector.broadcast %255 : vector<9x1xf32> to vector<9x9xf32>
    %257 = arith.subf %253, %256 : vector<9x9xf32>
    %258 = math.exp %257 : vector<9x9xf32>
    %cst_163 = arith.constant dense<0.000000e+00> : vector<9x8xf32>
    %259 = tpu.matmul %258, %248, %cst_163 {dimension_numbers = #tpu.dot_dimension_numbers<[1], [0], [0], [1], [0, 0, 1, 1], [], []>} : vector<9x9xf32>, vector<9x8xf32>, vector<9x8xf32> -> vector<9x8xf32>
    %cst_164 = arith.constant dense<0.000000e+00> : vector<9xf32>
    %260 = vector.multi_reduction <add>, %258, %cst_164 [1] : vector<9x9xf32> to vector<9xf32>
    %261 = vector.shape_cast %260 : vector<9xf32> to vector<9x1xf32>
    %262 = tpu.reciprocal %261 {approx = true} : vector<9x1xf32> -> vector<9x1xf32>
    %263 = vector.broadcast %262 : vector<9x1xf32> to vector<9x8xf32>
    %264 = arith.mulf %259, %263 : vector<9x8xf32>
    %c0_165 = arith.constant 0 : index
    %c8_166 = arith.constant 8 : index
    %265 = vector.load %arg27[%c0_165, %c8_166] : memref<9x32xf32, #tpu.memory_space<vmem>>, vector<9x8xf32>
    tpu.vector_store %arg27[%c0_165, %c8_166], %264 {strides = array<i32>} : memref<9x32xf32, #tpu.memory_space<vmem>>, vector<9x8xf32>,
    %c0_167 = arith.constant 0 : index
    %c16_168 = arith.constant 16 : index
    %266 = vector.load %arg28[%c0_167, %c16_168] : memref<9x96xf32, #tpu.memory_space<vmem>>, vector<9x8xf32>
    %c0_169 = arith.constant 0 : index
    %c48_170 = arith.constant 48 : index
    %267 = vector.load %arg28[%c0_169, %c48_170] : memref<9x96xf32, #tpu.memory_space<vmem>>, vector<9x8xf32>
    %c0_171 = arith.constant 0 : index
    %c80_172 = arith.constant 80 : index
    %268 = vector.load %arg28[%c0_171, %c80_172] : memref<9x96xf32, #tpu.memory_space<vmem>>, vector<9x8xf32>
    %cst_173 = arith.constant dense<0.000000e+00> : vector<9x9xf32>
    %269 = tpu.matmul %266, %267, %cst_173 {dimension_numbers = #tpu.dot_dimension_numbers<[1], [1], [0], [0], [0, 0, 1, 0], [], []>} : vector<9x8xf32>, vector<9x8xf32>, vector<9x9xf32> -> vector<9x9xf32>
    %cst_174 = arith.constant 0.353553385 : f32
    %270 = vector.broadcast %cst_174 : f32 to vector<9x9xf32>
    %271 = arith.mulf %269, %270 : vector<9x9xf32>
    %272 = vector.broadcast %36 : vector<1x9xf32> to vector<9x9xf32>
    %273 = arith.addf %271, %272 : vector<9x9xf32>
    %cst_175 = arith.constant dense<0xFF800000> : vector<9xf32>
    %274 = vector.multi_reduction <maximumf>, %273, %cst_175 [1] : vector<9x9xf32> to vector<9xf32>
    %275 = vector.shape_cast %274 : vector<9xf32> to vector<9x1xf32>
    %276 = vector.broadcast %275 : vector<9x1xf32> to vector<9x9xf32>
    %277 = arith.subf %273, %276 : vector<9x9xf32>
    %278 = math.exp %277 : vector<9x9xf32>
    %cst_176 = arith.constant dense<0.000000e+00> : vector<9x8xf32>
    %279 = tpu.matmul %278, %268, %cst_176 {dimension_numbers = #tpu.dot_dimension_numbers<[1], [0], [0], [1], [0, 0, 1, 1], [], []>} : vector<9x9xf32>, vector<9x8xf32>, vector<9x8xf32> -> vector<9x8xf32>
    %cst_177 = arith.constant dense<0.000000e+00> : vector<9xf32>
    %280 = vector.multi_reduction <add>, %278, %cst_177 [1] : vector<9x9xf32> to vector<9xf32>
    %281 = vector.shape_cast %280 : vector<9xf32> to vector<9x1xf32>
    %282 = tpu.reciprocal %281 {approx = true} : vector<9x1xf32> -> vector<9x1xf32>
    %283 = vector.broadcast %282 : vector<9x1xf32> to vector<9x8xf32>
    %284 = arith.mulf %279, %283 : vector<9x8xf32>
    %c0_178 = arith.constant 0 : index
    %c16_179 = arith.constant 16 : index
    %285 = vector.load %arg27[%c0_178, %c16_179] : memref<9x32xf32, #tpu.memory_space<vmem>>, vector<9x8xf32>
    tpu.vector_store %arg27[%c0_178, %c16_179], %284 {strides = array<i32>} : memref<9x32xf32, #tpu.memory_space<vmem>>, vector<9x8xf32>,
    %c0_180 = arith.constant 0 : index
    %c24_181 = arith.constant 24 : index
    %286 = vector.load %arg28[%c0_180, %c24_181] : memref<9x96xf32, #tpu.memory_space<vmem>>, vector<9x8xf32>
    %c0_182 = arith.constant 0 : index
    %c56_183 = arith.constant 56 : index
    %287 = vector.load %arg28[%c0_182, %c56_183] : memref<9x96xf32, #tpu.memory_space<vmem>>, vector<9x8xf32>
    %c0_184 = arith.constant 0 : index
    %c88_185 = arith.constant 88 : index
    %288 = vector.load %arg28[%c0_184, %c88_185] : memref<9x96xf32, #tpu.memory_space<vmem>>, vector<9x8xf32>
    %cst_186 = arith.constant dense<0.000000e+00> : vector<9x9xf32>
    %289 = tpu.matmul %286, %287, %cst_186 {dimension_numbers = #tpu.dot_dimension_numbers<[1], [1], [0], [0], [0, 0, 1, 0], [], []>} : vector<9x8xf32>, vector<9x8xf32>, vector<9x9xf32> -> vector<9x9xf32>
    %cst_187 = arith.constant 0.353553385 : f32
    %290 = vector.broadcast %cst_187 : f32 to vector<9x9xf32>
    %291 = arith.mulf %289, %290 : vector<9x9xf32>
    %292 = vector.broadcast %36 : vector<1x9xf32> to vector<9x9xf32>
    %293 = arith.addf %291, %292 : vector<9x9xf32>
    %cst_188 = arith.constant dense<0xFF800000> : vector<9xf32>
    %294 = vector.multi_reduction <maximumf>, %293, %cst_188 [1] : vector<9x9xf32> to vector<9xf32>
    %295 = vector.shape_cast %294 : vector<9xf32> to vector<9x1xf32>
    %296 = vector.broadcast %295 : vector<9x1xf32> to vector<9x9xf32>
    %297 = arith.subf %293, %296 : vector<9x9xf32>
    %298 = math.exp %297 : vector<9x9xf32>
    %cst_189 = arith.constant dense<0.000000e+00> : vector<9x8xf32>
    %299 = tpu.matmul %298, %288, %cst_189 {dimension_numbers = #tpu.dot_dimension_numbers<[1], [0], [0], [1], [0, 0, 1, 1], [], []>} : vector<9x9xf32>, vector<9x8xf32>, vector<9x8xf32> -> vector<9x8xf32>
    %cst_190 = arith.constant dense<0.000000e+00> : vector<9xf32>
    %300 = vector.multi_reduction <add>, %298, %cst_190 [1] : vector<9x9xf32> to vector<9xf32>
    %301 = vector.shape_cast %300 : vector<9xf32> to vector<9x1xf32>
    %302 = tpu.reciprocal %301 {approx = true} : vector<9x1xf32> -> vector<9x1xf32>
    %303 = vector.broadcast %302 : vector<9x1xf32> to vector<9x8xf32>
    %304 = arith.mulf %299, %303 : vector<9x8xf32>
    %c0_191 = arith.constant 0 : index
    %c24_192 = arith.constant 24 : index
    %305 = vector.load %arg27[%c0_191, %c24_192] : memref<9x32xf32, #tpu.memory_space<vmem>>, vector<9x8xf32>
    tpu.vector_store %arg27[%c0_191, %c24_192], %304 {strides = array<i32>} : memref<9x32xf32, #tpu.memory_space<vmem>>, vector<9x8xf32>,
    %c0_193 = arith.constant 0 : index
    %c0_194 = arith.constant 0 : index
    %306 = vector.load %arg27[%c0_193, %c0_194] : memref<9x32xf32, #tpu.memory_space<vmem>>, vector<9x32xf32>
    %c1_195 = arith.constant 1 : index
    %c0_196 = arith.constant 0 : index
    %c0_197 = arith.constant 0 : index
    %307 = vector.load %arg15[%c1_195, %c0_196, %c0_197] : memref<2x32x32xf32, #tpu.memory_space<vmem>>, vector<1x32x32xf32>
    %308 = vector.shape_cast %307 : vector<1x32x32xf32> to vector<32x32xf32>
    %cst_198 = arith.constant dense<0.000000e+00> : vector<9x32xf32>
    %309 = tpu.matmul %306, %308, %cst_198 {dimension_numbers = #tpu.dot_dimension_numbers<[1], [0], [0], [1], [0, 0, 1, 1], [], []>} : vector<9x32xf32>, vector<32x32xf32>, vector<9x32xf32> -> vector<9x32xf32>
    %c1_199 = arith.constant 1 : index
    %c0_200 = arith.constant 0 : index
    %c0_201 = arith.constant 0 : index
    %310 = vector.load %arg16[%c1_199, %c0_200, %c0_201] : memref<2x1x32xf32, #tpu.memory_space<vmem>>, vector<1x1x32xf32>
    %311 = vector.shape_cast %310 : vector<1x1x32xf32> to vector<1x32xf32>
    %312 = vector.broadcast %311 : vector<1x32xf32> to vector<9x32xf32>
    %313 = arith.addf %309, %312 : vector<9x32xf32>
    %314 = arith.addf %217, %313 : vector<9x32xf32>
    %c1_202 = arith.constant 1 : index
    %c0_203 = arith.constant 0 : index
    %c0_204 = arith.constant 0 : index
    %315 = vector.load %arg17[%c1_202, %c0_203, %c0_204] : memref<2x1x32xf32, #tpu.memory_space<vmem>>, vector<1x1x32xf32>
    %316 = vector.shape_cast %315 : vector<1x1x32xf32> to vector<1x32xf32>
    %c1_205 = arith.constant 1 : index
    %c0_206 = arith.constant 0 : index
    %c0_207 = arith.constant 0 : index
    %317 = vector.load %arg18[%c1_205, %c0_206, %c0_207] : memref<2x1x32xf32, #tpu.memory_space<vmem>>, vector<1x1x32xf32>
    %318 = vector.shape_cast %317 : vector<1x1x32xf32> to vector<1x32xf32>
    %cst_208 = arith.constant dense<0.000000e+00> : vector<9xf32>
    %319 = vector.multi_reduction <add>, %314, %cst_208 [1] : vector<9x32xf32> to vector<9xf32>
    %320 = vector.shape_cast %319 : vector<9xf32> to vector<9x1xf32>
    %cst_209 = arith.constant 3.200000e+01 : f32
    %321 = vector.broadcast %cst_209 : f32 to vector<9x1xf32>
    %322 = arith.divf %320, %321 : vector<9x1xf32>
    %323 = vector.broadcast %322 : vector<9x1xf32> to vector<9x32xf32>
    %324 = arith.subf %314, %323 : vector<9x32xf32>
    %325 = vector.broadcast %322 : vector<9x1xf32> to vector<9x32xf32>
    %326 = arith.subf %314, %325 : vector<9x32xf32>
    %327 = arith.mulf %324, %326 : vector<9x32xf32>
    %cst_210 = arith.constant dense<0.000000e+00> : vector<9xf32>
    %328 = vector.multi_reduction <add>, %327, %cst_210 [1] : vector<9x32xf32> to vector<9xf32>
    %329 = vector.shape_cast %328 : vector<9xf32> to vector<9x1xf32>
    %cst_211 = arith.constant 3.200000e+01 : f32
    %330 = vector.broadcast %cst_211 : f32 to vector<9x1xf32>
    %331 = arith.divf %329, %330 : vector<9x1xf32>
    %332 = vector.broadcast %322 : vector<9x1xf32> to vector<9x32xf32>
    %333 = arith.subf %314, %332 : vector<9x32xf32>
    %cst_212 = arith.constant 9.99999974E-6 : f32
    %334 = vector.broadcast %cst_212 : f32 to vector<9x1xf32>
    %335 = arith.addf %331, %334 : vector<9x1xf32>
    %336 = math.rsqrt %335 : vector<9x1xf32>
    %337 = vector.broadcast %336 : vector<9x1xf32> to vector<9x32xf32>
    %338 = arith.mulf %333, %337 : vector<9x32xf32>
    %339 = vector.broadcast %316 : vector<1x32xf32> to vector<9x32xf32>
    %340 = arith.mulf %338, %339 : vector<9x32xf32>
    %341 = vector.broadcast %318 : vector<1x32xf32> to vector<9x32xf32>
    %342 = arith.addf %340, %341 : vector<9x32xf32>
    %c1_213 = arith.constant 1 : index
    %c0_214 = arith.constant 0 : index
    %c0_215 = arith.constant 0 : index
    %343 = vector.load %arg19[%c1_213, %c0_214, %c0_215] : memref<2x32x64xf32, #tpu.memory_space<vmem>>, vector<1x32x64xf32>
    %344 = vector.shape_cast %343 : vector<1x32x64xf32> to vector<32x64xf32>
    %cst_216 = arith.constant dense<0.000000e+00> : vector<9x64xf32>
    %345 = tpu.matmul %342, %344, %cst_216 {dimension_numbers = #tpu.dot_dimension_numbers<[1], [0], [0], [1], [0, 0, 1, 1], [], []>} : vector<9x32xf32>, vector<32x64xf32>, vector<9x64xf32> -> vector<9x64xf32>
    %c1_217 = arith.constant 1 : index
    %c0_218 = arith.constant 0 : index
    %c0_219 = arith.constant 0 : index
    %346 = vector.load %arg20[%c1_217, %c0_218, %c0_219] : memref<2x1x64xf32, #tpu.memory_space<vmem>>, vector<1x1x64xf32>
    %347 = vector.shape_cast %346 : vector<1x1x64xf32> to vector<1x64xf32>
    %348 = vector.broadcast %347 : vector<1x64xf32> to vector<9x64xf32>
    %349 = arith.addf %345, %348 : vector<9x64xf32>
    %cst_220 = arith.constant 5.000000e-01 : f32
    %350 = vector.broadcast %cst_220 : f32 to vector<9x64xf32>
    %351 = arith.mulf %350, %349 : vector<9x64xf32>
    %cst_221 = arith.constant 4.471500e-02 : f32
    %352 = vector.broadcast %cst_221 : f32 to vector<9x64xf32>
    %353 = arith.mulf %352, %349 : vector<9x64xf32>
    %354 = arith.mulf %353, %349 : vector<9x64xf32>
    %355 = arith.mulf %354, %349 : vector<9x64xf32>
    %356 = arith.addf %349, %355 : vector<9x64xf32>
    %cst_222 = arith.constant 0.797884583 : f32
    %357 = vector.broadcast %cst_222 : f32 to vector<9x64xf32>
    %358 = arith.mulf %357, %356 : vector<9x64xf32>
    %359 = math.tanh %358 : vector<9x64xf32>
    %cst_223 = arith.constant 1.000000e+00 : f32
    %360 = vector.broadcast %cst_223 : f32 to vector<9x64xf32>
    %361 = arith.addf %360, %359 : vector<9x64xf32>
    %362 = arith.mulf %351, %361 : vector<9x64xf32>
    %c1_224 = arith.constant 1 : index
    %c0_225 = arith.constant 0 : index
    %c0_226 = arith.constant 0 : index
    %363 = vector.load %arg21[%c1_224, %c0_225, %c0_226] : memref<2x64x32xf32, #tpu.memory_space<vmem>>, vector<1x64x32xf32>
    %364 = vector.shape_cast %363 : vector<1x64x32xf32> to vector<64x32xf32>
    %cst_227 = arith.constant dense<0.000000e+00> : vector<9x32xf32>
    %365 = tpu.matmul %362, %364, %cst_227 {dimension_numbers = #tpu.dot_dimension_numbers<[1], [0], [0], [1], [0, 0, 1, 1], [], []>} : vector<9x64xf32>, vector<64x32xf32>, vector<9x32xf32> -> vector<9x32xf32>
    %c1_228 = arith.constant 1 : index
    %c0_229 = arith.constant 0 : index
    %c0_230 = arith.constant 0 : index
    %366 = vector.load %arg22[%c1_228, %c0_229, %c0_230] : memref<2x1x32xf32, #tpu.memory_space<vmem>>, vector<1x1x32xf32>
    %367 = vector.shape_cast %366 : vector<1x1x32xf32> to vector<1x32xf32>
    %368 = vector.broadcast %367 : vector<1x32xf32> to vector<9x32xf32>
    %369 = arith.addf %365, %368 : vector<9x32xf32>
    %370 = arith.addf %342, %369 : vector<9x32xf32>
    %c1_231 = arith.constant 1 : index
    %c0_232 = arith.constant 0 : index
    %c0_233 = arith.constant 0 : index
    %371 = vector.load %arg23[%c1_231, %c0_232, %c0_233] : memref<2x1x32xf32, #tpu.memory_space<vmem>>, vector<1x1x32xf32>
    %372 = vector.shape_cast %371 : vector<1x1x32xf32> to vector<1x32xf32>
    %c1_234 = arith.constant 1 : index
    %c0_235 = arith.constant 0 : index
    %c0_236 = arith.constant 0 : index
    %373 = vector.load %arg24[%c1_234, %c0_235, %c0_236] : memref<2x1x32xf32, #tpu.memory_space<vmem>>, vector<1x1x32xf32>
    %374 = vector.shape_cast %373 : vector<1x1x32xf32> to vector<1x32xf32>
    %cst_237 = arith.constant dense<0.000000e+00> : vector<9xf32>
    %375 = vector.multi_reduction <add>, %370, %cst_237 [1] : vector<9x32xf32> to vector<9xf32>
    %376 = vector.shape_cast %375 : vector<9xf32> to vector<9x1xf32>
    %cst_238 = arith.constant 3.200000e+01 : f32
    %377 = vector.broadcast %cst_238 : f32 to vector<9x1xf32>
    %378 = arith.divf %376, %377 : vector<9x1xf32>
    %379 = vector.broadcast %378 : vector<9x1xf32> to vector<9x32xf32>
    %380 = arith.subf %370, %379 : vector<9x32xf32>
    %381 = vector.broadcast %378 : vector<9x1xf32> to vector<9x32xf32>
    %382 = arith.subf %370, %381 : vector<9x32xf32>
    %383 = arith.mulf %380, %382 : vector<9x32xf32>
    %cst_239 = arith.constant dense<0.000000e+00> : vector<9xf32>
    %384 = vector.multi_reduction <add>, %383, %cst_239 [1] : vector<9x32xf32> to vector<9xf32>
    %385 = vector.shape_cast %384 : vector<9xf32> to vector<9x1xf32>
    %cst_240 = arith.constant 3.200000e+01 : f32
    %386 = vector.broadcast %cst_240 : f32 to vector<9x1xf32>
    %387 = arith.divf %385, %386 : vector<9x1xf32>
    %388 = vector.broadcast %378 : vector<9x1xf32> to vector<9x32xf32>
    %389 = arith.subf %370, %388 : vector<9x32xf32>
    %cst_241 = arith.constant 9.99999974E-6 : f32
    %390 = vector.broadcast %cst_241 : f32 to vector<9x1xf32>
    %391 = arith.addf %387, %390 : vector<9x1xf32>
    %392 = math.rsqrt %391 : vector<9x1xf32>
    %393 = vector.broadcast %392 : vector<9x1xf32> to vector<9x32xf32>
    %394 = arith.mulf %389, %393 : vector<9x32xf32>
    %395 = vector.broadcast %372 : vector<1x32xf32> to vector<9x32xf32>
    %396 = arith.mulf %394, %395 : vector<9x32xf32>
    %397 = vector.broadcast %374 : vector<1x32xf32> to vector<9x32xf32>
    %398 = arith.addf %396, %397 : vector<9x32xf32>
    %399 = vector.extract_strided_slice %398 {offsets = [0, 0], sizes = [8, 32], strides = [1, 1]} : vector<9x32xf32> to vector<8x32xf32>
    %c0_242 = arith.constant 0 : index
    %c0_243 = arith.constant 0 : index
    %400 = vector.load %arg11[%c0_242, %c0_243] : memref<32x4xf32, #tpu.memory_space<vmem>>, vector<32x4xf32>
    %cst_244 = arith.constant dense<0.000000e+00> : vector<8x4xf32>
    %401 = tpu.matmul %399, %400, %cst_244 {dimension_numbers = #tpu.dot_dimension_numbers<[1], [0], [0], [1], [0, 0, 1, 1], [], []>} : vector<8x32xf32>, vector<32x4xf32>, vector<8x4xf32> -> vector<8x4xf32>
    %c0_245 = arith.constant 0 : index
    %c0_246 = arith.constant 0 : index
    %402 = vector.load %arg12[%c0_245, %c0_246] : memref<1x4xf32, #tpu.memory_space<vmem>>, vector<1x4xf32>
    %403 = vector.broadcast %402 : vector<1x4xf32> to vector<8x4xf32>
    %404 = arith.addf %401, %403 : vector<8x4xf32>
    %c0_247 = arith.constant 0 : index
    %c0_248 = arith.constant 0 : index
    %c0_249 = arith.constant 0 : index
    %405 = vector.load %arg25[%c0_247, %c0_248, %c0_249] : memref<1x8x4xf32, #tpu.memory_space<vmem>>, vector<1x8x4xf32>
    %406 = vector.shape_cast %405 : vector<1x8x4xf32> to vector<8x4xf32>
    %407 = vector.shape_cast %404 : vector<8x4xf32> to vector<1x8x4xf32>
    tpu.vector_store %arg25[%c0_247, %c0_248, %c0_249], %407 {strides = array<i32>} : memref<1x8x4xf32, #tpu.memory_space<vmem>>, vector<1x8x4xf32>,
    return
  }
  func.func @transform_0(%arg0: i32) -> (i32, i32, i32) {
    %c0_i32 = arith.constant 0 : i32
    %c0_i32_0 = arith.constant 0 : i32
    %c0_i32_1 = arith.constant 0 : i32
    return %arg0, %c0_i32, %c0_i32_0 : i32, i32, i32
  }
  func.func @transform_1(%arg0: i32) -> (i32, i32, i32) {
    %c0_i32 = arith.constant 0 : i32
    %c0_i32_0 = arith.constant 0 : i32
    %c0_i32_1 = arith.constant 0 : i32
    return %arg0, %c0_i32, %c0_i32_0 : i32, i32, i32
  }
  func.func @transform_2(%arg0: i32) -> (i32, i32, i32) {
    %c0_i32 = arith.constant 0 : i32
    %c0_i32_0 = arith.constant 0 : i32
    %c0_i32_1 = arith.constant 0 : i32
    return %arg0, %c0_i32, %c0_i32_0 : i32, i32, i32
  }
  func.func @transform_3(%arg0: i32) -> (i32, i32) {
    %c0_i32 = arith.constant 0 : i32
    %c0_i32_0 = arith.constant 0 : i32
    %c0_i32_1 = arith.constant 0 : i32
    return %c0_i32, %c0_i32_0 : i32, i32
  }
  func.func @transform_4(%arg0: i32) -> (i32, i32) {
    %c0_i32 = arith.constant 0 : i32
    %c0_i32_0 = arith.constant 0 : i32
    %c0_i32_1 = arith.constant 0 : i32
    return %c0_i32, %c0_i32_0 : i32, i32
  }
  func.func @transform_5(%arg0: i32) -> (i32, i32) {
    %c0_i32 = arith.constant 0 : i32
    %c0_i32_0 = arith.constant 0 : i32
    %c0_i32_1 = arith.constant 0 : i32
    return %c0_i32, %c0_i32_0 : i32, i32
  }
  func.func @transform_6(%arg0: i32) -> (i32, i32) {
    %c0_i32 = arith.constant 0 : i32
    %c0_i32_0 = arith.constant 0 : i32
    %c0_i32_1 = arith.constant 0 : i32
    return %c0_i32, %c0_i32_0 : i32, i32
  }
  func.func @transform_7(%arg0: i32) -> (i32, i32) {
    %c0_i32 = arith.constant 0 : i32
    %c0_i32_0 = arith.constant 0 : i32
    %c0_i32_1 = arith.constant 0 : i32
    return %c0_i32, %c0_i32_0 : i32, i32
  }
  func.func @transform_8(%arg0: i32) -> (i32, i32) {
    %c0_i32 = arith.constant 0 : i32
    %c0_i32_0 = arith.constant 0 : i32
    %c0_i32_1 = arith.constant 0 : i32
    return %c0_i32, %c0_i32_0 : i32, i32
  }
  func.func @transform_9(%arg0: i32) -> (i32, i32) {
    %c0_i32 = arith.constant 0 : i32
    %c0_i32_0 = arith.constant 0 : i32
    %c0_i32_1 = arith.constant 0 : i32
    return %c0_i32, %c0_i32_0 : i32, i32
  }
  func.func @transform_10(%arg0: i32) -> (i32, i32) {
    %c0_i32 = arith.constant 0 : i32
    %c0_i32_0 = arith.constant 0 : i32
    %c0_i32_1 = arith.constant 0 : i32
    return %c0_i32, %c0_i32_0 : i32, i32
  }
  func.func @transform_11(%arg0: i32) -> (i32, i32) {
    %c0_i32 = arith.constant 0 : i32
    %c0_i32_0 = arith.constant 0 : i32
    %c0_i32_1 = arith.constant 0 : i32
    return %c0_i32, %c0_i32_0 : i32, i32
  }
  func.func @transform_12(%arg0: i32) -> (i32, i32, i32) {
    %c0_i32 = arith.constant 0 : i32
    %c0_i32_0 = arith.constant 0 : i32
    %c0_i32_1 = arith.constant 0 : i32
    %c0_i32_2 = arith.constant 0 : i32
    return %c0_i32, %c0_i32_0, %c0_i32_1 : i32, i32, i32
  }
  func.func @transform_13(%arg0: i32) -> (i32, i32, i32) {
    %c0_i32 = arith.constant 0 : i32
    %c0_i32_0 = arith.constant 0 : i32
    %c0_i32_1 = arith.constant 0 : i32
    %c0_i32_2 = arith.constant 0 : i32
    return %c0_i32, %c0_i32_0, %c0_i32_1 : i32, i32, i32
  }
  func.func @transform_14(%arg0: i32) -> (i32, i32, i32) {
    %c0_i32 = arith.constant 0 : i32
    %c0_i32_0 = arith.constant 0 : i32
    %c0_i32_1 = arith.constant 0 : i32
    %c0_i32_2 = arith.constant 0 : i32
    return %c0_i32, %c0_i32_0, %c0_i32_1 : i32, i32, i32
  }
  func.func @transform_15(%arg0: i32) -> (i32, i32, i32) {
    %c0_i32 = arith.constant 0 : i32
    %c0_i32_0 = arith.constant 0 : i32
    %c0_i32_1 = arith.constant 0 : i32
    %c0_i32_2 = arith.constant 0 : i32
    return %c0_i32, %c0_i32_0, %c0_i32_1 : i32, i32, i32
  }
  func.func @transform_16(%arg0: i32) -> (i32, i32, i32) {
    %c0_i32 = arith.constant 0 : i32
    %c0_i32_0 = arith.constant 0 : i32
    %c0_i32_1 = arith.constant 0 : i32
    %c0_i32_2 = arith.constant 0 : i32
    return %c0_i32, %c0_i32_0, %c0_i32_1 : i32, i32, i32
  }
  func.func @transform_17(%arg0: i32) -> (i32, i32, i32) {
    %c0_i32 = arith.constant 0 : i32
    %c0_i32_0 = arith.constant 0 : i32
    %c0_i32_1 = arith.constant 0 : i32
    %c0_i32_2 = arith.constant 0 : i32
    return %c0_i32, %c0_i32_0, %c0_i32_1 : i32, i32, i32
  }
  func.func @transform_18(%arg0: i32) -> (i32, i32, i32) {
    %c0_i32 = arith.constant 0 : i32
    %c0_i32_0 = arith.constant 0 : i32
    %c0_i32_1 = arith.constant 0 : i32
    %c0_i32_2 = arith.constant 0 : i32
    return %c0_i32, %c0_i32_0, %c0_i32_1 : i32, i32, i32
  }
  func.func @transform_19(%arg0: i32) -> (i32, i32, i32) {
    %c0_i32 = arith.constant 0 : i32
    %c0_i32_0 = arith.constant 0 : i32
    %c0_i32_1 = arith.constant 0 : i32
    %c0_i32_2 = arith.constant 0 : i32
    return %c0_i32, %c0_i32_0, %c0_i32_1 : i32, i32, i32
  }
  func.func @transform_20(%arg0: i32) -> (i32, i32, i32) {
    %c0_i32 = arith.constant 0 : i32
    %c0_i32_0 = arith.constant 0 : i32
    %c0_i32_1 = arith.constant 0 : i32
    %c0_i32_2 = arith.constant 0 : i32
    return %c0_i32, %c0_i32_0, %c0_i32_1 : i32, i32, i32
  }
  func.func @transform_21(%arg0: i32) -> (i32, i32, i32) {
    %c0_i32 = arith.constant 0 : i32
    %c0_i32_0 = arith.constant 0 : i32
    %c0_i32_1 = arith.constant 0 : i32
    %c0_i32_2 = arith.constant 0 : i32
    return %c0_i32, %c0_i32_0, %c0_i32_1 : i32, i32, i32
  }
  func.func @transform_22(%arg0: i32) -> (i32, i32, i32) {
    %c0_i32 = arith.constant 0 : i32
    %c0_i32_0 = arith.constant 0 : i32
    %c0_i32_1 = arith.constant 0 : i32
    %c0_i32_2 = arith.constant 0 : i32
    return %c0_i32, %c0_i32_0, %c0_i32_1 : i32, i32, i32
  }
  func.func @transform_23(%arg0: i32) -> (i32, i32, i32) {
    %c0_i32 = arith.constant 0 : i32
    %c0_i32_0 = arith.constant 0 : i32
    %c0_i32_1 = arith.constant 0 : i32
    %c0_i32_2 = arith.constant 0 : i32
    return %c0_i32, %c0_i32_0, %c0_i32_1 : i32, i32, i32
  }
  func.func @transform_24(%arg0: i32) -> (i32, i32, i32) {
    %c0_i32 = arith.constant 0 : i32
    %c0_i32_0 = arith.constant 0 : i32
    %c0_i32_1 = arith.constant 0 : i32
    return %arg0, %c0_i32, %c0_i32_0 : i32, i32, i32
  }
}

</mosaic_0001>

<llo_original>
// kernel: tpu_custom_call.1
$region0: #{tpu_custom_call.1}
  #allocation0 [shape = 'u32[]', space=smem, size = 0x4, offset = 0x4, fixed_abs, tag = 'smem constant byte address 0x4 - core index']
  #allocation1 [shape = 'u32[144,128]{1,0:T(1,128)}', space=vmem, size = 0x12000, scoped, tag = 'internal scratch']
  #allocation2 [shape = 'f32[9,32]{1,0:T(8,128)}', space=vmem, size = 0x2000, scoped, tag = 'scratch operand']
  #allocation3 [shape = 'f32[9,32]{1,0:T(8,128)}', space=vmem, size = 0x2000, scoped, tag = 'scratch operand']
  #allocation4 [shape = 'f32[9,96]{1,0:T(8,128)}', space=vmem, size = 0x2000, scoped, tag = 'scratch operand']
  %s0 = inlined_call_operand.hbm [shape: f32[2,8,8], index: 0, kind: input, shape index: {}]
  %s1 = inlined_call_operand.vmem [shape: f32[2,1,32], index: 1, kind: input, shape index: {}]
  %s2 = inlined_call_operand.hbm [shape: f32[2,1,9], index: 2, kind: input, shape index: {}]
  %s3 = inlined_call_operand.hbm [shape: f32[9,32], index: 3, kind: input, shape index: {}]
  %s4 = inlined_call_operand.vmem [shape: f32[32,32], index: 4, kind: input, shape index: {}]
  %s5 = inlined_call_operand.vmem [shape: f32[1,32], index: 5, kind: input, shape index: {}]
  %s6 = inlined_call_operand.hbm [shape: f32[32,32], index: 6, kind: input, shape index: {}]
  %s7 = inlined_call_operand.hbm [shape: f32[1,32], index: 7, kind: input, shape index: {}]
  %s8 = inlined_call_operand.vmem [shape: f32[8,32], index: 8, kind: input, shape index: {}]
  %s9 = inlined_call_operand.hbm [shape: f32[1,32], index: 9, kind: input, shape index: {}]
  %s10 = inlined_call_operand.vmem [shape: f32[32,4], index: 10, kind: input, shape index: {}]
  %s11 = inlined_call_operand.hbm [shape: f32[1,4], index: 11, kind: input, shape index: {}]
  %s12 = inlined_call_operand.vmem [shape: f32[2,32,96], index: 12, kind: input, shape index: {}]
  %s13 = inlined_call_operand.hbm [shape: f32[2,1,96], index: 13, kind: input, shape index: {}]
  %s14 = inlined_call_operand.vmem [shape: f32[2,32,32], index: 14, kind: input, shape index: {}]
  %s15 = inlined_call_operand.hbm [shape: f32[2,1,32], index: 15, kind: input, shape index: {}]
  %s16 = inlined_call_operand.hbm [shape: f32[2,1,32], index: 16, kind: input, shape index: {}]
  %s17 = inlined_call_operand.hbm [shape: f32[2,1,32], index: 17, kind: input, shape index: {}]
  %s18 = inlined_call_operand.vmem [shape: f32[2,32,64], index: 18, kind: input, shape index: {}]
  %s19 = inlined_call_operand.hbm [shape: f32[2,1,64], index: 19, kind: input, shape index: {}]
  %s20 = inlined_call_operand.vmem [shape: f32[2,64,32], index: 20, kind: input, shape index: {}]
  %s21 = inlined_call_operand.vmem [shape: f32[2,1,32], index: 21, kind: input, shape index: {}]
  %s22 = inlined_call_operand.vmem [shape: f32[2,1,32], index: 22, kind: input, shape index: {}]
  %s23 = inlined_call_operand.vmem [shape: f32[2,1,32], index: 23, kind: input, shape index: {}]
  %s24 = inlined_call_operand.vmem [shape: f32[2,8,4], index: 24, kind: output, shape index: {}]
  %s25 = sld [smem:[#allocation0]]
  $region177: #{tpu_custom_call.1} parent=0
    _
  %s27 = ssub.s32 1, %s25
  %s28 = scalar_select 0, %s27, %s25
  $region1: #{tpu_custom_call.1} parent=0
    #allocation5 [shape = 'u8[8192]{0}', space=vmem, size = 0x2000, scoped, tag = 'input window, operand 0']
    #allocation6 [shape = 's32[2]{0}', space=sflag, size = 0x8, scoped, tag = 'scoped memory for tpu_custom_call.1']
    #allocation7 [shape = 'u8[1024]{0}', space=vmem, size = 0x400, scoped, tag = 'input window, operand 2']
    #allocation8 [shape = 's32[2]{0}', space=sflag, size = 0x8, scoped, tag = 'scoped memory for tpu_custom_call.1']
    #allocation9 [shape = 'u8[8192]{0}', space=vmem, size = 0x2000, scoped, tag = 'input window, operand 3, single buffered']
    #allocation10 [shape = 'u8[16384]{0}', space=vmem, size = 0x4000, scoped, tag = 'input window, operand 6, single buffered']
    #allocation11 [shape = 's32[1]{0}', space=sflag, size = 0x4, scoped, tag = 'scoped memory for tpu_custom_call.1']
    #allocation12 [shape = 'u8[512]{0}', space=vmem, size = 0x400, scoped, tag = 'input window, operand 7, single buffered']
    #allocation13 [shape = 'u8[512]{0}', space=vmem, size = 0x400, scoped, tag = 'input window, operand 9, single buffered']
    #allocation14 [shape = 's32[1]{0}', space=sflag, size = 0x4, scoped, tag = 'scoped memory for tpu_custom_call.1']
    #allocation15 [shape = 'u8[512]{0}', space=vmem, size = 0x400, scoped, tag = 'input window, operand 11, single buffered']
    #allocation16 [shape = 'u8[1024]{0}', space=vmem, size = 0x400, scoped, tag = 'input window, operand 13, single buffered']
    #allocation17 [shape = 's32[1]{0}', space=sflag, size = 0x4, scoped, tag = 'scoped memory for tpu_custom_call.1']
    #allocation18 [shape = 'u8[1024]{0}', space=vmem, size = 0x400, scoped, tag = 'input window, operand 15, single buffered']
    #allocation19 [shape = 'u8[1024]{0}', space=vmem, size = 0x400, scoped, tag = 'input window, operand 16, single buffered']
    #allocation20 [shape = 's32[1]{0}', space=sflag, size = 0x4, scoped, tag = 'scoped memory for tpu_custom_call.1']
    #allocation21 [shape = 'u8[1024]{0}', space=vmem, size = 0x400, scoped, tag = 'input window, operand 17, single buffered']
    #allocation22 [shape = 'u8[1024]{0}', space=vmem, size = 0x400, scoped, tag = 'input window, operand 19, single buffered']
    #allocation23 [shape = 's32[1]{0}', space=sflag, size = 0x4, scoped, tag = 'scoped memory for tpu_custom_call.1']
    %29 = vsyncpa [#allocation6], 0
    %s30 = scalar_lea.sflag [#allocation6], 1
    %31 = vsyncpa %s30, 0
    %32 = vsyncpa [#allocation8], 0
    %s33 = scalar_lea.sflag [#allocation8], 1
    %34 = vsyncpa %s33, 0
    %35 = vsyncpa [#allocation11], 0
    %36 = vsyncpa [#allocation14], 0
    %37 = vsyncpa [#allocation17], 0
    %38 = vsyncpa [#allocation20], 0
    %39 = vsyncpa [#allocation23], 0
    loop: start=0, step=1, limit=4
    $region2: #{tpu_custom_call.1} parent=1 // loop_pre_header
      _
    $region3: #{tpu_custom_call.1} parent=1 // loop_header
      %s41 = sphi 0, %s45
      %p42 = scmp.ge.s32.totalorder %s41, 4
      %s51 = sphi 0, %s53
      %s54 = sphi 0, %s51
      %s55 = sphi 0, %s54
      %s71 = sphi 0, %s55
      %s77 = sphi 0, %s79
      %s80 = sphi 0, %s77
      %s81 = sphi 0, %s80
      %s97 = sphi 0, %s81
      %s103 = sphi 0, %s105
      %s106 = sphi 0, %s103
      %s107 = sphi 0, %s106
      %s123 = sphi 0, %s107
      %s127 = sphi 0, %s127
      %s129 = sphi 0, %s127
      %s130 = sphi 0, %s129
      %s144 = sphi 0, %s130
      %s148 = sphi 0, %s148
      %s150 = sphi 0, %s148
      %s151 = sphi 0, %s150
      %s165 = sphi 0, %s151
      %s169 = sphi 0, %s169
      %s171 = sphi 0, %s169
      %s172 = sphi 0, %s171
      %s186 = sphi 0, %s172
      %s190 = sphi 0, %s190
      %s192 = sphi 0, %s190
      %s193 = sphi 0, %s192
      %s207 = sphi 0, %s193
      %s211 = sphi 0, %s211
      %s213 = sphi 0, %s211
      %s214 = sphi 0, %s213
      %s228 = sphi 0, %s214
      %s232 = sphi 0, %s232
      %s234 = sphi 0, %s232
      %s235 = sphi 0, %s234
      %s249 = sphi 0, %s235
      %s253 = sphi 0, %s253
      %s255 = sphi 0, %s253
      %s256 = sphi 0, %s255
      %s270 = sphi 0, %s256
      %s274 = sphi 0, %s274
      %s276 = sphi 0, %s274
      %s277 = sphi 0, %s276
      %s291 = sphi 0, %s277
      %s295 = sphi 0, %s295
      %s297 = sphi 0, %s295
      %s298 = sphi 0, %s297
      %s312 = sphi 0, %s298
      %s316 = sphi 0, %s316
      %s318 = sphi 0, %s316
      %s319 = sphi 0, %s318
      %s333 = sphi 0, %s319
      %s337 = sphi 0, %s337
      %s339 = sphi 0, %s337
      %s340 = sphi 0, %s339
      %s354 = sphi 0, %s340
      %s358 = sphi 0, %s358
      %s360 = sphi 0, %s358
      %s361 = sphi 0, %s360
      %s375 = sphi 0, %s361
      %s379 = sphi 0, %s379
      %s381 = sphi 0, %s379
      %s382 = sphi 0, %s381
      %s396 = sphi 0, %s382
      %s400 = sphi 0, %s400
      %s402 = sphi 0, %s400
      %s403 = sphi 0, %s402
      %s417 = sphi 0, %s403
      %s421 = sphi 0, %s421
      %s423 = sphi 0, %s421
      %s424 = sphi 0, %s423
      %s438 = sphi 0, %s424
      %s442 = sphi 0, %s442
      %s444 = sphi 0, %s442
      %s445 = sphi 0, %s444
      %s459 = sphi 0, %s445
      %s463 = sphi 0, %s463
      %s465 = sphi 0, %s463
      %s466 = sphi 0, %s465
      %s480 = sphi 0, %s466
      %s484 = sphi 0, %s484
      %s486 = sphi 0, %s484
      %s487 = sphi 0, %s486
      %s501 = sphi 0, %s487
      %s505 = sphi 0, %s505
      %s507 = sphi 0, %s505
      %s508 = sphi 0, %s507
      %s522 = sphi 0, %s508
      %s526 = sphi 0, %s526
      %s528 = sphi 0, %s526
      %s529 = sphi 0, %s528
      %s543 = sphi 0, %s529
      %s547 = sphi 0, %s547
      %s549 = sphi 0, %s547
      %s550 = sphi 0, %s549
      %s564 = sphi 0, %s550
      %s570 = sphi 0, %s572
      %s573 = sphi 0, %s570
      %s574 = sphi 0, %s573
      %s590 = sphi 0, %s574
    $region4: #{tpu_custom_call.1} parent=1 // loop_header_branch
      %44 = sbr.rel (%p42) target = $region8
    $region5: #{tpu_custom_call.1} parent=1 // loop_body
      %s46 = ssub.s32 %s41, 1
      %s47 = ssub.s32 %s41, 2
      %s48 = sadd.s32 %s41, 1
      %s49 = ssub.s32 %s41, %s48
      %p50 = scmp.eq.s32.totalorder %s49, 0
      %s52 = sadd.s32 %s51, 1
      %s53 = scalar_select %p50, %s51, %s52
      %p56 = pneg %p50
      %p57 = scmp.eq.s32.totalorder %s41, 1
      %p58 = por %p56, %p57
      %p59 = scmp.ne.s32.totalorder %s51, %s54
      %p60 = scmp.eq.s32.totalorder %s41, 0
      %p61 = por %p59, %p60
      %p62 = scmp.ne.s32.totalorder %s51, %s54
      %p63 = scmp.eq.s32.totalorder %s46, 1
      %p64 = por %p62, %p63
      %p65 = scmp.ne.s32.totalorder %s54, %s55
      %p66 = scmp.eq.s32.totalorder %s46, 0
      %p67 = por %p65, %p66
      %p68 = scmp.ne.s32.totalorder %s54, %s55
      %p69 = scmp.eq.s32.totalorder %s47, 1
      %p70 = por %p68, %p69
      %p72 = scmp.ne.s32.totalorder %s55, %s71
      %p73 = scmp.eq.s32.totalorder %s47, 0
      %p74 = por %p72, %p73
      %s75 = ssub.s32 %s41, %s48
      %p76 = scmp.eq.s32.totalorder %s75, 0
      %s78 = sadd.s32 %s77, 1
      %s79 = scalar_select %p76, %s77, %s78
      %p82 = pneg %p76
      %p83 = scmp.eq.s32.totalorder %s41, 1
      %p84 = por %p82, %p83
      %p85 = scmp.ne.s32.totalorder %s77, %s80
      %p86 = scmp.eq.s32.totalorder %s41, 0
      %p87 = por %p85, %p86
      %p88 = scmp.ne.s32.totalorder %s77, %s80
      %p89 = scmp.eq.s32.totalorder %s46, 1
      %p90 = por %p88, %p89
      %p91 = scmp.ne.s32.totalorder %s80, %s81
      %p92 = scmp.eq.s32.totalorder %s46, 0
      %p93 = por %p91, %p92
      %p94 = scmp.ne.s32.totalorder %s80, %s81
      %p95 = scmp.eq.s32.totalorder %s47, 1
      %p96 = por %p94, %p95
      %p98 = scmp.ne.s32.totalorder %s81, %s97
      %p99 = scmp.eq.s32.totalorder %s47, 0
      %p100 = por %p98, %p99
      %s101 = ssub.s32 %s41, %s48
      %p102 = scmp.eq.s32.totalorder %s101, 0
      %s104 = sadd.s32 %s103, 1
      %s105 = scalar_select %p102, %s103, %s104
      %p108 = pneg %p102
      %p109 = scmp.eq.s32.totalorder %s41, 1
      %p110 = por %p108, %p109
      %p111 = scmp.ne.s32.totalorder %s103, %s106
      %p112 = scmp.eq.s32.totalorder %s41, 0
      %p113 = por %p111, %p112
      %p114 = scmp.ne.s32.totalorder %s103, %s106
      %p115 = scmp.eq.s32.totalorder %s46, 1
      %p116 = por %p114, %p115
      %p117 = scmp.ne.s32.totalorder %s106, %s107
      %p118 = scmp.eq.s32.totalorder %s46, 0
      %p119 = por %p117, %p118
      %p120 = scmp.ne.s32.totalorder %s106, %s107
      %p121 = scmp.eq.s32.totalorder %s47, 1
      %p122 = por %p120, %p121
      %p124 = scmp.ne.s32.totalorder %s107, %s123
      %p125 = scmp.eq.s32.totalorder %s47, 0
      %p126 = por %p124, %p125
      %s128 = sadd.s32 %s127, 1
      %p131 = scmp.eq.s32.totalorder %s41, 1
      %p132 = scmp.ne.s32.totalorder %s127, %s129
      %p133 = scmp.eq.s32.totalorder %s41, 0
      %p134 = por %p132, %p133
      %p135 = scmp.ne.s32.totalorder %s127, %s129
      %p136 = scmp.eq.s32.totalorder %s46, 1
      %p137 = por %p135, %p136
      %p138 = scmp.ne.s32.totalorder %s129, %s130
      %p139 = scmp.eq.s32.totalorder %s46, 0
      %p140 = por %p138, %p139
      %p141 = scmp.ne.s32.totalorder %s129, %s130
      %p142 = scmp.eq.s32.totalorder %s47, 1
      %p143 = por %p141, %p142
      %p145 = scmp.ne.s32.totalorder %s130, %s144
      %p146 = scmp.eq.s32.totalorder %s47, 0
      %p147 = por %p145, %p146
      %s149 = sadd.s32 %s148, 1
      %p152 = scmp.eq.s32.totalorder %s41, 1
      %p153 = scmp.ne.s32.totalorder %s148, %s150
      %p154 = scmp.eq.s32.totalorder %s41, 0
      %p155 = por %p153, %p154
      %p156 = scmp.ne.s32.totalorder %s148, %s150
      %p157 = scmp.eq.s32.totalorder %s46, 1
      %p158 = por %p156, %p157
      %p159 = scmp.ne.s32.totalorder %s150, %s151
      %p160 = scmp.eq.s32.totalorder %s46, 0
      %p161 = por %p159, %p160
      %p162 = scmp.ne.s32.totalorder %s150, %s151
      %p163 = scmp.eq.s32.totalorder %s47, 1
      %p164 = por %p162, %p163
      %p166 = scmp.ne.s32.totalorder %s151, %s165
      %p167 = scmp.eq.s32.totalorder %s47, 0
      %p168 = por %p166, %p167
      %s170 = sadd.s32 %s169, 1
      %p173 = scmp.eq.s32.totalorder %s41, 1
      %p174 = scmp.ne.s32.totalorder %s169, %s171
      %p175 = scmp.eq.s32.totalorder %s41, 0
      %p176 = por %p174, %p175
      %p177 = scmp.ne.s32.totalorder %s169, %s171
      %p178 = scmp.eq.s32.totalorder %s46, 1
      %p179 = por %p177, %p178
      %p180 = scmp.ne.s32.totalorder %s171, %s172
      %p181 = scmp.eq.s32.totalorder %s46, 0
      %p182 = por %p180, %p181
      %p183 = scmp.ne.s32.totalorder %s171, %s172
      %p184 = scmp.eq.s32.totalorder %s47, 1
      %p185 = por %p183, %p184
      %p187 = scmp.ne.s32.totalorder %s172, %s186
      %p188 = scmp.eq.s32.totalorder %s47, 0
      %p189 = por %p187, %p188
      %s191 = sadd.s32 %s190, 1
      %p194 = scmp.eq.s32.totalorder %s41, 1
      %p195 = scmp.ne.s32.totalorder %s190, %s192
      %p196 = scmp.eq.s32.totalorder %s41, 0
      %p197 = por %p195, %p196
      %p198 = scmp.ne.s32.totalorder %s190, %s192
      %p199 = scmp.eq.s32.totalorder %s46, 1
      %p200 = por %p198, %p199
      %p201 = scmp.ne.s32.totalorder %s192, %s193
      %p202 = scmp.eq.s32.totalorder %s46, 0
      %p203 = por %p201, %p202
      %p204 = scmp.ne.s32.totalorder %s192, %s193
      %p205 = scmp.eq.s32.totalorder %s47, 1
      %p206 = por %p204, %p205
      %p208 = scmp.ne.s32.totalorder %s193, %s207
      %p209 = scmp.eq.s32.totalorder %s47, 0
      %p210 = por %p208, %p209
      %s212 = sadd.s32 %s211, 1
      %p215 = scmp.eq.s32.totalorder %s41, 1
      %p216 = scmp.ne.s32.totalorder %s211, %s213
      %p217 = scmp.eq.s32.totalorder %s41, 0
      %p218 = por %p216, %p217
      %p219 = scmp.ne.s32.totalorder %s211, %s213
      %p220 = scmp.eq.s32.totalorder %s46, 1
      %p221 = por %p219, %p220
      %p222 = scmp.ne.s32.totalorder %s213, %s214
      %p223 = scmp.eq.s32.totalorder %s46, 0
      %p224 = por %p222, %p223
      %p225 = scmp.ne.s32.totalorder %s213, %s214
      %p226 = scmp.eq.s32.totalorder %s47, 1
      %p227 = por %p225, %p226
      %p229 = scmp.ne.s32.totalorder %s214, %s228
      %p230 = scmp.eq.s32.totalorder %s47, 0
      %p231 = por %p229, %p230
      %s233 = sadd.s32 %s232, 1
      %p236 = scmp.eq.s32.totalorder %s41, 1
      %p237 = scmp.ne.s32.totalorder %s232, %s234
      %p238 = scmp.eq.s32.totalorder %s41, 0
      %p239 = por %p237, %p238
      %p240 = scmp.ne.s32.totalorder %s232, %s234
      %p241 = scmp.eq.s32.totalorder %s46, 1
      %p242 = por %p240, %p241
      %p243 = scmp.ne.s32.totalorder %s234, %s235
      %p244 = scmp.eq.s32.totalorder %s46, 0
      %p245 = por %p243, %p244
      %p246 = scmp.ne.s32.totalorder %s234, %s235
      %p247 = scmp.eq.s32.totalorder %s47, 1
      %p248 = por %p246, %p247
      %p250 = scmp.ne.s32.totalorder %s235, %s249
      %p251 = scmp.eq.s32.totalorder %s47, 0
      %p252 = por %p250, %p251
      %s254 = sadd.s32 %s253, 1
      %p257 = scmp.eq.s32.totalorder %s41, 1
      %p258 = scmp.ne.s32.totalorder %s253, %s255
      %p259 = scmp.eq.s32.totalorder %s41, 0
      %p260 = por %p258, %p259
      %p261 = scmp.ne.s32.totalorder %s253, %s255
      %p262 = scmp.eq.s32.totalorder %s46, 1
      %p263 = por %p261, %p262
      %p264 = scmp.ne.s32.totalorder %s255, %s256
      %p265 = scmp.eq.s32.totalorder %s46, 0
      %p266 = por %p264, %p265
      %p267 = scmp.ne.s32.totalorder %s255, %s256
      %p268 = scmp.eq.s32.totalorder %s47, 1
      %p269 = por %p267, %p268
      %p271 = scmp.ne.s32.totalorder %s256, %s270
      %p272 = scmp.eq.s32.totalorder %s47, 0
      %p273 = por %p271, %p272
      %s275 = sadd.s32 %s274, 1
      %p278 = scmp.eq.s32.totalorder %s41, 1
      %p279 = scmp.ne.s32.totalorder %s274, %s276
      %p280 = scmp.eq.s32.totalorder %s41, 0
      %p281 = por %p279, %p280
      %p282 = scmp.ne.s32.totalorder %s274, %s276
      %p283 = scmp.eq.s32.totalorder %s46, 1
      %p284 = por %p282, %p283
      %p285 = scmp.ne.s32.totalorder %s276, %s277
      %p286 = scmp.eq.s32.totalorder %s46, 0
      %p287 = por %p285, %p286
      %p288 = scmp.ne.s32.totalorder %s276, %s277
      %p289 = scmp.eq.s32.totalorder %s47, 1
      %p290 = por %p288, %p289
      %p292 = scmp.ne.s32.totalorder %s277, %s291
      %p293 = scmp.eq.s32.totalorder %s47, 0
      %p294 = por %p292, %p293
      %s296 = sadd.s32 %s295, 1
      %p299 = scmp.eq.s32.totalorder %s41, 1
      %p300 = scmp.ne.s32.totalorder %s295, %s297
      %p301 = scmp.eq.s32.totalorder %s41, 0
      %p302 = por %p300, %p301
      %p303 = scmp.ne.s32.totalorder %s295, %s297
      %p304 = scmp.eq.s32.totalorder %s46, 1
      %p305 = por %p303, %p304
      %p306 = scmp.ne.s32.totalorder %s297, %s298
      %p307 = scmp.eq.s32.totalorder %s46, 0
      %p308 = por %p306, %p307
      %p309 = scmp.ne.s32.totalorder %s297, %s298
      %p310 = scmp.eq.s32.totalorder %s47, 1
      %p311 = por %p309, %p310
      %p313 = scmp.ne.s32.totalorder %s298, %s312
      %p314 = scmp.eq.s32.totalorder %s47, 0
      %p315 = por %p313, %p314
      %s317 = sadd.s32 %s316, 1
      %p320 = scmp.eq.s32.totalorder %s41, 1
      %p321 = scmp.ne.s32.totalorder %s316, %s318
      %p322 = scmp.eq.s32.totalorder %s41, 0
      %p323 = por %p321, %p322
      %p324 = scmp.ne.s32.totalorder %s316, %s318
      %p325 = scmp.eq.s32.totalorder %s46, 1
      %p326 = por %p324, %p325
      %p327 = scmp.ne.s32.totalorder %s318, %s319
      %p328 = scmp.eq.s32.totalorder %s46, 0
      %p329 = por %p327, %p328
      %p330 = scmp.ne.s32.totalorder %s318, %s319
      %p331 = scmp.eq.s32.totalorder %s47, 1
      %p332 = por %p330, %p331
      %p334 = scmp.ne.s32.totalorder %s319, %s333
      %p335 = scmp.eq.s32.totalorder %s47, 0
      %p336 = por %p334, %p335
      %s338 = sadd.s32 %s337, 1
      %p341 = scmp.eq.s32.totalorder %s41, 1
      %p342 = scmp.ne.s32.totalorder %s337, %s339
      %p343 = scmp.eq.s32.totalorder %s41, 0
      %p344 = por %p342, %p343
      %p345 = scmp.ne.s32.totalorder %s337, %s339
      %p346 = scmp.eq.s32.totalorder %s46, 1
      %p347 = por %p345, %p346
      %p348 = scmp.ne.s32.totalorder %s339, %s340
      %p349 = scmp.eq.s32.totalorder %s46, 0
      %p350 = por %p348, %p349
      %p351 = scmp.ne.s32.totalorder %s339, %s340
      %p352 = scmp.eq.s32.totalorder %s47, 1
      %p353 = por %p351, %p352
      %p355 = scmp.ne.s32.totalorder %s340, %s354
      %p356 = scmp.eq.s32.totalorder %s47, 0
      %p357 = por %p355, %p356
      %s359 = sadd.s32 %s358, 1
      %p362 = scmp.eq.s32.totalorder %s41, 1
      %p363 = scmp.ne.s32.totalorder %s358, %s360
      %p364 = scmp.eq.s32.totalorder %s41, 0
      %p365 = por %p363, %p364
      %p366 = scmp.ne.s32.totalorder %s358, %s360
      %p367 = scmp.eq.s32.totalorder %s46, 1
      %p368 = por %p366, %p367
      %p369 = scmp.ne.s32.totalorder %s360, %s361
      %p370 = scmp.eq.s32.totalorder %s46, 0
      %p371 = por %p369, %p370
      %p372 = scmp.ne.s32.totalorder %s360, %s361
      %p373 = scmp.eq.s32.totalorder %s47, 1
      %p374 = por %p372, %p373
      %p376 = scmp.ne.s32.totalorder %s361, %s375
      %p377 = scmp.eq.s32.totalorder %s47, 0
      %p378 = por %p376, %p377
      %s380 = sadd.s32 %s379, 1
      %p383 = scmp.eq.s32.totalorder %s41, 1
      %p384 = scmp.ne.s32.totalorder %s379, %s381
      %p385 = scmp.eq.s32.totalorder %s41, 0
      %p386 = por %p384, %p385
      %p387 = scmp.ne.s32.totalorder %s379, %s381
      %p388 = scmp.eq.s32.totalorder %s46, 1
      %p389 = por %p387, %p388
      %p390 = scmp.ne.s32.totalorder %s381, %s382
      %p391 = scmp.eq.s32.totalorder %s46, 0
      %p392 = por %p390, %p391
      %p393 = scmp.ne.s32.totalorder %s381, %s382
      %p394 = scmp.eq.s32.totalorder %s47, 1
      %p395 = por %p393, %p394
      %p397 = scmp.ne.s32.totalorder %s382, %s396
      %p398 = scmp.eq.s32.totalorder %s47, 0
      %p399 = por %p397, %p398
      %s401 = sadd.s32 %s400, 1
      %p404 = scmp.eq.s32.totalorder %s41, 1
      %p405 = scmp.ne.s32.totalorder %s400, %s402
      %p406 = scmp.eq.s32.totalorder %s41, 0
      %p407 = por %p405, %p406
      %p408 = scmp.ne.s32.totalorder %s400, %s402
      %p409 = scmp.eq.s32.totalorder %s46, 1
      %p410 = por %p408, %p409
      %p411 = scmp.ne.s32.totalorder %s402, %s403
      %p412 = scmp.eq.s32.totalorder %s46, 0
      %p413 = por %p411, %p412
      %p414 = scmp.ne.s32.totalorder %s402, %s403
      %p415 = scmp.eq.s32.totalorder %s47, 1
      %p416 = por %p414, %p415
      %p418 = scmp.ne.s32.totalorder %s403, %s417
      %p419 = scmp.eq.s32.totalorder %s47, 0
      %p420 = por %p418, %p419
      %s422 = sadd.s32 %s421, 1
      %p425 = scmp.eq.s32.totalorder %s41, 1
      %p426 = scmp.ne.s32.totalorder %s421, %s423
      %p427 = scmp.eq.s32.totalorder %s41, 0
      %p428 = por %p426, %p427
      %p429 = scmp.ne.s32.totalorder %s421, %s423
      %p430 = scmp.eq.s32.totalorder %s46, 1
      %p431 = por %p429, %p430
      %p432 = scmp.ne.s32.totalorder %s423, %s424
      %p433 = scmp.eq.s32.totalorder %s46, 0
      %p434 = por %p432, %p433
      %p435 = scmp.ne.s32.totalorder %s423, %s424
      %p436 = scmp.eq.s32.totalorder %s47, 1
      %p437 = por %p435, %p436
      %p439 = scmp.ne.s32.totalorder %s424, %s438
      %p440 = scmp.eq.s32.totalorder %s47, 0
      %p441 = por %p439, %p440
      %s443 = sadd.s32 %s442, 1
      %p446 = scmp.eq.s32.totalorder %s41, 1
      %p447 = scmp.ne.s32.totalorder %s442, %s444
      %p448 = scmp.eq.s32.totalorder %s41, 0
      %p449 = por %p447, %p448
      %p450 = scmp.ne.s32.totalorder %s442, %s444
      %p451 = scmp.eq.s32.totalorder %s46, 1
      %p452 = por %p450, %p451
      %p453 = scmp.ne.s32.totalorder %s444, %s445
      %p454 = scmp.eq.s32.totalorder %s46, 0
      %p455 = por %p453, %p454
      %p456 = scmp.ne.s32.totalorder %s444, %s445
      %p457 = scmp.eq.s32.totalorder %s47, 1
      %p458 = por %p456, %p457
      %p460 = scmp.ne.s32.totalorder %s445, %s459
      %p461 = scmp.eq.s32.totalorder %s47, 0
      %p462 = por %p460, %p461
      %s464 = sadd.s32 %s463, 1
      %p467 = scmp.eq.s32.totalorder %s41, 1
      %p468 = scmp.ne.s32.totalorder %s463, %s465
      %p469 = scmp.eq.s32.totalorder %s41, 0
      %p470 = por %p468, %p469
      %p471 = scmp.ne.s32.totalorder %s463, %s465
      %p472 = scmp.eq.s32.totalorder %s46, 1
      %p473 = por %p471, %p472
      %p474 = scmp.ne.s32.totalorder %s465, %s466
      %p475 = scmp.eq.s32.totalorder %s46, 0
      %p476 = por %p474, %p475
      %p477 = scmp.ne.s32.totalorder %s465, %s466
      %p478 = scmp.eq.s32.totalorder %s47, 1
      %p479 = por %p477, %p478
      %p481 = scmp.ne.s32.totalorder %s466, %s480
      %p482 = scmp.eq.s32.totalorder %s47, 0
      %p483 = por %p481, %p482
      %s485 = sadd.s32 %s484, 1
      %p488 = scmp.eq.s32.totalorder %s41, 1
      %p489 = scmp.ne.s32.totalorder %s484, %s486
      %p490 = scmp.eq.s32.totalorder %s41, 0
      %p491 = por %p489, %p490
      %p492 = scmp.ne.s32.totalorder %s484, %s486
      %p493 = scmp.eq.s32.totalorder %s46, 1
      %p494 = por %p492, %p493
      %p495 = scmp.ne.s32.totalorder %s486, %s487
      %p496 = scmp.eq.s32.totalorder %s46, 0
      %p497 = por %p495, %p496
      %p498 = scmp.ne.s32.totalorder %s486, %s487
      %p499 = scmp.eq.s32.totalorder %s47, 1
      %p500 = por %p498, %p499
      %p502 = scmp.ne.s32.totalorder %s487, %s501
      %p503 = scmp.eq.s32.totalorder %s47, 0
      %p504 = por %p502, %p503
      %s506 = sadd.s32 %s505, 1
      %p509 = scmp.eq.s32.totalorder %s41, 1
      %p510 = scmp.ne.s32.totalorder %s505, %s507
      %p511 = scmp.eq.s32.totalorder %s41, 0
      %p512 = por %p510, %p511
      %p513 = scmp.ne.s32.totalorder %s505, %s507
      %p514 = scmp.eq.s32.totalorder %s46, 1
      %p515 = por %p513, %p514
      %p516 = scmp.ne.s32.totalorder %s507, %s508
      %p517 = scmp.eq.s32.totalorder %s46, 0
      %p518 = por %p516, %p517
      %p519 = scmp.ne.s32.totalorder %s507, %s508
      %p520 = scmp.eq.s32.totalorder %s47, 1
      %p521 = por %p519, %p520
      %p523 = scmp.ne.s32.totalorder %s508, %s522
      %p524 = scmp.eq.s32.totalorder %s47, 0
      %p525 = por %p523, %p524
      %s527 = sadd.s32 %s526, 1
      %p530 = scmp.eq.s32.totalorder %s41, 1
      %p531 = scmp.ne.s32.totalorder %s526, %s528
      %p532 = scmp.eq.s32.totalorder %s41, 0
      %p533 = por %p531, %p532
      %p534 = scmp.ne.s32.totalorder %s526, %s528
      %p535 = scmp.eq.s32.totalorder %s46, 1
      %p536 = por %p534, %p535
      %p537 = scmp.ne.s32.totalorder %s528, %s529
      %p538 = scmp.eq.s32.totalorder %s46, 0
      %p539 = por %p537, %p538
      %p540 = scmp.ne.s32.totalorder %s528, %s529
      %p541 = scmp.eq.s32.totalorder %s47, 1
      %p542 = por %p540, %p541
      %p544 = scmp.ne.s32.totalorder %s529, %s543
      %p545 = scmp.eq.s32.totalorder %s47, 0
      %p546 = por %p544, %p545
      %s548 = sadd.s32 %s547, 1
      %p551 = scmp.eq.s32.totalorder %s41, 1
      %p552 = scmp.ne.s32.totalorder %s547, %s549
      %p553 = scmp.eq.s32.totalorder %s41, 0
      %p554 = por %p552, %p553
      %p555 = scmp.ne.s32.totalorder %s547, %s549
      %p556 = scmp.eq.s32.totalorder %s46, 1
      %p557 = por %p555, %p556
      %p558 = scmp.ne.s32.totalorder %s549, %s550
      %p559 = scmp.eq.s32.totalorder %s46, 0
      %p560 = por %p558, %p559
      %p561 = scmp.ne.s32.totalorder %s549, %s550
      %p562 = scmp.eq.s32.totalorder %s47, 1
      %p563 = por %p561, %p562
      %p565 = scmp.ne.s32.totalorder %s550, %s564
      %p566 = scmp.eq.s32.totalorder %s47, 0
      %p567 = por %p565, %p566
      %s568 = ssub.s32 %s41, %s48
      %p569 = scmp.eq.s32.totalorder %s568, 0
      %s571 = sadd.s32 %s570, 1
      %s572 = scalar_select %p569, %s570, %s571
      %p575 = pneg %p569
      %p576 = scmp.eq.s32.totalorder %s41, 1
      %p577 = por %p575, %p576
      %p578 = scmp.ne.s32.totalorder %s570, %s573
      %p579 = scmp.eq.s32.totalorder %s41, 0
      %p580 = por %p578, %p579
      %p581 = scmp.ne.s32.totalorder %s570, %s573
      %p582 = scmp.eq.s32.totalorder %s46, 1
      %p583 = por %p581, %p582
      %p584 = scmp.ne.s32.totalorder %s573, %s574
      %p585 = scmp.eq.s32.totalorder %s46, 0
      %p586 = por %p584, %p585
      %p587 = scmp.ne.s32.totalorder %s573, %s574
      %p588 = scmp.eq.s32.totalorder %s47, 1
      %p589 = por %p587, %p588
      %p591 = scmp.ne.s32.totalorder %s574, %s590
      %p592 = scmp.eq.s32.totalorder %s47, 0
      %p593 = por %p591, %p592
      %p594 = scmp.le.s32.totalorder 1, %s41
      %p595 = scmp.lt.s32.totalorder %s41, 3
      %p596 = pnand %p594, %p595
      %p597 = pneg %p596
      // Predicated region
      $region9: #{tpu_custom_call.1} parent=5 // pred_check
        _
      $region10: #{tpu_custom_call.1} parent=5 // pred_check_branch
        %599 = sbr.rel (%p596) target = $region12
      $region11: #{tpu_custom_call.1} parent=5 // pred_region
        %s600 = ssub.s32 %s41, 1
        // Predicated region
        $region13: #{tpu_custom_call.1} parent=11 // pred_check
          %p601 = pneg %p140
        $region14: #{tpu_custom_call.1} parent=11 // pred_check_branch
          %603 = sbr.rel (%p601) target = $region16
        $region15: #{tpu_custom_call.1} parent=11 // pred_region
          %s605 = ssub.s32 256, 256
          %606 = vsyncadd [#allocation8], %s605
          %s607 = sshll.u32 [#allocation9], 4
          %s608 = int_to_ptr.vmem [resolvable:$true] %s607
          %613 = dma.hbm_to_vmem [thread:$0]  %s3, 256, %s608, [#allocation8], 128, 128, 8
        $region16: #{tpu_custom_call.1} parent=11 // pred_fallthru
          _
        // Predicated region
        $region17: #{tpu_custom_call.1} parent=11 // pred_check
          %p614 = pneg %p161
        $region18: #{tpu_custom_call.1} parent=11 // pred_check_branch
          %616 = sbr.rel (%p614) target = $region20
        $region19: #{tpu_custom_call.1} parent=11 // pred_region
          _
        $region20: #{tpu_custom_call.1} parent=11 // pred_fallthru
          _
        // Predicated region
        $region21: #{tpu_custom_call.1} parent=11 // pred_check
          %p617 = pneg %p182
        $region22: #{tpu_custom_call.1} parent=11 // pred_check_branch
          %619 = sbr.rel (%p617) target = $region24
        $region23: #{tpu_custom_call.1} parent=11 // pred_region
          _
        $region24: #{tpu_custom_call.1} parent=11 // pred_fallthru
          _
        // Predicated region
        $region25: #{tpu_custom_call.1} parent=11 // pred_check
          %p620 = pneg %p203
        $region26: #{tpu_custom_call.1} parent=11 // pred_check_branch
          %622 = sbr.rel (%p620) target = $region28
        $region27: #{tpu_custom_call.1} parent=11 // pred_region
          %s624 = ssub.s32 512, 512
          %625 = vsyncadd [#allocation11], %s624
          %s626 = sshll.u32 [#allocation10], 4
          %s627 = int_to_ptr.vmem [resolvable:$true] %s626
          %632 = dma.hbm_to_vmem [thread:$0]  %s6, 512, %s627, [#allocation11], 128, 128, 8
        $region28: #{tpu_custom_call.1} parent=11 // pred_fallthru
          _
        // Predicated region
        $region29: #{tpu_custom_call.1} parent=11 // pred_check
          %p633 = pneg %p224
        $region30: #{tpu_custom_call.1} parent=11 // pred_check_branch
          %635 = sbr.rel (%p633) target = $region32
        $region31: #{tpu_custom_call.1} parent=11 // pred_region
          %s637 = ssub.s32 16, 16
          %638 = vsyncadd [#allocation11], %s637
          %s640 = sshll.u32 [#allocation12], 4
          %s641 = int_to_ptr.vmem [resolvable:$true] %s640
          %643 = dma.hbm_to_vmem [thread:$0]  %s7, 16, %s641, [#allocation11]
        $region32: #{tpu_custom_call.1} parent=11 // pred_fallthru
          _
        // Predicated region
        $region33: #{tpu_custom_call.1} parent=11 // pred_check
          %p644 = pneg %p245
        $region34: #{tpu_custom_call.1} parent=11 // pred_check_branch
          %646 = sbr.rel (%p644) target = $region36
        $region35: #{tpu_custom_call.1} parent=11 // pred_region
          _
        $region36: #{tpu_custom_call.1} parent=11 // pred_fallthru
          _
        // Predicated region
        $region37: #{tpu_custom_call.1} parent=11 // pred_check
          %p647 = pneg %p266
        $region38: #{tpu_custom_call.1} parent=11 // pred_check_branch
          %649 = sbr.rel (%p647) target = $region40
        $region39: #{tpu_custom_call.1} parent=11 // pred_region
          %s651 = ssub.s32 16, 16
          %652 = vsyncadd [#allocation14], %s651
          %s654 = sshll.u32 [#allocation13], 4
          %s655 = int_to_ptr.vmem [resolvable:$true] %s654
          %657 = dma.hbm_to_vmem [thread:$0]  %s9, 16, %s655, [#allocation14]
        $region40: #{tpu_custom_call.1} parent=11 // pred_fallthru
          _
        // Predicated region
        $region41: #{tpu_custom_call.1} parent=11 // pred_check
          %p658 = pneg %p287
        $region42: #{tpu_custom_call.1} parent=11 // pred_check_branch
          %660 = sbr.rel (%p658) target = $region44
        $region43: #{tpu_custom_call.1} parent=11 // pred_region
          _
        $region44: #{tpu_custom_call.1} parent=11 // pred_fallthru
          _
        // Predicated region
        $region45: #{tpu_custom_call.1} parent=11 // pred_check
          %p661 = pneg %p308
        $region46: #{tpu_custom_call.1} parent=11 // pred_check_branch
          %663 = sbr.rel (%p661) target = $region48
        $region47: #{tpu_custom_call.1} parent=11 // pred_region
          %s665 = ssub.s32 16, 16
          %666 = vsyncadd [#allocation14], %s665
          %s668 = sshll.u32 [#allocation15], 4
          %s669 = int_to_ptr.vmem [resolvable:$true] %s668
          %671 = dma.hbm_to_vmem [thread:$0]  %s11, 16, %s669, [#allocation14]
        $region48: #{tpu_custom_call.1} parent=11 // pred_fallthru
          _
        // Predicated region
        $region49: #{tpu_custom_call.1} parent=11 // pred_check
          %p672 = pneg %p329
        $region50: #{tpu_custom_call.1} parent=11 // pred_check_branch
          %674 = sbr.rel (%p672) target = $region52
        $region51: #{tpu_custom_call.1} parent=11 // pred_region
          _
        $region52: #{tpu_custom_call.1} parent=11 // pred_fallthru
          _
        // Predicated region
        $region53: #{tpu_custom_call.1} parent=11 // pred_check
          %p675 = pneg %p350
        $region54: #{tpu_custom_call.1} parent=11 // pred_check_branch
          %677 = sbr.rel (%p675) target = $region56
        $region55: #{tpu_custom_call.1} parent=11 // pred_region
          %s679 = ssub.s32 32, 32
          %680 = vsyncadd [#allocation17], %s679
          %s681 = sshll.u32 [#allocation16], 4
          %s682 = int_to_ptr.vmem [resolvable:$true] %s681
          %687 = dma.hbm_to_vmem [thread:$0]  %s13, 32, %s682, [#allocation17], 16, 16, 1
        $region56: #{tpu_custom_call.1} parent=11 // pred_fallthru
          _
        // Predicated region
        $region57: #{tpu_custom_call.1} parent=11 // pred_check
          %p688 = pneg %p371
        $region58: #{tpu_custom_call.1} parent=11 // pred_check_branch
          %690 = sbr.rel (%p688) target = $region60
        $region59: #{tpu_custom_call.1} parent=11 // pred_region
          _
        $region60: #{tpu_custom_call.1} parent=11 // pred_fallthru
          _
        // Predicated region
        $region61: #{tpu_custom_call.1} parent=11 // pred_check
          %p691 = pneg %p392
        $region62: #{tpu_custom_call.1} parent=11 // pred_check_branch
          %693 = sbr.rel (%p691) target = $region64
        $region63: #{tpu_custom_call.1} parent=11 // pred_region
          %s695 = ssub.s32 32, 32
          %696 = vsyncadd [#allocation17], %s695
          %s697 = sshll.u32 [#allocation18], 4
          %s698 = int_to_ptr.vmem [resolvable:$true] %s697
          %703 = dma.hbm_to_vmem [thread:$0]  %s15, 32, %s698, [#allocation17], 16, 16, 1
        $region64: #{tpu_custom_call.1} parent=11 // pred_fallthru
          _
        // Predicated region
        $region65: #{tpu_custom_call.1} parent=11 // pred_check
          %p704 = pneg %p413
        $region66: #{tpu_custom_call.1} parent=11 // pred_check_branch
          %706 = sbr.rel (%p704) target = $region68
        $region67: #{tpu_custom_call.1} parent=11 // pred_region
          %s708 = ssub.s32 32, 32
          %709 = vsyncadd [#allocation20], %s708
          %s710 = sshll.u32 [#allocation19], 4
          %s711 = int_to_ptr.vmem [resolvable:$true] %s710
          %716 = dma.hbm_to_vmem [thread:$0]  %s16, 32, %s711, [#allocation20], 16, 16, 1
        $region68: #{tpu_custom_call.1} parent=11 // pred_fallthru
          _
        // Predicated region
        $region69: #{tpu_custom_call.1} parent=11 // pred_check
          %p717 = pneg %p434
        $region70: #{tpu_custom_call.1} parent=11 // pred_check_branch
          %719 = sbr.rel (%p717) target = $region72
        $region71: #{tpu_custom_call.1} parent=11 // pred_region
          %s721 = ssub.s32 32, 32
          %722 = vsyncadd [#allocation20], %s721
          %s723 = sshll.u32 [#allocation21], 4
          %s724 = int_to_ptr.vmem [resolvable:$true] %s723
          %729 = dma.hbm_to_vmem [thread:$0]  %s17, 32, %s724, [#allocation20], 16, 16, 1
        $region72: #{tpu_custom_call.1} parent=11 // pred_fallthru
          _
        // Predicated region
        $region73: #{tpu_custom_call.1} parent=11 // pred_check
          %p730 = pneg %p455
        $region74: #{tpu_custom_call.1} parent=11 // pred_check_branch
          %732 = sbr.rel (%p730) target = $region76
        $region75: #{tpu_custom_call.1} parent=11 // pred_region
          _
        $region76: #{tpu_custom_call.1} parent=11 // pred_fallthru
          _
        // Predicated region
        $region77: #{tpu_custom_call.1} parent=11 // pred_check
          %p733 = pneg %p476
        $region78: #{tpu_custom_call.1} parent=11 // pred_check_branch
          %735 = sbr.rel (%p733) target = $region80
        $region79: #{tpu_custom_call.1} parent=11 // pred_region
          %s737 = ssub.s32 32, 32
          %738 = vsyncadd [#allocation23], %s737
          %s739 = sshll.u32 [#allocation22], 4
          %s740 = int_to_ptr.vmem [resolvable:$true] %s739
          %745 = dma.hbm_to_vmem [thread:$0]  %s19, 32, %s740, [#allocation23], 16, 16, 1
        $region80: #{tpu_custom_call.1} parent=11 // pred_fallthru
          _
        // Predicated region
        $region81: #{tpu_custom_call.1} parent=11 // pred_check
          %p746 = pneg %p497
        $region82: #{tpu_custom_call.1} parent=11 // pred_check_branch
          %748 = sbr.rel (%p746) target = $region84
        $region83: #{tpu_custom_call.1} parent=11 // pred_region
          _
        $region84: #{tpu_custom_call.1} parent=11 // pred_fallthru
          _
        // Predicated region
        $region85: #{tpu_custom_call.1} parent=11 // pred_check
          %p749 = pneg %p518
        $region86: #{tpu_custom_call.1} parent=11 // pred_check_branch
          %751 = sbr.rel (%p749) target = $region88
        $region87: #{tpu_custom_call.1} parent=11 // pred_region
          _
        $region88: #{tpu_custom_call.1} parent=11 // pred_fallthru
          _
        // Predicated region
        $region89: #{tpu_custom_call.1} parent=11 // pred_check
          %p752 = pneg %p539
        $region90: #{tpu_custom_call.1} parent=11 // pred_check_branch
          %754 = sbr.rel (%p752) target = $region92
        $region91: #{tpu_custom_call.1} parent=11 // pred_region
          _
        $region92: #{tpu_custom_call.1} parent=11 // pred_fallthru
          _
        // Predicated region
        $region93: #{tpu_custom_call.1} parent=11 // pred_check
          %p755 = pneg %p560
        $region94: #{tpu_custom_call.1} parent=11 // pred_check_branch
          %757 = sbr.rel (%p755) target = $region96
        $region95: #{tpu_custom_call.1} parent=11 // pred_region
          _
        $region96: #{tpu_custom_call.1} parent=11 // pred_fallthru
          _
      $region12: #{tpu_custom_call.1} parent=5 // pred_fallthru
        _
      %p758 = scmp.lt.s32.totalorder %s41, 2
      // Predicated region
      $region97: #{tpu_custom_call.1} parent=5 // pred_check
        %p759 = pneg %p758
      $region98: #{tpu_custom_call.1} parent=5 // pred_check_branch
        %761 = sbr.rel (%p759) target = $region100
      $region99: #{tpu_custom_call.1} parent=5 // pred_region
        // Predicated region
        $region101: #{tpu_custom_call.1} parent=99 // pred_check
          %p762 = pneg %p61
        $region102: #{tpu_custom_call.1} parent=99 // pred_check_branch
          %764 = sbr.rel (%p762) target = $region104
        $region103: #{tpu_custom_call.1} parent=99 // pred_region
          %s765 = sand.u32 %s51, 1
          %s766 = scalar_lea.sflag [#allocation6], %s765
          %s767 = sand.u32 %s51, 1
          %s768 = smul.addr %s767, 8
          %s769 = scalar_lea.vmem [#allocation5], %s768
          %s771 = ssub.s32 128, 128
          %772 = vsyncadd %s766, %s771
          %s773 = smul.addr %s41, 128
          %s774 = scalar_lea.hbm %s0, %s773
          %s776 = sshll.u32 %s769, 4
          %s777 = int_to_ptr.vmem [resolvable:$true] %s776
          %779 = dma.hbm_to_vmem [thread:$0]  %s774, 128, %s777, %s766
        $region104: #{tpu_custom_call.1} parent=99 // pred_fallthru
          _
        // Predicated region
        $region105: #{tpu_custom_call.1} parent=99 // pred_check
          %p780 = pneg %p87
        $region106: #{tpu_custom_call.1} parent=99 // pred_check_branch
          %782 = sbr.rel (%p780) target = $region108
        $region107: #{tpu_custom_call.1} parent=99 // pred_region
          %p783 = scmp.lt.s32.totalorder %s41, 1
          %s784 = scalar_select %p783, %s41, 1
          %s785 = scalar_lea.vmem %s1, %s784
        $region108: #{tpu_custom_call.1} parent=99 // pred_fallthru
          _
        // Predicated region
        $region109: #{tpu_custom_call.1} parent=99 // pred_check
          %p786 = pneg %p113
        $region110: #{tpu_custom_call.1} parent=99 // pred_check_branch
          %788 = sbr.rel (%p786) target = $region112
        $region111: #{tpu_custom_call.1} parent=99 // pred_region
          %s789 = sand.u32 %s41, 1
          %s790 = scalar_lea.sflag [#allocation8], %s789
          %s791 = sand.u32 %s103, 1
          %s792 = scalar_lea.vmem [#allocation7], %s791
          %s794 = ssub.s32 16, 16
          %795 = vsyncadd %s790, %s794
          %s796 = smul.addr %s41, 16
          %s797 = scalar_lea.hbm %s2, %s796
          %s799 = sshll.u32 %s792, 4
          %s800 = int_to_ptr.vmem [resolvable:$true] %s799
          %802 = dma.hbm_to_vmem [thread:$0]  %s797, 16, %s800, %s790
        $region112: #{tpu_custom_call.1} parent=99 // pred_fallthru
          _
      $region100: #{tpu_custom_call.1} parent=5 // pred_fallthru
        _
      %p803 = scmp.le.s32.totalorder 1, %s41
      %p804 = scmp.lt.s32.totalorder %s41, 3
      %p805 = pnand %p803, %p804
      %p806 = pneg %p805
      // Predicated region
      $region113: #{tpu_custom_call.1} parent=5 // pred_check
        _
      $region114: #{tpu_custom_call.1} parent=5 // pred_check_branch
        %808 = sbr.rel (%p805) target = $region116
      $region115: #{tpu_custom_call.1} parent=5 // pred_region
        %s809 = ssub.s32 %s41, 1
        %s810 = sand.u32 %s54, 1
        %s811 = scalar_lea.sflag [#allocation6], %s810
        %s812 = sand.u32 %s54, 1
        %s813 = smul.addr %s812, 8
        %s814 = scalar_lea.vmem [#allocation5], %s813
        // Predicated region
        $region117: #{tpu_custom_call.1} parent=115 // pred_check
          %p815 = pneg %p67
        $region118: #{tpu_custom_call.1} parent=115 // pred_check_branch
          %817 = sbr.rel (%p815) target = $region120
        $region119: #{tpu_custom_call.1} parent=115 // pred_region
          %818 = dma.done %s811, 128
        $region120: #{tpu_custom_call.1} parent=115 // pred_fallthru
          _
        %s819 = sand.u32 %s46, 1
        %s820 = scalar_lea.sflag [#allocation8], %s819
        %s821 = sand.u32 %s106, 1
        %s822 = scalar_lea.vmem [#allocation7], %s821
        // Predicated region
        $region121: #{tpu_custom_call.1} parent=115 // pred_check
          %p823 = pneg %p119
        $region122: #{tpu_custom_call.1} parent=115 // pred_check_branch
          %825 = sbr.rel (%p823) target = $region124
        $region123: #{tpu_custom_call.1} parent=115 // pred_region
          %826 = dma.done %s820, 16
        $region124: #{tpu_custom_call.1} parent=115 // pred_fallthru
          _
        // Predicated region
        $region125: #{tpu_custom_call.1} parent=115 // pred_check
          %p827 = pneg %p140
        $region126: #{tpu_custom_call.1} parent=115 // pred_check_branch
          %829 = sbr.rel (%p827) target = $region128
        $region127: #{tpu_custom_call.1} parent=115 // pred_region
          %830 = dma.done [#allocation8], 256
        $region128: #{tpu_custom_call.1} parent=115 // pred_fallthru
          _
        // Predicated region
        $region129: #{tpu_custom_call.1} parent=115 // pred_check
          %p831 = pneg %p203
        $region130: #{tpu_custom_call.1} parent=115 // pred_check_branch
          %833 = sbr.rel (%p831) target = $region132
        $region131: #{tpu_custom_call.1} parent=115 // pred_region
          %834 = dma.done [#allocation11], 512
        $region132: #{tpu_custom_call.1} parent=115 // pred_fallthru
          _
        // Predicated region
        $region133: #{tpu_custom_call.1} parent=115 // pred_check
          %p835 = pneg %p224
        $region134: #{tpu_custom_call.1} parent=115 // pred_check_branch
          %837 = sbr.rel (%p835) target = $region136
        $region135: #{tpu_custom_call.1} parent=115 // pred_region
          %838 = dma.done [#allocation11], 16
        $region136: #{tpu_custom_call.1} parent=115 // pred_fallthru
          _
        // Predicated region
        $region137: #{tpu_custom_call.1} parent=115 // pred_check
          %p839 = pneg %p266
        $region138: #{tpu_custom_call.1} parent=115 // pred_check_branch
          %841 = sbr.rel (%p839) target = $region140
        $region139: #{tpu_custom_call.1} parent=115 // pred_region
          %842 = dma.done [#allocation14], 16
        $region140: #{tpu_custom_call.1} parent=115 // pred_fallthru
          _
        // Predicated region
        $region141: #{tpu_custom_call.1} parent=115 // pred_check
          %p843 = pneg %p308
        $region142: #{tpu_custom_call.1} parent=115 // pred_check_branch
          %845 = sbr.rel (%p843) target = $region144
        $region143: #{tpu_custom_call.1} parent=115 // pred_region
          %846 = dma.done [#allocation14], 16
        $region144: #{tpu_custom_call.1} parent=115 // pred_fallthru
          _
        // Predicated region
        $region145: #{tpu_custom_call.1} parent=115 // pred_check
          %p847 = pneg %p350
        $region146: #{tpu_custom_call.1} parent=115 // pred_check_branch
          %849 = sbr.rel (%p847) target = $region148
        $region147: #{tpu_custom_call.1} parent=115 // pred_region
          %850 = dma.done [#allocation17], 32
        $region148: #{tpu_custom_call.1} parent=115 // pred_fallthru
          _
        // Predicated region
        $region149: #{tpu_custom_call.1} parent=115 // pred_check
          %p851 = pneg %p392
        $region150: #{tpu_custom_call.1} parent=115 // pred_check_branch
          %853 = sbr.rel (%p851) target = $region152
        $region151: #{tpu_custom_call.1} parent=115 // pred_region
          %854 = dma.done [#allocation17], 32
        $region152: #{tpu_custom_call.1} parent=115 // pred_fallthru
          _
        // Predicated region
        $region153: #{tpu_custom_call.1} parent=115 // pred_check
          %p855 = pneg %p413
        $region154: #{tpu_custom_call.1} parent=115 // pred_check_branch
          %857 = sbr.rel (%p855) target = $region156
        $region155: #{tpu_custom_call.1} parent=115 // pred_region
          %858 = dma.done [#allocation20], 32
        $region156: #{tpu_custom_call.1} parent=115 // pred_fallthru
          _
        // Predicated region
        $region157: #{tpu_custom_call.1} parent=115 // pred_check
          %p859 = pneg %p434
        $region158: #{tpu_custom_call.1} parent=115 // pred_check_branch
          %861 = sbr.rel (%p859) target = $region160
        $region159: #{tpu_custom_call.1} parent=115 // pred_region
          %862 = dma.done [#allocation20], 32
        $region160: #{tpu_custom_call.1} parent=115 // pred_fallthru
          _
        // Predicated region
        $region161: #{tpu_custom_call.1} parent=115 // pred_check
          %p863 = pneg %p476
        $region162: #{tpu_custom_call.1} parent=115 // pred_check_branch
          %865 = sbr.rel (%p863) target = $region164
        $region163: #{tpu_custom_call.1} parent=115 // pred_region
          %866 = dma.done [#allocation23], 32
        $region164: #{tpu_custom_call.1} parent=115 // pred_fallthru
          _
        %s867 = sand.u32 %s54, 1
        %s868 = scalar_lea.sflag [#allocation6], %s867
        %s869 = sand.u32 %s54, 1
        %s870 = smul.addr %s869, 8
        %s871 = scalar_lea.vmem [#allocation5], %s870
        %p872 = pneg %p67
        %p873 = pneg %p64
        %p874 = scmp.lt.s32.totalorder %s46, 1
        %s875 = scalar_select %p874, %s46, 1
        %s876 = scalar_lea.vmem %s1, %s875
        %p877 = pneg %p93
        %p878 = pneg %p90
        %s879 = sand.u32 %s46, 1
        %s880 = scalar_lea.sflag [#allocation8], %s879
        %s881 = sand.u32 %s106, 1
        %s882 = scalar_lea.vmem [#allocation7], %s881
        %p883 = pneg %p119
        %p884 = pneg %p116
        %p885 = pneg %p140
        %p886 = pneg %p137
        %p887 = pneg %p161
        %p888 = pneg %p158
        %p889 = pneg %p182
        %p890 = pneg %p179
        %p891 = pneg %p203
        %p892 = pneg %p200
        %p893 = pneg %p224
        %p894 = pneg %p221
        %p895 = pneg %p245
        %p896 = pneg %p242
        %p897 = pneg %p266
        %p898 = pneg %p263
        %p899 = pneg %p287
        %p900 = pneg %p284
        %p901 = pneg %p308
        %p902 = pneg %p305
        %p903 = pneg %p329
        %p904 = pneg %p326
        %p905 = pneg %p350
        %p906 = pneg %p347
        %p907 = pneg %p371
        %p908 = pneg %p368
        %p909 = pneg %p392
        %p910 = pneg %p389
        %p911 = pneg %p413
        %p912 = pneg %p410
        %p913 = pneg %p434
        %p914 = pneg %p431
        %p915 = pneg %p455
        %p916 = pneg %p452
        %p917 = pneg %p476
        %p918 = pneg %p473
        %p919 = pneg %p497
        %p920 = pneg %p494
        %p921 = pneg %p518
        %p922 = pneg %p515
        %p923 = pneg %p539
        %p924 = pneg %p536
        %p925 = pneg %p560
        %p926 = pneg %p557
        %p927 = pneg %p586
        %p928 = pneg %p583
        %p929 = scmp.lt.s32.totalorder %s46, 1
        %s930 = scalar_select %p929, %s46, 1
        %s931 = smul.addr %s930, 8
        %s932 = scalar_lea.vmem %s24, %s931
        %p933 = scmp.lt.s32.totalorder %s46, 1
        %s934 = scalar_select %p933, %s46, 1
        %s935 = scalar_lea.vmem %s1, %s934
        %p936 = scmp.lt.s32.totalorder %s46, 1
        %s937 = scalar_select %p936, %s46, 1
        %s938 = smul.addr %s937, 8
        %s939 = scalar_lea.vmem %s24, %s938
        %v940 = vld [vmem:[%s935] sm:$0x1]
        %v941 = vld [vmem:[%s4] sm:$0xff]
        %v942 = vld [vmem:[%s4 + $0x8] sm:$0xff]
        %v943 = vld [vmem:[%s4 + $0x10] sm:$0xff]
        %v944 = vld [vmem:[%s4 + $0x18] sm:$0xff]
        %v945 = vld [vmem:[%s5] sm:$0x1]
        %vm946 = vcmask 261120
        %v948 = vsel %vm946, %v940, 0
        %950 = vmatprep.subr.mxu0 0.0
        %951 = vmatpush1.msra.mxu0 %v941
        %952 = vmatprep.subr.mxu0 0.0
        %953 = vmatpush1.msra.mxu0 %v942
        %954 = vmatprep.subr.mxu0 0.0
        %955 = vmatpush1.msra.mxu0 %v943
        %956 = vmatprep.subr.mxu0 0.0
        %957 = vmatpush1.msra.mxu0 %v944
        %958 = vmatprep.subr.mxu0 0.0
        %959 = vmatpush1.msra.mxu0 0.0
        %960 = vmatprep.subr.mxu0 0.0
        %961 = vmatpush1.msra.mxu0 0.0
        %962 = vmatprep.subr.mxu0 0.0
        %963 = vmatpush1.msra.mxu0 0.0
        %964 = vmatprep.subr.mxu0 0.0
        %965 = vmatpush1.msra.mxu0 0.0
        %966 = vmatprep.subr.mxu0 0.0
        %967 = vmatpush1.msra.mxu0 0.0
        %968 = vmatprep.subr.mxu0 0.0
        %969 = vmatpush1.msra.mxu0 0.0
        %970 = vmatprep.subr.mxu0 0.0
        %971 = vmatpush1.msra.mxu0 0.0
        %972 = vmatprep.subr.mxu0 0.0
        %973 = vmatpush1.msra.mxu0 0.0
        %974 = vmatprep.subr.mxu0 0.0
        %975 = vmatpush1.msra.mxu0 0.0
        %976 = vmatprep.subr.mxu0 0.0
        %977 = vmatpush1.msra.mxu0 0.0
        %978 = vmatprep.subr.mxu0 0.0
        %979 = vmatpush1.msra.mxu0 0.0
        %980 = vmatprep.subr.mxu0 0.0
        %981 = vmatpush1.msra.mxu0 0.0
        %982 = vmatprep.subr.mxu0 0.0
        %983 = vmatpush1.msra.mxu0 0.0
        %984 = vmatprep.subr.mxu0 0.0
        %985 = vmatpush1.msra.mxu0 0.0
        %986 = vmatprep.subr.mxu0 0.0
        %987 = vmatpush1.msra.mxu0 0.0
        %988 = vmatprep.subr.mxu0 0.0
        %989 = vmatpush1.msra.mxu0 0.0
        %990 = vmatprep.subr.mxu0 0.0
        %991 = vmatpush1.msra.mxu0 0.0
        %992 = vmatprep.subr.mxu0 0.0
        %993 = vmatpush1.msra.mxu0 0.0
        %994 = vmatprep.subr.mxu0 0.0
        %995 = vmatpush1.msra.mxu0 0.0
        %996 = vmatprep.subr.mxu0 0.0
        %997 = vmatpush1.msra.mxu0 0.0
        %998 = vmatprep.subr.mxu0 0.0
        %999 = vmatpush1.msra.mxu0 0.0
        %1000 = vmatprep.subr.mxu0 0.0
        %1001 = vmatpush1.msra.mxu0 0.0
        %1002 = vmatprep.subr.mxu0 0.0
        %1003 = vmatpush1.msra.mxu0 0.0
        %1004 = vmatprep.subr.mxu0 0.0
        %1005 = vmatpush1.msra.mxu0 0.0
        %1006 = vmatprep.subr.mxu0 0.0
        %1007 = vmatpush1.msra.mxu0 0.0
        %1008 = vmatprep.subr.mxu0 0.0
        %1009 = vmatpush1.msra.mxu0 0.0
        %1010 = vmatprep.subr.mxu0 0.0
        %1011 = vmatpush1.msra.mxu0 0.0
        %1012 = vmatprep.subr.mxu0 0.0
        %1013 = vmatpush1.msra.mxu0 0.0
        %1014 = vmatprep.mubr.f32.mxu0 0.0
        %1015 = vmatmul.mubr.f32.gmra.mrb[0].mxu0 %v948
        %v1016 = vpop.f32.mrb[0].mxu0
        %v1017 = vadd.f32 %v945, %v1016
        %v1018 = vpop.f32.mrb[0].mxu0
        %1019 = vdwg.mxu0
        %v1020 = vmul.f32 %v1017, 0.5
        %v1021 = vmul.f32 %v1017, 0.044715
        %v1022 = vmul.f32 %v1021, %v1017
        %v1023 = vmul.f32 %v1022, %v1017
        %v1024 = vadd.f32 %v1017, %v1023
        %v1025 = vmul.f32 %v1024, 0.7978846
        %v1026 = vtanh.pop %v1025
        %v1027 = vadd.f32 %v1026, 1.0
        %v1028 = vmul.f32 %v1020, %v1027
        %v1029 = vld [vmem:[#allocation10] sm:$0xff]
        %v1030 = vld [vmem:[#allocation10 + $0x8] sm:$0xff]
        %v1031 = vld [vmem:[#allocation10 + $0x10] sm:$0xff]
        %v1032 = vld [vmem:[#allocation10 + $0x18] sm:$0xff]
        %v1033 = vld [vmem:[#allocation12] sm:$0x1]
        %v1035 = vsel %vm946, %v1028, 0
        %1037 = vmatprep.subr.mxu0 0.0
        %1038 = vmatpush1.msra.mxu0 %v1029
        %1039 = vmatprep.subr.mxu0 0.0
        %1040 = vmatpush1.msra.mxu0 %v1030
        %1041 = vmatprep.subr.mxu0 0.0
        %1042 = vmatpush1.msra.mxu0 %v1031
        %1043 = vmatprep.subr.mxu0 0.0
        %1044 = vmatpush1.msra.mxu0 %v1032
        %1045 = vmatprep.subr.mxu0 0.0
        %1046 = vmatpush1.msra.mxu0 0.0
        %1047 = vmatprep.subr.mxu0 0.0
        %1048 = vmatpush1.msra.mxu0 0.0
        %1049 = vmatprep.subr.mxu0 0.0
        %1050 = vmatpush1.msra.mxu0 0.0
        %1051 = vmatprep.subr.mxu0 0.0
        %1052 = vmatpush1.msra.mxu0 0.0
        %1053 = vmatprep.subr.mxu0 0.0
        %1054 = vmatpush1.msra.mxu0 0.0
        %1055 = vmatprep.subr.mxu0 0.0
        %1056 = vmatpush1.msra.mxu0 0.0
        %1057 = vmatprep.subr.mxu0 0.0
        %1058 = vmatpush1.msra.mxu0 0.0
        %1059 = vmatprep.subr.mxu0 0.0
        %1060 = vmatpush1.msra.mxu0 0.0
        %1061 = vmatprep.subr.mxu0 0.0
        %1062 = vmatpush1.msra.mxu0 0.0
        %1063 = vmatprep.subr.mxu0 0.0
        %1064 = vmatpush1.msra.mxu0 0.0
        %1065 = vmatprep.subr.mxu0 0.0
        %1066 = vmatpush1.msra.mxu0 0.0
        %1067 = vmatprep.subr.mxu0 0.0
        %1068 = vmatpush1.msra.mxu0 0.0
        %1069 = vmatprep.subr.mxu0 0.0
        %1070 = vmatpush1.msra.mxu0 0.0
        %1071 = vmatprep.subr.mxu0 0.0
        %1072 = vmatpush1.msra.mxu0 0.0
        %1073 = vmatprep.subr.mxu0 0.0
        %1074 = vmatpush1.msra.mxu0 0.0
        %1075 = vmatprep.subr.mxu0 0.0
        %1076 = vmatpush1.msra.mxu0 0.0
        %1077 = vmatprep.subr.mxu0 0.0
        %1078 = vmatpush1.msra.mxu0 0.0
        %1079 = vmatprep.subr.mxu0 0.0
        %1080 = vmatpush1.msra.mxu0 0.0
        %1081 = vmatprep.subr.mxu0 0.0
        %1082 = vmatpush1.msra.mxu0 0.0
        %1083 = vmatprep.subr.mxu0 0.0
        %1084 = vmatpush1.msra.mxu0 0.0
        %1085 = vmatprep.subr.mxu0 0.0
        %1086 = vmatpush1.msra.mxu0 0.0
        %1087 = vmatprep.subr.mxu0 0.0
        %1088 = vmatpush1.msra.mxu0 0.0
        %1089 = vmatprep.subr.mxu0 0.0
        %1090 = vmatpush1.msra.mxu0 0.0
        %1091 = vmatprep.subr.mxu0 0.0
        %1092 = vmatpush1.msra.mxu0 0.0
        %1093 = vmatprep.subr.mxu0 0.0
        %1094 = vmatpush1.msra.mxu0 0.0
        %1095 = vmatprep.subr.mxu0 0.0
        %1096 = vmatpush1.msra.mxu0 0.0
        %1097 = vmatprep.subr.mxu0 0.0
        %1098 = vmatpush1.msra.mxu0 0.0
        %1099 = vmatprep.subr.mxu0 0.0
        %1100 = vmatpush1.msra.mxu0 0.0
        %1101 = vmatprep.mubr.f32.mxu0 0.0
        %1102 = vmatmul.mubr.f32.gmra.mrb[0].mxu0 %v1035
        %v1103 = vpop.f32.mrb[0].mxu0
        %v1104 = vadd.f32 %v1033, %v1103
        %v1105 = vpop.f32.mrb[0].mxu0
        %1106 = vdwg.mxu0
        %v1107 = vld [vmem:[%s814] sm:$0xff]
        %v1108 = vld [vmem:[%s8] sm:$0xff]
        %v1109 = vld [vmem:[#allocation13] sm:$0x1]
        %v1111 = vlaneseq
        %v1112 = vshrl.u32 %v1111, 7
        %v1113 = vsub.s32 0, %v1112
        %v1114 = vrot.slane %v1109, %v1113
        %vm1116 = vcmask 64512
        %v1118 = vsel %vm1116, %v1107, 0
        %1120 = vmatprep.subr.mxu0 0.0
        %1121 = vmatpush1.msra.mxu0 %v1108
        %1122 = vmatprep.subr.mxu0 0.0
        %1123 = vmatpush1.msra.mxu0 0.0
        %1124 = vmatprep.subr.mxu0 0.0
        %1125 = vmatpush1.msra.mxu0 0.0
        %1126 = vmatprep.subr.mxu0 0.0
        %1127 = vmatpush1.msra.mxu0 0.0
        %1128 = vmatprep.subr.mxu0 0.0
        %1129 = vmatpush1.msra.mxu0 0.0
        %1130 = vmatprep.subr.mxu0 0.0
        %1131 = vmatpush1.msra.mxu0 0.0
        %1132 = vmatprep.subr.mxu0 0.0
        %1133 = vmatpush1.msra.mxu0 0.0
        %1134 = vmatprep.subr.mxu0 0.0
        %1135 = vmatpush1.msra.mxu0 0.0
        %1136 = vmatprep.subr.mxu0 0.0
        %1137 = vmatpush1.msra.mxu0 0.0
        %1138 = vmatprep.subr.mxu0 0.0
        %1139 = vmatpush1.msra.mxu0 0.0
        %1140 = vmatprep.subr.mxu0 0.0
        %1141 = vmatpush1.msra.mxu0 0.0
        %1142 = vmatprep.subr.mxu0 0.0
        %1143 = vmatpush1.msra.mxu0 0.0
        %1144 = vmatprep.subr.mxu0 0.0
        %1145 = vmatpush1.msra.mxu0 0.0
        %1146 = vmatprep.subr.mxu0 0.0
        %1147 = vmatpush1.msra.mxu0 0.0
        %1148 = vmatprep.subr.mxu0 0.0
        %1149 = vmatpush1.msra.mxu0 0.0
        %1150 = vmatprep.subr.mxu0 0.0
        %1151 = vmatpush1.msra.mxu0 0.0
        %1152 = vmatprep.subr.mxu0 0.0
        %1153 = vmatpush1.msra.mxu0 0.0
        %1154 = vmatprep.subr.mxu0 0.0
        %1155 = vmatpush1.msra.mxu0 0.0
        %1156 = vmatprep.subr.mxu0 0.0
        %1157 = vmatpush1.msra.mxu0 0.0
        %1158 = vmatprep.subr.mxu0 0.0
        %1159 = vmatpush1.msra.mxu0 0.0
        %1160 = vmatprep.subr.mxu0 0.0
        %1161 = vmatpush1.msra.mxu0 0.0
        %1162 = vmatprep.subr.mxu0 0.0
        %1163 = vmatpush1.msra.mxu0 0.0
        %1164 = vmatprep.subr.mxu0 0.0
        %1165 = vmatpush1.msra.mxu0 0.0
        %1166 = vmatprep.subr.mxu0 0.0
        %1167 = vmatpush1.msra.mxu0 0.0
        %1168 = vmatprep.subr.mxu0 0.0
        %1169 = vmatpush1.msra.mxu0 0.0
        %1170 = vmatprep.subr.mxu0 0.0
        %1171 = vmatpush1.msra.mxu0 0.0
        %1172 = vmatprep.subr.mxu0 0.0
        %1173 = vmatpush1.msra.mxu0 0.0
        %1174 = vmatprep.subr.mxu0 0.0
        %1175 = vmatpush1.msra.mxu0 0.0
        %1176 = vmatprep.subr.mxu0 0.0
        %1177 = vmatpush1.msra.mxu0 0.0
        %1178 = vmatprep.subr.mxu0 0.0
        %1179 = vmatpush1.msra.mxu0 0.0
        %1180 = vmatprep.subr.mxu0 0.0
        %1181 = vmatpush1.msra.mxu0 0.0
        %1182 = vmatprep.subr.mxu0 0.0
        %1183 = vmatpush1.msra.mxu0 0.0
        %1184 = vmatprep.mubr.f32.mxu0 0.0
        %1185 = vmatmul.mubr.f32.gmra.mrb[0].mxu0 %v1118
        %v1186 = vpop.f32.mrb[0].mxu0
        %v1187 = vadd.f32 %v1114, %v1186
        %v1188 = vpop.f32.mrb[0].mxu0
        %1189 = vdwg.mxu0
        %1190 = vst.msk [vmem:[#allocation2] sm:$0xff] %vm946, %v1187
        %vm1191 = vcmask 253952
        %1192 = vst.msk [vmem:[#allocation2 + $0x8] sm:$0x1] %vm1191, %v1104
        %v1193 = vld [vmem:[#allocation2] sm:$0xff]
        %v1194 = vld [vmem:[#allocation2 + $0x8] sm:$0x1]
        %v1195 = vld [vmem:[#allocation9] sm:$0xff]
        %v1196 = vld [vmem:[#allocation9 + $0x8] sm:$0x1]
        %v1197 = vadd.f32 %v1193, %v1195
        %v1198 = vadd.f32 %v1194, %v1196
        %v1199 = vld [vmem:[%s822] sm:$0x1]
        %v1200 = vld [vmem:[%s12] sm:$0xff]
        %v1201 = vld [vmem:[%s12 + $0x8] sm:$0xff]
        %v1202 = vld [vmem:[%s12 + $0x10] sm:$0xff]
        %v1203 = vld [vmem:[%s12 + $0x18] sm:$0xff]
        %v1204 = vld [vmem:[#allocation16] sm:$0x1]
        %v1206 = vlaneseq
        %v1207 = vshrl.u32 %v1206, 7
        %v1208 = vsub.s32 0, %v1207
        %v1209 = vrot.slane %v1204, %v1208
        %v1212 = vsel %vm946, %v1197, 0
        %v1215 = vsel %vm946, %v1198, 0
        %1217 = vmatprep.subr.mxu0 0.0
        %1218 = vmatpush1.msra.mxu0 %v1200
        %1219 = vmatprep.subr.mxu0 0.0
        %1220 = vmatpush1.msra.mxu0 %v1201
        %1221 = vmatprep.subr.mxu0 0.0
        %1222 = vmatpush1.msra.mxu0 %v1202
        %1223 = vmatprep.subr.mxu0 0.0
        %1224 = vmatpush1.msra.mxu0 %v1203
        %1225 = vmatprep.subr.mxu0 0.0
        %1226 = vmatpush1.msra.mxu0 0.0
        %1227 = vmatprep.subr.mxu0 0.0
        %1228 = vmatpush1.msra.mxu0 0.0
        %1229 = vmatprep.subr.mxu0 0.0
        %1230 = vmatpush1.msra.mxu0 0.0
        %1231 = vmatprep.subr.mxu0 0.0
        %1232 = vmatpush1.msra.mxu0 0.0
        %1233 = vmatprep.subr.mxu0 0.0
        %1234 = vmatpush1.msra.mxu0 0.0
        %1235 = vmatprep.subr.mxu0 0.0
        %1236 = vmatpush1.msra.mxu0 0.0
        %1237 = vmatprep.subr.mxu0 0.0
        %1238 = vmatpush1.msra.mxu0 0.0
        %1239 = vmatprep.subr.mxu0 0.0
        %1240 = vmatpush1.msra.mxu0 0.0
        %1241 = vmatprep.subr.mxu0 0.0
        %1242 = vmatpush1.msra.mxu0 0.0
        %1243 = vmatprep.subr.mxu0 0.0
        %1244 = vmatpush1.msra.mxu0 0.0
        %1245 = vmatprep.subr.mxu0 0.0
        %1246 = vmatpush1.msra.mxu0 0.0
        %1247 = vmatprep.subr.mxu0 0.0
        %1248 = vmatpush1.msra.mxu0 0.0
        %1249 = vmatprep.subr.mxu0 0.0
        %1250 = vmatpush1.msra.mxu0 0.0
        %1251 = vmatprep.subr.mxu0 0.0
        %1252 = vmatpush1.msra.mxu0 0.0
        %1253 = vmatprep.subr.mxu0 0.0
        %1254 = vmatpush1.msra.mxu0 0.0
        %1255 = vmatprep.subr.mxu0 0.0
        %1256 = vmatpush1.msra.mxu0 0.0
        %1257 = vmatprep.subr.mxu0 0.0
        %1258 = vmatpush1.msra.mxu0 0.0
        %1259 = vmatprep.subr.mxu0 0.0
        %1260 = vmatpush1.msra.mxu0 0.0
        %1261 = vmatprep.subr.mxu0 0.0
        %1262 = vmatpush1.msra.mxu0 0.0
        %1263 = vmatprep.subr.mxu0 0.0
        %1264 = vmatpush1.msra.mxu0 0.0
        %1265 = vmatprep.subr.mxu0 0.0
        %1266 = vmatpush1.msra.mxu0 0.0
        %1267 = vmatprep.subr.mxu0 0.0
        %1268 = vmatpush1.msra.mxu0 0.0
        %1269 = vmatprep.subr.mxu0 0.0
        %1270 = vmatpush1.msra.mxu0 0.0
        %1271 = vmatprep.subr.mxu0 0.0
        %1272 = vmatpush1.msra.mxu0 0.0
        %1273 = vmatprep.subr.mxu0 0.0
        %1274 = vmatpush1.msra.mxu0 0.0
        %1275 = vmatprep.subr.mxu0 0.0
        %1276 = vmatpush1.msra.mxu0 0.0
        %1277 = vmatprep.subr.mxu0 0.0
        %1278 = vmatpush1.msra.mxu0 0.0
        %1279 = vmatprep.subr.mxu0 0.0
        %1280 = vmatpush1.msra.mxu0 0.0
        %1281 = vmatprep.mubr.f32.mxu0 0.0
        %1282 = vmatmul.mubr.f32.gmra.mrb[0].mxu0 %v1212
        %v1283 = vpop.f32.mrb[0].mxu0
        %v1284 = vadd.f32 %v1209, %v1283
        %v1285 = vpop.f32.mrb[0].mxu0
        %1286 = vmatprep.mubr.f32.mxu0 0.0
        %1287 = vmatmul.mubr.f32.gmra.mrb[0].mxu0 %v1215
        %v1288 = vpop.f32.mrb[0].mxu0
        %v1289 = vadd.f32 %v1209, %v1288
        %v1290 = vpop.f32.mrb[0].mxu0
        %1291 = vdwg.mxu0
        %vm1292 = vcmask 785408
        %1293 = vst.msk [vmem:[#allocation4] sm:$0xff] %vm1292, %v1284
        %vm1294 = vcmask 778240
        %1295 = vst.msk [vmem:[#allocation4 + $0x8] sm:$0x1] %vm1294, %v1289
        %v1296 = vld [vmem:[#allocation4] sm:$0xff]
        %v1297 = vld [vmem:[#allocation4 + $0x8] sm:$0x1]
        %1300 = vrot.lane.b32.xlu0 %v1296, 96
        %v1301 = vpop.permute.xlu0 %1300
        %1302 = vrot.lane.b32.xlu0 %v1297, 96
        %v1303 = vpop.permute.xlu0 %1302
        %v1304 = vsel %vm1116, %v1296, 0
        %v1306 = vsel %vm1116, %v1297, 0
        %v1308 = vsel %vm1116, %v1301, 0
        %v1310 = vsel %vm1116, %v1303, 0
        %1312 = vmatprep.subr.mxu0 0.0
        %1313 = vmatpush1.xpose.msra.mxu0 %v1308
        %1314 = vmatprep.subr.mxu0 0.0
        %1315 = vmatpush1.xpose.msra.mxu0 %v1310
        %1316 = vmatprep.subr.mxu0 0.0
        %1317 = vmatpush1.xpose.msra.mxu0 0.0
        %1318 = vmatprep.subr.mxu0 0.0
        %1319 = vmatpush1.xpose.msra.mxu0 0.0
        %1320 = vmatprep.subr.mxu0 0.0
        %1321 = vmatpush1.xpose.msra.mxu0 0.0
        %1322 = vmatprep.subr.mxu0 0.0
        %1323 = vmatpush1.xpose.msra.mxu0 0.0
        %1324 = vmatprep.subr.mxu0 0.0
        %1325 = vmatpush1.xpose.msra.mxu0 0.0
        %1326 = vmatprep.subr.mxu0 0.0
        %1327 = vmatpush1.xpose.msra.mxu0 0.0
        %1328 = vmatprep.subr.mxu0 0.0
        %1329 = vmatpush1.xpose.msra.mxu0 0.0
        %1330 = vmatprep.subr.mxu0 0.0
        %1331 = vmatpush1.xpose.msra.mxu0 0.0
        %1332 = vmatprep.subr.mxu0 0.0
        %1333 = vmatpush1.xpose.msra.mxu0 0.0
        %1334 = vmatprep.subr.mxu0 0.0
        %1335 = vmatpush1.xpose.msra.mxu0 0.0
        %1336 = vmatprep.subr.mxu0 0.0
        %1337 = vmatpush1.xpose.msra.mxu0 0.0
        %1338 = vmatprep.subr.mxu0 0.0
        %1339 = vmatpush1.xpose.msra.mxu0 0.0
        %1340 = vmatprep.subr.mxu0 0.0
        %1341 = vmatpush1.xpose.msra.mxu0 0.0
        %1342 = vmatprep.subr.mxu0 0.0
        %1343 = vmatpush1.xpose.msra.mxu0 0.0
        %1344 = vmatprep.subr.mxu0 0.0
        %1345 = vmatpush1.xpose.msra.mxu0 0.0
        %1346 = vmatprep.subr.mxu0 0.0
        %1347 = vmatpush1.xpose.msra.mxu0 0.0
        %1348 = vmatprep.subr.mxu0 0.0
        %1349 = vmatpush1.xpose.msra.mxu0 0.0
        %1350 = vmatprep.subr.mxu0 0.0
        %1351 = vmatpush1.xpose.msra.mxu0 0.0
        %1352 = vmatprep.subr.mxu0 0.0
        %1353 = vmatpush1.xpose.msra.mxu0 0.0
        %1354 = vmatprep.subr.mxu0 0.0
        %1355 = vmatpush1.xpose.msra.mxu0 0.0
        %1356 = vmatprep.subr.mxu0 0.0
        %1357 = vmatpush1.xpose.msra.mxu0 0.0
        %1358 = vmatprep.subr.mxu0 0.0
        %1359 = vmatpush1.xpose.msra.mxu0 0.0
        %1360 = vmatprep.subr.mxu0 0.0
        %1361 = vmatpush1.xpose.msra.mxu0 0.0
        %1362 = vmatprep.subr.mxu0 0.0
        %1363 = vmatpush1.xpose.msra.mxu0 0.0
        %1364 = vmatprep.subr.mxu0 0.0
        %1365 = vmatpush1.xpose.msra.mxu0 0.0
        %1366 = vmatprep.subr.mxu0 0.0
        %1367 = vmatpush1.xpose.msra.mxu0 0.0
        %1368 = vmatprep.subr.mxu0 0.0
        %1369 = vmatpush1.xpose.msra.mxu0 0.0
        %1370 = vmatprep.subr.mxu0 0.0
        %1371 = vmatpush1.xpose.msra.mxu0 0.0
        %1372 = vmatprep.subr.mxu0 0.0
        %1373 = vmatpush1.xpose.msra.mxu0 0.0
        %1374 = vmatprep.subr.mxu0 0.0
        %1375 = vmatpush1.xpose.msra.mxu0 0.0
        %1376 = vmatprep.mubr.f32.mxu0 0.0
        %1377 = vmatmul.mubr.f32.gmra.mrb[0].mxu0 %v1304
        %v1378 = vpop.f32.mrb[0].mxu0
        %v1379 = vadd.f32 0.0, %v1378
        %v1380 = vpop.f32.mrb[0].mxu0
        %1381 = vmatprep.mubr.f32.mxu0 0.0
        %1382 = vmatmul.mubr.f32.gmra.mrb[0].mxu0 %v1306
        %v1383 = vpop.f32.mrb[0].mxu0
        %v1384 = vadd.f32 0.0, %v1383
        %v1385 = vpop.f32.mrb[0].mxu0
        %1386 = vdwg.mxu0
        %v1387 = vmul.f32 %v1379, 0.35355338
        %v1388 = vmul.f32 %v1384, 0.35355338
        %v1390 = vlaneseq
        %v1391 = vshrl.u32 %v1390, 7
        %v1392 = vsub.s32 0, %v1391
        %v1393 = vrot.slane %v1199, %v1392
        %v1395 = vadd.f32 %v1387, %v1393
        %v1396 = vadd.f32 %v1388, %v1393
        %vm1397 = vcmask 72704
        %v1398 = vsel %vm1397, %v1395, -inf
        %1399 = vmax.xlane.f32.xlu0 %v1398
        %v1400 = vpop.xlane.xlu0 %1399
        %vm1401 = vcmask 65536
        %v1402 = vsel %vm1401, %v1396, -inf
        %1403 = vmax.xlane.f32.xlu0 %v1402
        %v1404 = vpop.xlane.xlu0 %1403
        %v1405 = vsub.f32 %v1395, %v1400
        %v1406 = vsub.f32 %v1396, %v1404
        %v1407 = vmul.f32 %v1405, 1.442695
        %v1408 = vpow.pop %v1407
        %v1409 = vmul.f32 %v1406, 1.442695
        %v1410 = vpow.pop %v1409
        %1411 = vrot.lane.b32.xlu0 %v1296, 64
        %v1412 = vpop.permute.xlu0 %1411
        %1413 = vrot.lane.b32.xlu0 %v1297, 64
        %v1414 = vpop.permute.xlu0 %1413
        %v1417 = vsel %vm1397, %v1408, 0
        %v1420 = vsel %vm1397, %v1410, 0
        %vm1422 = vcmask 1040384
        %v1423 = vsel %vm1422, %v1414, 0
        %1425 = vmatprep.subr.mxu0 0.0
        %1426 = vmatpush1.msra.mxu0 %v1412
        %1427 = vmatprep.subr.mxu0 0.0
        %1428 = vmatpush1.msra.mxu0 %v1423
        %1429 = vmatprep.subr.mxu0 0.0
        %1430 = vmatpush1.msra.mxu0 0.0
        %1431 = vmatprep.subr.mxu0 0.0
        %1432 = vmatpush1.msra.mxu0 0.0
        %1433 = vmatprep.subr.mxu0 0.0
        %1434 = vmatpush1.msra.mxu0 0.0
        %1435 = vmatprep.subr.mxu0 0.0
        %1436 = vmatpush1.msra.mxu0 0.0
        %1437 = vmatprep.subr.mxu0 0.0
        %1438 = vmatpush1.msra.mxu0 0.0
        %1439 = vmatprep.subr.mxu0 0.0
        %1440 = vmatpush1.msra.mxu0 0.0
        %1441 = vmatprep.subr.mxu0 0.0
        %1442 = vmatpush1.msra.mxu0 0.0
        %1443 = vmatprep.subr.mxu0 0.0
        %1444 = vmatpush1.msra.mxu0 0.0
        %1445 = vmatprep.subr.mxu0 0.0
        %1446 = vmatpush1.msra.mxu0 0.0
        %1447 = vmatprep.subr.mxu0 0.0
        %1448 = vmatpush1.msra.mxu0 0.0
        %1449 = vmatprep.subr.mxu0 0.0
        %1450 = vmatpush1.msra.mxu0 0.0
        %1451 = vmatprep.subr.mxu0 0.0
        %1452 = vmatpush1.msra.mxu0 0.0
        %1453 = vmatprep.subr.mxu0 0.0
        %1454 = vmatpush1.msra.mxu0 0.0
        %1455 = vmatprep.subr.mxu0 0.0
        %1456 = vmatpush1.msra.mxu0 0.0
        %1457 = vmatprep.subr.mxu0 0.0
        %1458 = vmatpush1.msra.mxu0 0.0
        %1459 = vmatprep.subr.mxu0 0.0
        %1460 = vmatpush1.msra.mxu0 0.0
        %1461 = vmatprep.subr.mxu0 0.0
        %1462 = vmatpush1.msra.mxu0 0.0
        %1463 = vmatprep.subr.mxu0 0.0
        %1464 = vmatpush1.msra.mxu0 0.0
        %1465 = vmatprep.subr.mxu0 0.0
        %1466 = vmatpush1.msra.mxu0 0.0
        %1467 = vmatprep.subr.mxu0 0.0
        %1468 = vmatpush1.msra.mxu0 0.0
        %1469 = vmatprep.subr.mxu0 0.0
        %1470 = vmatpush1.msra.mxu0 0.0
        %1471 = vmatprep.subr.mxu0 0.0
        %1472 = vmatpush1.msra.mxu0 0.0
        %1473 = vmatprep.subr.mxu0 0.0
        %1474 = vmatpush1.msra.mxu0 0.0
        %1475 = vmatprep.subr.mxu0 0.0
        %1476 = vmatpush1.msra.mxu0 0.0
        %1477 = vmatprep.subr.mxu0 0.0
        %1478 = vmatpush1.msra.mxu0 0.0
        %1479 = vmatprep.subr.mxu0 0.0
        %1480 = vmatpush1.msra.mxu0 0.0
        %1481 = vmatprep.subr.mxu0 0.0
        %1482 = vmatpush1.msra.mxu0 0.0
        %1483 = vmatprep.subr.mxu0 0.0
        %1484 = vmatpush1.msra.mxu0 0.0
        %1485 = vmatprep.subr.mxu0 0.0
        %1486 = vmatpush1.msra.mxu0 0.0
        %1487 = vmatprep.subr.mxu0 0.0
        %1488 = vmatpush1.msra.mxu0 0.0
        %1489 = vmatprep.mubr.f32.mxu0 0.0
        %1490 = vmatmul.mubr.f32.gmra.mrb[0].mxu0 %v1417
        %v1491 = vpop.f32.mrb[0].mxu0
        %v1492 = vadd.f32 0.0, %v1491
        %v1493 = vpop.f32.mrb[0].mxu0
        %1494 = vmatprep.mubr.f32.mxu0 0.0
        %1495 = vmatmul.mubr.f32.gmra.mrb[0].mxu0 %v1420
        %v1496 = vpop.f32.mrb[0].mxu0
        %v1497 = vadd.f32 0.0, %v1496
        %v1498 = vpop.f32.mrb[0].mxu0
        %1499 = vdwg.mxu0
        %v1500 = vsel %vm1397, %v1408, 0.0
        %1501 = vadd.xlane.f32.xlu0 %v1500
        %v1502 = vpop.xlane.xlu0 %1501
        %v1503 = vsel %vm1401, %v1410, 0.0
        %1504 = vadd.xlane.f32.xlu0 %v1503
        %v1505 = vpop.xlane.xlu0 %1504
        %v1506 = vrcp.pop %v1502
        %v1507 = vrcp.pop %v1505
        %v1508 = vmul.f32 %v1492, %v1506
        %v1509 = vmul.f32 %v1497, %v1507
        %1510 = vst.msk [vmem:[#allocation3] sm:$0xff] %vm1116, %v1508
        %vm1511 = vcmask 57344
        %1512 = vst.msk [vmem:[#allocation3 + $0x8] sm:$0x1] %vm1511, %v1509
        %v1513 = vld [vmem:[#allocation4] sm:$0xff]
        %v1514 = vld [vmem:[#allocation4 + $0x8] sm:$0x1]
        %1517 = vrot.lane.b32.xlu0 %v1513, 120
        %v1518 = vpop.permute.xlu0 %1517
        %1519 = vrot.lane.b32.xlu0 %v1514, 120
        %v1520 = vpop.permute.xlu0 %1519
        %1521 = vrot.lane.b32.xlu0 %v1513, 88
        %v1522 = vpop.permute.xlu0 %1521
        %1523 = vrot.lane.b32.xlu0 %v1514, 88
        %v1524 = vpop.permute.xlu0 %1523
        %v1525 = vsel %vm1116, %v1518, 0
        %v1527 = vsel %vm1116, %v1520, 0
        %v1529 = vsel %vm1116, %v1522, 0
        %v1531 = vsel %vm1116, %v1524, 0
        %1533 = vmatprep.subr.mxu0 0.0
        %1534 = vmatpush1.xpose.msra.mxu0 %v1529
        %1535 = vmatprep.subr.mxu0 0.0
        %1536 = vmatpush1.xpose.msra.mxu0 %v1531
        %1537 = vmatprep.subr.mxu0 0.0
        %1538 = vmatpush1.xpose.msra.mxu0 0.0
        %1539 = vmatprep.subr.mxu0 0.0
        %1540 = vmatpush1.xpose.msra.mxu0 0.0
        %1541 = vmatprep.subr.mxu0 0.0
        %1542 = vmatpush1.xpose.msra.mxu0 0.0
        %1543 = vmatprep.subr.mxu0 0.0
        %1544 = vmatpush1.xpose.msra.mxu0 0.0
        %1545 = vmatprep.subr.mxu0 0.0
        %1546 = vmatpush1.xpose.msra.mxu0 0.0
        %1547 = vmatprep.subr.mxu0 0.0
        %1548 = vmatpush1.xpose.msra.mxu0 0.0
        %1549 = vmatprep.subr.mxu0 0.0
        %1550 = vmatpush1.xpose.msra.mxu0 0.0
        %1551 = vmatprep.subr.mxu0 0.0
        %1552 = vmatpush1.xpose.msra.mxu0 0.0
        %1553 = vmatprep.subr.mxu0 0.0
        %1554 = vmatpush1.xpose.msra.mxu0 0.0
        %1555 = vmatprep.subr.mxu0 0.0
        %1556 = vmatpush1.xpose.msra.mxu0 0.0
        %1557 = vmatprep.subr.mxu0 0.0
        %1558 = vmatpush1.xpose.msra.mxu0 0.0
        %1559 = vmatprep.subr.mxu0 0.0
        %1560 = vmatpush1.xpose.msra.mxu0 0.0
        %1561 = vmatprep.subr.mxu0 0.0
        %1562 = vmatpush1.xpose.msra.mxu0 0.0
        %1563 = vmatprep.subr.mxu0 0.0
        %1564 = vmatpush1.xpose.msra.mxu0 0.0
        %1565 = vmatprep.subr.mxu0 0.0
        %1566 = vmatpush1.xpose.msra.mxu0 0.0
        %1567 = vmatprep.subr.mxu0 0.0
        %1568 = vmatpush1.xpose.msra.mxu0 0.0
        %1569 = vmatprep.subr.mxu0 0.0
        %1570 = vmatpush1.xpose.msra.mxu0 0.0
        %1571 = vmatprep.subr.mxu0 0.0
        %1572 = vmatpush1.xpose.msra.mxu0 0.0
        %1573 = vmatprep.subr.mxu0 0.0
        %1574 = vmatpush1.xpose.msra.mxu0 0.0
        %1575 = vmatprep.subr.mxu0 0.0
        %1576 = vmatpush1.xpose.msra.mxu0 0.0
        %1577 = vmatprep.subr.mxu0 0.0
        %1578 = vmatpush1.xpose.msra.mxu0 0.0
        %1579 = vmatprep.subr.mxu0 0.0
        %1580 = vmatpush1.xpose.msra.mxu0 0.0
        %1581 = vmatprep.subr.mxu0 0.0
        %1582 = vmatpush1.xpose.msra.mxu0 0.0
        %1583 = vmatprep.subr.mxu0 0.0
        %1584 = vmatpush1.xpose.msra.mxu0 0.0
        %1585 = vmatprep.subr.mxu0 0.0
        %1586 = vmatpush1.xpose.msra.mxu0 0.0
        %1587 = vmatprep.subr.mxu0 0.0
        %1588 = vmatpush1.xpose.msra.mxu0 0.0
        %1589 = vmatprep.subr.mxu0 0.0
        %1590 = vmatpush1.xpose.msra.mxu0 0.0
        %1591 = vmatprep.subr.mxu0 0.0
        %1592 = vmatpush1.xpose.msra.mxu0 0.0
        %1593 = vmatprep.subr.mxu0 0.0
        %1594 = vmatpush1.xpose.msra.mxu0 0.0
        %1595 = vmatprep.subr.mxu0 0.0
        %1596 = vmatpush1.xpose.msra.mxu0 0.0
        %1597 = vmatprep.mubr.f32.mxu0 0.0
        %1598 = vmatmul.mubr.f32.gmra.mrb[0].mxu0 %v1525
        %v1599 = vpop.f32.mrb[0].mxu0
        %v1600 = vadd.f32 0.0, %v1599
        %v1601 = vpop.f32.mrb[0].mxu0
        %1602 = vmatprep.mubr.f32.mxu0 0.0
        %1603 = vmatmul.mubr.f32.gmra.mrb[0].mxu0 %v1527
        %v1604 = vpop.f32.mrb[0].mxu0
        %v1605 = vadd.f32 0.0, %v1604
        %v1606 = vpop.f32.mrb[0].mxu0
        %1607 = vdwg.mxu0
        %v1608 = vmul.f32 %v1600, 0.35355338
        %v1609 = vmul.f32 %v1605, 0.35355338
        %v1610 = vadd.f32 %v1608, %v1393
        %v1611 = vadd.f32 %v1609, %v1393
        %v1612 = vsel %vm1397, %v1610, -inf
        %1613 = vmax.xlane.f32.xlu0 %v1612
        %v1614 = vpop.xlane.xlu0 %1613
        %v1615 = vsel %vm1401, %v1611, -inf
        %1616 = vmax.xlane.f32.xlu0 %v1615
        %v1617 = vpop.xlane.xlu0 %1616
        %v1618 = vsub.f32 %v1610, %v1614
        %v1619 = vsub.f32 %v1611, %v1617
        %v1620 = vmul.f32 %v1618, 1.442695
        %v1621 = vpow.pop %v1620
        %v1622 = vmul.f32 %v1619, 1.442695
        %v1623 = vpow.pop %v1622
        %1624 = vrot.lane.b32.xlu0 %v1513, 56
        %v1625 = vpop.permute.xlu0 %1624
        %1626 = vrot.lane.b32.xlu0 %v1514, 56
        %v1627 = vpop.permute.xlu0 %1626
        %v1630 = vsel %vm1397, %v1621, 0
        %v1633 = vsel %vm1397, %v1623, 0
        %v1635 = vsel %vm1422, %v1627, 0
        %1637 = vmatprep.subr.mxu0 0.0
        %1638 = vmatpush1.msra.mxu0 %v1625
        %1639 = vmatprep.subr.mxu0 0.0
        %1640 = vmatpush1.msra.mxu0 %v1635
        %1641 = vmatprep.subr.mxu0 0.0
        %1642 = vmatpush1.msra.mxu0 0.0
        %1643 = vmatprep.subr.mxu0 0.0
        %1644 = vmatpush1.msra.mxu0 0.0
        %1645 = vmatprep.subr.mxu0 0.0
        %1646 = vmatpush1.msra.mxu0 0.0
        %1647 = vmatprep.subr.mxu0 0.0
        %1648 = vmatpush1.msra.mxu0 0.0
        %1649 = vmatprep.subr.mxu0 0.0
        %1650 = vmatpush1.msra.mxu0 0.0
        %1651 = vmatprep.subr.mxu0 0.0
        %1652 = vmatpush1.msra.mxu0 0.0
        %1653 = vmatprep.subr.mxu0 0.0
        %1654 = vmatpush1.msra.mxu0 0.0
        %1655 = vmatprep.subr.mxu0 0.0
        %1656 = vmatpush1.msra.mxu0 0.0
        %1657 = vmatprep.subr.mxu0 0.0
        %1658 = vmatpush1.msra.mxu0 0.0
        %1659 = vmatprep.subr.mxu0 0.0
        %1660 = vmatpush1.msra.mxu0 0.0
        %1661 = vmatprep.subr.mxu0 0.0
        %1662 = vmatpush1.msra.mxu0 0.0
        %1663 = vmatprep.subr.mxu0 0.0
        %1664 = vmatpush1.msra.mxu0 0.0
        %1665 = vmatprep.subr.mxu0 0.0
        %1666 = vmatpush1.msra.mxu0 0.0
        %1667 = vmatprep.subr.mxu0 0.0
        %1668 = vmatpush1.msra.mxu0 0.0
        %1669 = vmatprep.subr.mxu0 0.0
        %1670 = vmatpush1.msra.mxu0 0.0
        %1671 = vmatprep.subr.mxu0 0.0
        %1672 = vmatpush1.msra.mxu0 0.0
        %1673 = vmatprep.subr.mxu0 0.0
        %1674 = vmatpush1.msra.mxu0 0.0
        %1675 = vmatprep.subr.mxu0 0.0
        %1676 = vmatpush1.msra.mxu0 0.0
        %1677 = vmatprep.subr.mxu0 0.0
        %1678 = vmatpush1.msra.mxu0 0.0
        %1679 = vmatprep.subr.mxu0 0.0
        %1680 = vmatpush1.msra.mxu0 0.0
        %1681 = vmatprep.subr.mxu0 0.0
        %1682 = vmatpush1.msra.mxu0 0.0
        %1683 = vmatprep.subr.mxu0 0.0
        %1684 = vmatpush1.msra.mxu0 0.0
        %1685 = vmatprep.subr.mxu0 0.0
        %1686 = vmatpush1.msra.mxu0 0.0
        %1687 = vmatprep.subr.mxu0 0.0
        %1688 = vmatpush1.msra.mxu0 0.0
        %1689 = vmatprep.subr.mxu0 0.0
        %1690 = vmatpush1.msra.mxu0 0.0
        %1691 = vmatprep.subr.mxu0 0.0
        %1692 = vmatpush1.msra.mxu0 0.0
        %1693 = vmatprep.subr.mxu0 0.0
        %1694 = vmatpush1.msra.mxu0 0.0
        %1695 = vmatprep.subr.mxu0 0.0
        %1696 = vmatpush1.msra.mxu0 0.0
        %1697 = vmatprep.subr.mxu0 0.0
        %1698 = vmatpush1.msra.mxu0 0.0
        %1699 = vmatprep.subr.mxu0 0.0
        %1700 = vmatpush1.msra.mxu0 0.0
        %1701 = vmatprep.mubr.f32.mxu0 0.0
        %1702 = vmatmul.mubr.f32.gmra.mrb[0].mxu0 %v1630
        %v1703 = vpop.f32.mrb[0].mxu0
        %v1704 = vadd.f32 0.0, %v1703
        %v1705 = vpop.f32.mrb[0].mxu0
        %1706 = vmatprep.mubr.f32.mxu0 0.0
        %1707 = vmatmul.mubr.f32.gmra.mrb[0].mxu0 %v1633
        %v1708 = vpop.f32.mrb[0].mxu0
        %v1709 = vadd.f32 0.0, %v1708
        %v1710 = vpop.f32.mrb[0].mxu0
        %1711 = vdwg.mxu0
        %v1712 = vsel %vm1397, %v1621, 0.0
        %1713 = vadd.xlane.f32.xlu0 %v1712
        %v1714 = vpop.xlane.xlu0 %1713
        %v1715 = vsel %vm1401, %v1623, 0.0
        %1716 = vadd.xlane.f32.xlu0 %v1715
        %v1717 = vpop.xlane.xlu0 %1716
        %v1718 = vrcp.pop %v1714
        %v1719 = vrcp.pop %v1717
        %v1720 = vmul.f32 %v1704, %v1718
        %v1721 = vmul.f32 %v1709, %v1719
        %1724 = vrot.lane.b32.xlu0 %v1720, 8
        %v1725 = vpop.permute.xlu0 %1724
        %1726 = vrot.lane.b32.xlu0 %v1721, 8
        %v1727 = vpop.permute.xlu0 %1726
        %vm1730 = vcmask 130112
        %1731 = vst.msk [vmem:[#allocation3] sm:$0xff] %vm1730, %v1725
        %vm1732 = vcmask 122944
        %1733 = vst.msk [vmem:[#allocation3 + $0x8] sm:$0x1] %vm1732, %v1727
        %v1734 = vld [vmem:[#allocation4] sm:$0xff]
        %v1735 = vld [vmem:[#allocation4 + $0x8] sm:$0x1]
        %1738 = vrot.lane.b32.xlu0 %v1734, 112
        %v1739 = vpop.permute.xlu0 %1738
        %1740 = vrot.lane.b32.xlu0 %v1735, 112
        %v1741 = vpop.permute.xlu0 %1740
        %1742 = vrot.lane.b32.xlu0 %v1734, 80
        %v1743 = vpop.permute.xlu0 %1742
        %1744 = vrot.lane.b32.xlu0 %v1735, 80
        %v1745 = vpop.permute.xlu0 %1744
        %v1746 = vsel %vm1116, %v1739, 0
        %v1748 = vsel %vm1116, %v1741, 0
        %v1750 = vsel %vm1116, %v1743, 0
        %v1752 = vsel %vm1116, %v1745, 0
        %1754 = vmatprep.subr.mxu0 0.0
        %1755 = vmatpush1.xpose.msra.mxu0 %v1750
        %1756 = vmatprep.subr.mxu0 0.0
        %1757 = vmatpush1.xpose.msra.mxu0 %v1752
        %1758 = vmatprep.subr.mxu0 0.0
        %1759 = vmatpush1.xpose.msra.mxu0 0.0
        %1760 = vmatprep.subr.mxu0 0.0
        %1761 = vmatpush1.xpose.msra.mxu0 0.0
        %1762 = vmatprep.subr.mxu0 0.0
        %1763 = vmatpush1.xpose.msra.mxu0 0.0
        %1764 = vmatprep.subr.mxu0 0.0
        %1765 = vmatpush1.xpose.msra.mxu0 0.0
        %1766 = vmatprep.subr.mxu0 0.0
        %1767 = vmatpush1.xpose.msra.mxu0 0.0
        %1768 = vmatprep.subr.mxu0 0.0
        %1769 = vmatpush1.xpose.msra.mxu0 0.0
        %1770 = vmatprep.subr.mxu0 0.0
        %1771 = vmatpush1.xpose.msra.mxu0 0.0
        %1772 = vmatprep.subr.mxu0 0.0
        %1773 = vmatpush1.xpose.msra.mxu0 0.0
        %1774 = vmatprep.subr.mxu0 0.0
        %1775 = vmatpush1.xpose.msra.mxu0 0.0
        %1776 = vmatprep.subr.mxu0 0.0
        %1777 = vmatpush1.xpose.msra.mxu0 0.0
        %1778 = vmatprep.subr.mxu0 0.0
        %1779 = vmatpush1.xpose.msra.mxu0 0.0
        %1780 = vmatprep.subr.mxu0 0.0
        %1781 = vmatpush1.xpose.msra.mxu0 0.0
        %1782 = vmatprep.subr.mxu0 0.0
        %1783 = vmatpush1.xpose.msra.mxu0 0.0
        %1784 = vmatprep.subr.mxu0 0.0
        %1785 = vmatpush1.xpose.msra.mxu0 0.0
        %1786 = vmatprep.subr.mxu0 0.0
        %1787 = vmatpush1.xpose.msra.mxu0 0.0
        %1788 = vmatprep.subr.mxu0 0.0
        %1789 = vmatpush1.xpose.msra.mxu0 0.0
        %1790 = vmatprep.subr.mxu0 0.0
        %1791 = vmatpush1.xpose.msra.mxu0 0.0
        %1792 = vmatprep.subr.mxu0 0.0
        %1793 = vmatpush1.xpose.msra.mxu0 0.0
        %1794 = vmatprep.subr.mxu0 0.0
        %1795 = vmatpush1.xpose.msra.mxu0 0.0
        %1796 = vmatprep.subr.mxu0 0.0
        %1797 = vmatpush1.xpose.msra.mxu0 0.0
        %1798 = vmatprep.subr.mxu0 0.0
        %1799 = vmatpush1.xpose.msra.mxu0 0.0
        %1800 = vmatprep.subr.mxu0 0.0
        %1801 = vmatpush1.xpose.msra.mxu0 0.0
        %1802 = vmatprep.subr.mxu0 0.0
        %1803 = vmatpush1.xpose.msra.mxu0 0.0
        %1804 = vmatprep.subr.mxu0 0.0
        %1805 = vmatpush1.xpose.msra.mxu0 0.0
        %1806 = vmatprep.subr.mxu0 0.0
        %1807 = vmatpush1.xpose.msra.mxu0 0.0
        %1808 = vmatprep.subr.mxu0 0.0
        %1809 = vmatpush1.xpose.msra.mxu0 0.0
        %1810 = vmatprep.subr.mxu0 0.0
        %1811 = vmatpush1.xpose.msra.mxu0 0.0
        %1812 = vmatprep.subr.mxu0 0.0
        %1813 = vmatpush1.xpose.msra.mxu0 0.0
        %1814 = vmatprep.subr.mxu0 0.0
        %1815 = vmatpush1.xpose.msra.mxu0 0.0
        %1816 = vmatprep.subr.mxu0 0.0
        %1817 = vmatpush1.xpose.msra.mxu0 0.0
        %1818 = vmatprep.mubr.f32.mxu0 0.0
        %1819 = vmatmul.mubr.f32.gmra.mrb[0].mxu0 %v1746
        %v1820 = vpop.f32.mrb[0].mxu0
        %v1821 = vadd.f32 0.0, %v1820
        %v1822 = vpop.f32.mrb[0].mxu0
        %1823 = vmatprep.mubr.f32.mxu0 0.0
        %1824 = vmatmul.mubr.f32.gmra.mrb[0].mxu0 %v1748
        %v1825 = vpop.f32.mrb[0].mxu0
        %v1826 = vadd.f32 0.0, %v1825
        %v1827 = vpop.f32.mrb[0].mxu0
        %1828 = vdwg.mxu0
        %v1829 = vmul.f32 %v1821, 0.35355338
        %v1830 = vmul.f32 %v1826, 0.35355338
        %v1831 = vadd.f32 %v1829, %v1393
        %v1832 = vadd.f32 %v1830, %v1393
        %v1833 = vsel %vm1397, %v1831, -inf
        %1834 = vmax.xlane.f32.xlu0 %v1833
        %v1835 = vpop.xlane.xlu0 %1834
        %v1836 = vsel %vm1401, %v1832, -inf
        %1837 = vmax.xlane.f32.xlu0 %v1836
        %v1838 = vpop.xlane.xlu0 %1837
        %v1839 = vsub.f32 %v1831, %v1835
        %v1840 = vsub.f32 %v1832, %v1838
        %v1841 = vmul.f32 %v1839, 1.442695
        %v1842 = vpow.pop %v1841
        %v1843 = vmul.f32 %v1840, 1.442695
        %v1844 = vpow.pop %v1843
        %1845 = vrot.lane.b32.xlu0 %v1734, 48
        %v1846 = vpop.permute.xlu0 %1845
        %1847 = vrot.lane.b32.xlu0 %v1735, 48
        %v1848 = vpop.permute.xlu0 %1847
        %v1851 = vsel %vm1397, %v1842, 0
        %v1854 = vsel %vm1397, %v1844, 0
        %v1856 = vsel %vm1422, %v1848, 0
        %1858 = vmatprep.subr.mxu0 0.0
        %1859 = vmatpush1.msra.mxu0 %v1846
        %1860 = vmatprep.subr.mxu0 0.0
        %1861 = vmatpush1.msra.mxu0 %v1856
        %1862 = vmatprep.subr.mxu0 0.0
        %1863 = vmatpush1.msra.mxu0 0.0
        %1864 = vmatprep.subr.mxu0 0.0
        %1865 = vmatpush1.msra.mxu0 0.0
        %1866 = vmatprep.subr.mxu0 0.0
        %1867 = vmatpush1.msra.mxu0 0.0
        %1868 = vmatprep.subr.mxu0 0.0
        %1869 = vmatpush1.msra.mxu0 0.0
        %1870 = vmatprep.subr.mxu0 0.0
        %1871 = vmatpush1.msra.mxu0 0.0
        %1872 = vmatprep.subr.mxu0 0.0
        %1873 = vmatpush1.msra.mxu0 0.0
        %1874 = vmatprep.subr.mxu0 0.0
        %1875 = vmatpush1.msra.mxu0 0.0
        %1876 = vmatprep.subr.mxu0 0.0
        %1877 = vmatpush1.msra.mxu0 0.0
        %1878 = vmatprep.subr.mxu0 0.0
        %1879 = vmatpush1.msra.mxu0 0.0
        %1880 = vmatprep.subr.mxu0 0.0
        %1881 = vmatpush1.msra.mxu0 0.0
        %1882 = vmatprep.subr.mxu0 0.0
        %1883 = vmatpush1.msra.mxu0 0.0
        %1884 = vmatprep.subr.mxu0 0.0
        %1885 = vmatpush1.msra.mxu0 0.0
        %1886 = vmatprep.subr.mxu0 0.0
        %1887 = vmatpush1.msra.mxu0 0.0
        %1888 = vmatprep.subr.mxu0 0.0
        %1889 = vmatpush1.msra.mxu0 0.0
        %1890 = vmatprep.subr.mxu0 0.0
        %1891 = vmatpush1.msra.mxu0 0.0
        %1892 = vmatprep.subr.mxu0 0.0
        %1893 = vmatpush1.msra.mxu0 0.0
        %1894 = vmatprep.subr.mxu0 0.0
        %1895 = vmatpush1.msra.mxu0 0.0
        %1896 = vmatprep.subr.mxu0 0.0
        %1897 = vmatpush1.msra.mxu0 0.0
        %1898 = vmatprep.subr.mxu0 0.0
        %1899 = vmatpush1.msra.mxu0 0.0
        %1900 = vmatprep.subr.mxu0 0.0
        %1901 = vmatpush1.msra.mxu0 0.0
        %1902 = vmatprep.subr.mxu0 0.0
        %1903 = vmatpush1.msra.mxu0 0.0
        %1904 = vmatprep.subr.mxu0 0.0
        %1905 = vmatpush1.msra.mxu0 0.0
        %1906 = vmatprep.subr.mxu0 0.0
        %1907 = vmatpush1.msra.mxu0 0.0
        %1908 = vmatprep.subr.mxu0 0.0
        %1909 = vmatpush1.msra.mxu0 0.0
        %1910 = vmatprep.subr.mxu0 0.0
        %1911 = vmatpush1.msra.mxu0 0.0
        %1912 = vmatprep.subr.mxu0 0.0
        %1913 = vmatpush1.msra.mxu0 0.0
        %1914 = vmatprep.subr.mxu0 0.0
        %1915 = vmatpush1.msra.mxu0 0.0
        %1916 = vmatprep.subr.mxu0 0.0
        %1917 = vmatpush1.msra.mxu0 0.0
        %1918 = vmatprep.subr.mxu0 0.0
        %1919 = vmatpush1.msra.mxu0 0.0
        %1920 = vmatprep.subr.mxu0 0.0
        %1921 = vmatpush1.msra.mxu0 0.0
        %1922 = vmatprep.mubr.f32.mxu0 0.0
        %1923 = vmatmul.mubr.f32.gmra.mrb[0].mxu0 %v1851
        %v1924 = vpop.f32.mrb[0].mxu0
        %v1925 = vadd.f32 0.0, %v1924
        %v1926 = vpop.f32.mrb[0].mxu0
        %1927 = vmatprep.mubr.f32.mxu0 0.0
        %1928 = vmatmul.mubr.f32.gmra.mrb[0].mxu0 %v1854
        %v1929 = vpop.f32.mrb[0].mxu0
        %v1930 = vadd.f32 0.0, %v1929
        %v1931 = vpop.f32.mrb[0].mxu0
        %1932 = vdwg.mxu0
        %v1933 = vsel %vm1397, %v1842, 0.0
        %1934 = vadd.xlane.f32.xlu0 %v1933
        %v1935 = vpop.xlane.xlu0 %1934
        %v1936 = vsel %vm1401, %v1844, 0.0
        %1937 = vadd.xlane.f32.xlu0 %v1936
        %v1938 = vpop.xlane.xlu0 %1937
        %v1939 = vrcp.pop %v1935
        %v1940 = vrcp.pop %v1938
        %v1941 = vmul.f32 %v1925, %v1939
        %v1942 = vmul.f32 %v1930, %v1940
        %1945 = vrot.lane.b32.xlu0 %v1941, 16
        %v1946 = vpop.permute.xlu0 %1945
        %1947 = vrot.lane.b32.xlu0 %v1942, 16
        %v1948 = vpop.permute.xlu0 %1947
        %vm1951 = vcmask 195712
        %1952 = vst.msk [vmem:[#allocation3] sm:$0xff] %vm1951, %v1946
        %vm1953 = vcmask 188544
        %1954 = vst.msk [vmem:[#allocation3 + $0x8] sm:$0x1] %vm1953, %v1948
        %v1955 = vld [vmem:[#allocation4] sm:$0xff]
        %v1956 = vld [vmem:[#allocation4 + $0x8] sm:$0x1]
        %1959 = vrot.lane.b32.xlu0 %v1955, 104
        %v1960 = vpop.permute.xlu0 %1959
        %1961 = vrot.lane.b32.xlu0 %v1956, 104
        %v1962 = vpop.permute.xlu0 %1961
        %1963 = vrot.lane.b32.xlu0 %v1955, 72
        %v1964 = vpop.permute.xlu0 %1963
        %1965 = vrot.lane.b32.xlu0 %v1956, 72
        %v1966 = vpop.permute.xlu0 %1965
        %v1967 = vsel %vm1116, %v1960, 0
        %v1969 = vsel %vm1116, %v1962, 0
        %v1971 = vsel %vm1116, %v1964, 0
        %v1973 = vsel %vm1116, %v1966, 0
        %1975 = vmatprep.subr.mxu0 0.0
        %1976 = vmatpush1.xpose.msra.mxu0 %v1971
        %1977 = vmatprep.subr.mxu0 0.0
        %1978 = vmatpush1.xpose.msra.mxu0 %v1973
        %1979 = vmatprep.subr.mxu0 0.0
        %1980 = vmatpush1.xpose.msra.mxu0 0.0
        %1981 = vmatprep.subr.mxu0 0.0
        %1982 = vmatpush1.xpose.msra.mxu0 0.0
        %1983 = vmatprep.subr.mxu0 0.0
        %1984 = vmatpush1.xpose.msra.mxu0 0.0
        %1985 = vmatprep.subr.mxu0 0.0
        %1986 = vmatpush1.xpose.msra.mxu0 0.0
        %1987 = vmatprep.subr.mxu0 0.0
        %1988 = vmatpush1.xpose.msra.mxu0 0.0
        %1989 = vmatprep.subr.mxu0 0.0
        %1990 = vmatpush1.xpose.msra.mxu0 0.0
        %1991 = vmatprep.subr.mxu0 0.0
        %1992 = vmatpush1.xpose.msra.mxu0 0.0
        %1993 = vmatprep.subr.mxu0 0.0
        %1994 = vmatpush1.xpose.msra.mxu0 0.0
        %1995 = vmatprep.subr.mxu0 0.0
        %1996 = vmatpush1.xpose.msra.mxu0 0.0
        %1997 = vmatprep.subr.mxu0 0.0
        %1998 = vmatpush1.xpose.msra.mxu0 0.0
        %1999 = vmatprep.subr.mxu0 0.0
        %2000 = vmatpush1.xpose.msra.mxu0 0.0
        %2001 = vmatprep.subr.mxu0 0.0
        %2002 = vmatpush1.xpose.msra.mxu0 0.0
        %2003 = vmatprep.subr.mxu0 0.0
        %2004 = vmatpush1.xpose.msra.mxu0 0.0
        %2005 = vmatprep.subr.mxu0 0.0
        %2006 = vmatpush1.xpose.msra.mxu0 0.0
        %2007 = vmatprep.subr.mxu0 0.0
        %2008 = vmatpush1.xpose.msra.mxu0 0.0
        %2009 = vmatprep.subr.mxu0 0.0
        %2010 = vmatpush1.xpose.msra.mxu0 0.0
        %2011 = vmatprep.subr.mxu0 0.0
        %2012 = vmatpush1.xpose.msra.mxu0 0.0
        %2013 = vmatprep.subr.mxu0 0.0
        %2014 = vmatpush1.xpose.msra.mxu0 0.0
        %2015 = vmatprep.subr.mxu0 0.0
        %2016 = vmatpush1.xpose.msra.mxu0 0.0
        %2017 = vmatprep.subr.mxu0 0.0
        %2018 = vmatpush1.xpose.msra.mxu0 0.0
        %2019 = vmatprep.subr.mxu0 0.0
        %2020 = vmatpush1.xpose.msra.mxu0 0.0
        %2021 = vmatprep.subr.mxu0 0.0
        %2022 = vmatpush1.xpose.msra.mxu0 0.0
        %2023 = vmatprep.subr.mxu0 0.0
        %2024 = vmatpush1.xpose.msra.mxu0 0.0
        %2025 = vmatprep.subr.mxu0 0.0
        %2026 = vmatpush1.xpose.msra.mxu0 0.0
        %2027 = vmatprep.subr.mxu0 0.0
        %2028 = vmatpush1.xpose.msra.mxu0 0.0
        %2029 = vmatprep.subr.mxu0 0.0
        %2030 = vmatpush1.xpose.msra.mxu0 0.0
        %2031 = vmatprep.subr.mxu0 0.0
        %2032 = vmatpush1.xpose.msra.mxu0 0.0
        %2033 = vmatprep.subr.mxu0 0.0
        %2034 = vmatpush1.xpose.msra.mxu0 0.0
        %2035 = vmatprep.subr.mxu0 0.0
        %2036 = vmatpush1.xpose.msra.mxu0 0.0
        %2037 = vmatprep.subr.mxu0 0.0
        %2038 = vmatpush1.xpose.msra.mxu0 0.0
        %2039 = vmatprep.mubr.f32.mxu0 0.0
        %2040 = vmatmul.mubr.f32.gmra.mrb[0].mxu0 %v1967
        %v2041 = vpop.f32.mrb[0].mxu0
        %v2042 = vadd.f32 0.0, %v2041
        %v2043 = vpop.f32.mrb[0].mxu0
        %2044 = vmatprep.mubr.f32.mxu0 0.0
        %2045 = vmatmul.mubr.f32.gmra.mrb[0].mxu0 %v1969
        %v2046 = vpop.f32.mrb[0].mxu0
        %v2047 = vadd.f32 0.0, %v2046
        %v2048 = vpop.f32.mrb[0].mxu0
        %2049 = vdwg.mxu0
        %v2050 = vmul.f32 %v2042, 0.35355338
        %v2051 = vmul.f32 %v2047, 0.35355338
        %v2052 = vadd.f32 %v2050, %v1393
        %v2053 = vadd.f32 %v2051, %v1393
        %v2054 = vsel %vm1397, %v2052, -inf
        %2055 = vmax.xlane.f32.xlu0 %v2054
        %v2056 = vpop.xlane.xlu0 %2055
        %v2057 = vsel %vm1401, %v2053, -inf
        %2058 = vmax.xlane.f32.xlu0 %v2057
        %v2059 = vpop.xlane.xlu0 %2058
        %v2060 = vsub.f32 %v2052, %v2056
        %v2061 = vsub.f32 %v2053, %v2059
        %v2062 = vmul.f32 %v2060, 1.442695
        %v2063 = vpow.pop %v2062
        %v2064 = vmul.f32 %v2061, 1.442695
        %v2065 = vpow.pop %v2064
        %2066 = vrot.lane.b32.xlu0 %v1955, 40
        %v2067 = vpop.permute.xlu0 %2066
        %2068 = vrot.lane.b32.xlu0 %v1956, 40
        %v2069 = vpop.permute.xlu0 %2068
        %v2072 = vsel %vm1397, %v2063, 0
        %v2075 = vsel %vm1397, %v2065, 0
        %v2077 = vsel %vm1422, %v2069, 0
        %2079 = vmatprep.subr.mxu0 0.0
        %2080 = vmatpush1.msra.mxu0 %v2067
        %2081 = vmatprep.subr.mxu0 0.0
        %2082 = vmatpush1.msra.mxu0 %v2077
        %2083 = vmatprep.subr.mxu0 0.0
        %2084 = vmatpush1.msra.mxu0 0.0
        %2085 = vmatprep.subr.mxu0 0.0
        %2086 = vmatpush1.msra.mxu0 0.0
        %2087 = vmatprep.subr.mxu0 0.0
        %2088 = vmatpush1.msra.mxu0 0.0
        %2089 = vmatprep.subr.mxu0 0.0
        %2090 = vmatpush1.msra.mxu0 0.0
        %2091 = vmatprep.subr.mxu0 0.0
        %2092 = vmatpush1.msra.mxu0 0.0
        %2093 = vmatprep.subr.mxu0 0.0
        %2094 = vmatpush1.msra.mxu0 0.0
        %2095 = vmatprep.subr.mxu0 0.0
        %2096 = vmatpush1.msra.mxu0 0.0
        %2097 = vmatprep.subr.mxu0 0.0
        %2098 = vmatpush1.msra.mxu0 0.0
        %2099 = vmatprep.subr.mxu0 0.0
        %2100 = vmatpush1.msra.mxu0 0.0
        %2101 = vmatprep.subr.mxu0 0.0
        %2102 = vmatpush1.msra.mxu0 0.0
        %2103 = vmatprep.subr.mxu0 0.0
        %2104 = vmatpush1.msra.mxu0 0.0
        %2105 = vmatprep.subr.mxu0 0.0
        %2106 = vmatpush1.msra.mxu0 0.0
        %2107 = vmatprep.subr.mxu0 0.0
        %2108 = vmatpush1.msra.mxu0 0.0
        %2109 = vmatprep.subr.mxu0 0.0
        %2110 = vmatpush1.msra.mxu0 0.0
        %2111 = vmatprep.subr.mxu0 0.0
        %2112 = vmatpush1.msra.mxu0 0.0
        %2113 = vmatprep.subr.mxu0 0.0
        %2114 = vmatpush1.msra.mxu0 0.0
        %2115 = vmatprep.subr.mxu0 0.0
        %2116 = vmatpush1.msra.mxu0 0.0
        %2117 = vmatprep.subr.mxu0 0.0
        %2118 = vmatpush1.msra.mxu0 0.0
        %2119 = vmatprep.subr.mxu0 0.0
        %2120 = vmatpush1.msra.mxu0 0.0
        %2121 = vmatprep.subr.mxu0 0.0
        %2122 = vmatpush1.msra.mxu0 0.0
        %2123 = vmatprep.subr.mxu0 0.0
        %2124 = vmatpush1.msra.mxu0 0.0
        %2125 = vmatprep.subr.mxu0 0.0
        %2126 = vmatpush1.msra.mxu0 0.0
        %2127 = vmatprep.subr.mxu0 0.0
        %2128 = vmatpush1.msra.mxu0 0.0
        %2129 = vmatprep.subr.mxu0 0.0
        %2130 = vmatpush1.msra.mxu0 0.0
        %2131 = vmatprep.subr.mxu0 0.0
        %2132 = vmatpush1.msra.mxu0 0.0
        %2133 = vmatprep.subr.mxu0 0.0
        %2134 = vmatpush1.msra.mxu0 0.0
        %2135 = vmatprep.subr.mxu0 0.0
        %2136 = vmatpush1.msra.mxu0 0.0
        %2137 = vmatprep.subr.mxu0 0.0
        %2138 = vmatpush1.msra.mxu0 0.0
        %2139 = vmatprep.subr.mxu0 0.0
        %2140 = vmatpush1.msra.mxu0 0.0
        %2141 = vmatprep.subr.mxu0 0.0
        %2142 = vmatpush1.msra.mxu0 0.0
        %2143 = vmatprep.mubr.f32.mxu0 0.0
        %2144 = vmatmul.mubr.f32.gmra.mrb[0].mxu0 %v2072
        %v2145 = vpop.f32.mrb[0].mxu0
        %v2146 = vadd.f32 0.0, %v2145
        %v2147 = vpop.f32.mrb[0].mxu0
        %2148 = vmatprep.mubr.f32.mxu0 0.0
        %2149 = vmatmul.mubr.f32.gmra.mrb[0].mxu0 %v2075
        %v2150 = vpop.f32.mrb[0].mxu0
        %v2151 = vadd.f32 0.0, %v2150
        %v2152 = vpop.f32.mrb[0].mxu0
        %2153 = vdwg.mxu0
        %v2154 = vsel %vm1397, %v2063, 0.0
        %2155 = vadd.xlane.f32.xlu0 %v2154
        %v2156 = vpop.xlane.xlu0 %2155
        %v2157 = vsel %vm1401, %v2065, 0.0
        %2158 = vadd.xlane.f32.xlu0 %v2157
        %v2159 = vpop.xlane.xlu0 %2158
        %v2160 = vrcp.pop %v2156
        %v2161 = vrcp.pop %v2159
        %v2162 = vmul.f32 %v2146, %v2160
        %v2163 = vmul.f32 %v2151, %v2161
        %2166 = vrot.lane.b32.xlu0 %v2162, 24
        %v2167 = vpop.permute.xlu0 %2166
        %2168 = vrot.lane.b32.xlu0 %v2163, 24
        %v2169 = vpop.permute.xlu0 %2168
        %vm2172 = vcmask 261312
        %2173 = vst.msk [vmem:[#allocation3] sm:$0xff] %vm2172, %v2167
        %vm2174 = vcmask 254144
        %2175 = vst.msk [vmem:[#allocation3 + $0x8] sm:$0x1] %vm2174, %v2169
        %v2176 = vld [vmem:[#allocation3] sm:$0xff]
        %v2177 = vld [vmem:[#allocation3 + $0x8] sm:$0x1]
        %v2178 = vld [vmem:[%s14] sm:$0xff]
        %v2179 = vld [vmem:[%s14 + $0x8] sm:$0xff]
        %v2180 = vld [vmem:[%s14 + $0x10] sm:$0xff]
        %v2181 = vld [vmem:[%s14 + $0x18] sm:$0xff]
        %v2182 = vld [vmem:[#allocation18] sm:$0x1]
        %v2184 = vlaneseq
        %v2185 = vshrl.u32 %v2184, 7
        %v2186 = vsub.s32 0, %v2185
        %v2187 = vrot.slane %v2182, %v2186
        %v2190 = vsel %vm946, %v2176, 0
        %v2193 = vsel %vm946, %v2177, 0
        %2195 = vmatprep.subr.mxu0 0.0
        %2196 = vmatpush1.msra.mxu0 %v2178
        %2197 = vmatprep.subr.mxu0 0.0
        %2198 = vmatpush1.msra.mxu0 %v2179
        %2199 = vmatprep.subr.mxu0 0.0
        %2200 = vmatpush1.msra.mxu0 %v2180
        %2201 = vmatprep.subr.mxu0 0.0
        %2202 = vmatpush1.msra.mxu0 %v2181
        %2203 = vmatprep.subr.mxu0 0.0
        %2204 = vmatpush1.msra.mxu0 0.0
        %2205 = vmatprep.subr.mxu0 0.0
        %2206 = vmatpush1.msra.mxu0 0.0
        %2207 = vmatprep.subr.mxu0 0.0
        %2208 = vmatpush1.msra.mxu0 0.0
        %2209 = vmatprep.subr.mxu0 0.0
        %2210 = vmatpush1.msra.mxu0 0.0
        %2211 = vmatprep.subr.mxu0 0.0
        %2212 = vmatpush1.msra.mxu0 0.0
        %2213 = vmatprep.subr.mxu0 0.0
        %2214 = vmatpush1.msra.mxu0 0.0
        %2215 = vmatprep.subr.mxu0 0.0
        %2216 = vmatpush1.msra.mxu0 0.0
        %2217 = vmatprep.subr.mxu0 0.0
        %2218 = vmatpush1.msra.mxu0 0.0
        %2219 = vmatprep.subr.mxu0 0.0
        %2220 = vmatpush1.msra.mxu0 0.0
        %2221 = vmatprep.subr.mxu0 0.0
        %2222 = vmatpush1.msra.mxu0 0.0
        %2223 = vmatprep.subr.mxu0 0.0
        %2224 = vmatpush1.msra.mxu0 0.0
        %2225 = vmatprep.subr.mxu0 0.0
        %2226 = vmatpush1.msra.mxu0 0.0
        %2227 = vmatprep.subr.mxu0 0.0
        %2228 = vmatpush1.msra.mxu0 0.0
        %2229 = vmatprep.subr.mxu0 0.0
        %2230 = vmatpush1.msra.mxu0 0.0
        %2231 = vmatprep.subr.mxu0 0.0
        %2232 = vmatpush1.msra.mxu0 0.0
        %2233 = vmatprep.subr.mxu0 0.0
        %2234 = vmatpush1.msra.mxu0 0.0
        %2235 = vmatprep.subr.mxu0 0.0
        %2236 = vmatpush1.msra.mxu0 0.0
        %2237 = vmatprep.subr.mxu0 0.0
        %2238 = vmatpush1.msra.mxu0 0.0
        %2239 = vmatprep.subr.mxu0 0.0
        %2240 = vmatpush1.msra.mxu0 0.0
        %2241 = vmatprep.subr.mxu0 0.0
        %2242 = vmatpush1.msra.mxu0 0.0
        %2243 = vmatprep.subr.mxu0 0.0
        %2244 = vmatpush1.msra.mxu0 0.0
        %2245 = vmatprep.subr.mxu0 0.0
        %2246 = vmatpush1.msra.mxu0 0.0
        %2247 = vmatprep.subr.mxu0 0.0
        %2248 = vmatpush1.msra.mxu0 0.0
        %2249 = vmatprep.subr.mxu0 0.0
        %2250 = vmatpush1.msra.mxu0 0.0
        %2251 = vmatprep.subr.mxu0 0.0
        %2252 = vmatpush1.msra.mxu0 0.0
        %2253 = vmatprep.subr.mxu0 0.0
        %2254 = vmatpush1.msra.mxu0 0.0
        %2255 = vmatprep.subr.mxu0 0.0
        %2256 = vmatpush1.msra.mxu0 0.0
        %2257 = vmatprep.subr.mxu0 0.0
        %2258 = vmatpush1.msra.mxu0 0.0
        %2259 = vmatprep.mubr.f32.mxu0 0.0
        %2260 = vmatmul.mubr.f32.gmra.mrb[0].mxu0 %v2190
        %v2261 = vpop.f32.mrb[0].mxu0
        %v2262 = vadd.f32 %v2187, %v2261
        %v2263 = vpop.f32.mrb[0].mxu0
        %2264 = vmatprep.mubr.f32.mxu0 0.0
        %2265 = vmatmul.mubr.f32.gmra.mrb[0].mxu0 %v2193
        %v2266 = vpop.f32.mrb[0].mxu0
        %v2267 = vadd.f32 %v2187, %v2266
        %v2268 = vpop.f32.mrb[0].mxu0
        %2269 = vdwg.mxu0
        %v2270 = vadd.f32 %v1197, %v2262
        %v2271 = vadd.f32 %v1198, %v2267
        %v2272 = vld [vmem:[#allocation19] sm:$0x1]
        %v2273 = vld [vmem:[#allocation21] sm:$0x1]
        %v2274 = vsel %vm946, %v2270, 0.0
        %2275 = vadd.xlane.f32.xlu0 %v2274
        %v2276 = vpop.xlane.xlu0 %2275
        %v2277 = vsel %vm1191, %v2271, 0.0
        %2278 = vadd.xlane.f32.xlu0 %v2277
        %v2279 = vpop.xlane.xlu0 %2278
        %v2280 = vrcp.pop 32.0
        %v2281 = vmul.f32 %v2276, %v2280
        %v2282 = vmul.f32 %v2279, %v2280
        %v2283 = vsub.f32 %v2270, %v2281
        %v2284 = vsub.f32 %v2271, %v2282
        %v2285 = vmul.f32 %v2283, %v2283
        %v2286 = vmul.f32 %v2284, %v2284
        %v2287 = vsel %vm946, %v2285, 0.0
        %2288 = vadd.xlane.f32.xlu0 %v2287
        %v2289 = vpop.xlane.xlu0 %2288
        %v2290 = vsel %vm1191, %v2286, 0.0
        %2291 = vadd.xlane.f32.xlu0 %v2290
        %v2292 = vpop.xlane.xlu0 %2291
        %v2293 = vmul.f32 %v2289, %v2280
        %v2294 = vmul.f32 %v2292, %v2280
        %v2295 = vadd.f32 %v2293, 1e-05
        %v2296 = vadd.f32 %v2294, 1e-05
        %v2297 = vrsqrt.pop %v2295
        %v2298 = vrsqrt.pop %v2296
        %v2299 = vmul.f32 %v2283, %v2297
        %v2300 = vmul.f32 %v2284, %v2298
        %v2302 = vlaneseq
        %v2303 = vshrl.u32 %v2302, 7
        %v2304 = vsub.s32 0, %v2303
        %v2305 = vrot.slane %v2272, %v2304
        %v2307 = vmul.f32 %v2299, %v2305
        %v2308 = vmul.f32 %v2300, %v2305
        %v2310 = vlaneseq
        %v2311 = vshrl.u32 %v2310, 7
        %v2312 = vsub.s32 0, %v2311
        %v2313 = vrot.slane %v2273, %v2312
        %v2315 = vadd.f32 %v2307, %v2313
        %v2316 = vadd.f32 %v2308, %v2313
        %v2317 = vld [vmem:[%s18] sm:$0xff]
        %v2318 = vld [vmem:[%s18 + $0x8] sm:$0xff]
        %v2319 = vld [vmem:[%s18 + $0x10] sm:$0xff]
        %v2320 = vld [vmem:[%s18 + $0x18] sm:$0xff]
        %v2321 = vld [vmem:[#allocation22] sm:$0x1]
        %v2323 = vlaneseq
        %v2324 = vshrl.u32 %v2323, 7
        %v2325 = vsub.s32 0, %v2324
        %v2326 = vrot.slane %v2321, %v2325
        %v2329 = vsel %vm946, %v2315, 0
        %v2332 = vsel %vm946, %v2316, 0
        %2334 = vmatprep.subr.mxu0 0.0
        %2335 = vmatpush1.msra.mxu0 %v2317
        %2336 = vmatprep.subr.mxu0 0.0
        %2337 = vmatpush1.msra.mxu0 %v2318
        %2338 = vmatprep.subr.mxu0 0.0
        %2339 = vmatpush1.msra.mxu0 %v2319
        %2340 = vmatprep.subr.mxu0 0.0
        %2341 = vmatpush1.msra.mxu0 %v2320
        %2342 = vmatprep.subr.mxu0 0.0
        %2343 = vmatpush1.msra.mxu0 0.0
        %2344 = vmatprep.subr.mxu0 0.0
        %2345 = vmatpush1.msra.mxu0 0.0
        %2346 = vmatprep.subr.mxu0 0.0
        %2347 = vmatpush1.msra.mxu0 0.0
        %2348 = vmatprep.subr.mxu0 0.0
        %2349 = vmatpush1.msra.mxu0 0.0
        %2350 = vmatprep.subr.mxu0 0.0
        %2351 = vmatpush1.msra.mxu0 0.0
        %2352 = vmatprep.subr.mxu0 0.0
        %2353 = vmatpush1.msra.mxu0 0.0
        %2354 = vmatprep.subr.mxu0 0.0
        %2355 = vmatpush1.msra.mxu0 0.0
        %2356 = vmatprep.subr.mxu0 0.0
        %2357 = vmatpush1.msra.mxu0 0.0
        %2358 = vmatprep.subr.mxu0 0.0
        %2359 = vmatpush1.msra.mxu0 0.0
        %2360 = vmatprep.subr.mxu0 0.0
        %2361 = vmatpush1.msra.mxu0 0.0
        %2362 = vmatprep.subr.mxu0 0.0
        %2363 = vmatpush1.msra.mxu0 0.0
        %2364 = vmatprep.subr.mxu0 0.0
        %2365 = vmatpush1.msra.mxu0 0.0
        %2366 = vmatprep.subr.mxu0 0.0
        %2367 = vmatpush1.msra.mxu0 0.0
        %2368 = vmatprep.subr.mxu0 0.0
        %2369 = vmatpush1.msra.mxu0 0.0
        %2370 = vmatprep.subr.mxu0 0.0
        %2371 = vmatpush1.msra.mxu0 0.0
        %2372 = vmatprep.subr.mxu0 0.0
        %2373 = vmatpush1.msra.mxu0 0.0
        %2374 = vmatprep.subr.mxu0 0.0
        %2375 = vmatpush1.msra.mxu0 0.0
        %2376 = vmatprep.subr.mxu0 0.0
        %2377 = vmatpush1.msra.mxu0 0.0
        %2378 = vmatprep.subr.mxu0 0.0
        %2379 = vmatpush1.msra.mxu0 0.0
        %2380 = vmatprep.subr.mxu0 0.0
        %2381 = vmatpush1.msra.mxu0 0.0
        %2382 = vmatprep.subr.mxu0 0.0
        %2383 = vmatpush1.msra.mxu0 0.0
        %2384 = vmatprep.subr.mxu0 0.0
        %2385 = vmatpush1.msra.mxu0 0.0
        %2386 = vmatprep.subr.mxu0 0.0
        %2387 = vmatpush1.msra.mxu0 0.0
        %2388 = vmatprep.subr.mxu0 0.0
        %2389 = vmatpush1.msra.mxu0 0.0
        %2390 = vmatprep.subr.mxu0 0.0
        %2391 = vmatpush1.msra.mxu0 0.0
        %2392 = vmatprep.subr.mxu0 0.0
        %2393 = vmatpush1.msra.mxu0 0.0
        %2394 = vmatprep.subr.mxu0 0.0
        %2395 = vmatpush1.msra.mxu0 0.0
        %2396 = vmatprep.subr.mxu0 0.0
        %2397 = vmatpush1.msra.mxu0 0.0
        %2398 = vmatprep.mubr.f32.mxu0 0.0
        %2399 = vmatmul.mubr.f32.gmra.mrb[0].mxu0 %v2329
        %v2400 = vpop.f32.mrb[0].mxu0
        %v2401 = vadd.f32 %v2326, %v2400
        %v2402 = vpop.f32.mrb[0].mxu0
        %2403 = vmatprep.mubr.f32.mxu0 0.0
        %2404 = vmatmul.mubr.f32.gmra.mrb[0].mxu0 %v2332
        %v2405 = vpop.f32.mrb[0].mxu0
        %v2406 = vadd.f32 %v2326, %v2405
        %v2407 = vpop.f32.mrb[0].mxu0
        %2408 = vdwg.mxu0
        %v2409 = vmul.f32 %v2401, 0.5
        %v2410 = vmul.f32 %v2406, 0.5
        %v2411 = vmul.f32 %v2401, 0.044715
        %v2412 = vmul.f32 %v2406, 0.044715
        %v2413 = vmul.f32 %v2411, %v2401
        %v2414 = vmul.f32 %v2412, %v2406
        %v2415 = vmul.f32 %v2413, %v2401
        %v2416 = vmul.f32 %v2414, %v2406
        %v2417 = vadd.f32 %v2401, %v2415
        %v2418 = vadd.f32 %v2406, %v2416
        %v2419 = vmul.f32 %v2417, 0.7978846
        %v2420 = vmul.f32 %v2418, 0.7978846
        %v2421 = vtanh.pop %v2419
        %v2422 = vtanh.pop %v2420
        %v2423 = vadd.f32 %v2421, 1.0
        %v2424 = vadd.f32 %v2422, 1.0
        %v2425 = vmul.f32 %v2409, %v2423
        %v2426 = vmul.f32 %v2410, %v2424
        %v2427 = vld [vmem:[%s20] sm:$0xff]
        %v2428 = vld [vmem:[%s20 + $0x8] sm:$0xff]
        %v2429 = vld [vmem:[%s20 + $0x10] sm:$0xff]
        %v2430 = vld [vmem:[%s20 + $0x18] sm:$0xff]
        %v2431 = vld [vmem:[%s20 + $0x20] sm:$0xff]
        %v2432 = vld [vmem:[%s20 + $0x28] sm:$0xff]
        %v2433 = vld [vmem:[%s20 + $0x30] sm:$0xff]
        %v2434 = vld [vmem:[%s20 + $0x38] sm:$0xff]
        %v2435 = vld [vmem:[%s21] sm:$0x1]
        %v2437 = vlaneseq
        %v2438 = vshrl.u32 %v2437, 7
        %v2439 = vsub.s32 0, %v2438
        %v2440 = vrot.slane %v2435, %v2439
        %vm2442 = vcmask 523264
        %v2444 = vsel %vm2442, %v2425, 0
        %v2447 = vsel %vm2442, %v2426, 0
        %2449 = vmatprep.subr.mxu0 0.0
        %2450 = vmatpush1.msra.mxu0 %v2427
        %2451 = vmatprep.subr.mxu0 0.0
        %2452 = vmatpush1.msra.mxu0 %v2428
        %2453 = vmatprep.subr.mxu0 0.0
        %2454 = vmatpush1.msra.mxu0 %v2429
        %2455 = vmatprep.subr.mxu0 0.0
        %2456 = vmatpush1.msra.mxu0 %v2430
        %2457 = vmatprep.subr.mxu0 0.0
        %2458 = vmatpush1.msra.mxu0 %v2431
        %2459 = vmatprep.subr.mxu0 0.0
        %2460 = vmatpush1.msra.mxu0 %v2432
        %2461 = vmatprep.subr.mxu0 0.0
        %2462 = vmatpush1.msra.mxu0 %v2433
        %2463 = vmatprep.subr.mxu0 0.0
        %2464 = vmatpush1.msra.mxu0 %v2434
        %2465 = vmatprep.subr.mxu0 0.0
        %2466 = vmatpush1.msra.mxu0 0.0
        %2467 = vmatprep.subr.mxu0 0.0
        %2468 = vmatpush1.msra.mxu0 0.0
        %2469 = vmatprep.subr.mxu0 0.0
        %2470 = vmatpush1.msra.mxu0 0.0
        %2471 = vmatprep.subr.mxu0 0.0
        %2472 = vmatpush1.msra.mxu0 0.0
        %2473 = vmatprep.subr.mxu0 0.0
        %2474 = vmatpush1.msra.mxu0 0.0
        %2475 = vmatprep.subr.mxu0 0.0
        %2476 = vmatpush1.msra.mxu0 0.0
        %2477 = vmatprep.subr.mxu0 0.0
        %2478 = vmatpush1.msra.mxu0 0.0
        %2479 = vmatprep.subr.mxu0 0.0
        %2480 = vmatpush1.msra.mxu0 0.0
        %2481 = vmatprep.subr.mxu0 0.0
        %2482 = vmatpush1.msra.mxu0 0.0
        %2483 = vmatprep.subr.mxu0 0.0
        %2484 = vmatpush1.msra.mxu0 0.0
        %2485 = vmatprep.subr.mxu0 0.0
        %2486 = vmatpush1.msra.mxu0 0.0
        %2487 = vmatprep.subr.mxu0 0.0
        %2488 = vmatpush1.msra.mxu0 0.0
        %2489 = vmatprep.subr.mxu0 0.0
        %2490 = vmatpush1.msra.mxu0 0.0
        %2491 = vmatprep.subr.mxu0 0.0
        %2492 = vmatpush1.msra.mxu0 0.0
        %2493 = vmatprep.subr.mxu0 0.0
        %2494 = vmatpush1.msra.mxu0 0.0
        %2495 = vmatprep.subr.mxu0 0.0
        %2496 = vmatpush1.msra.mxu0 0.0
        %2497 = vmatprep.subr.mxu0 0.0
        %2498 = vmatpush1.msra.mxu0 0.0
        %2499 = vmatprep.subr.mxu0 0.0
        %2500 = vmatpush1.msra.mxu0 0.0
        %2501 = vmatprep.subr.mxu0 0.0
        %2502 = vmatpush1.msra.mxu0 0.0
        %2503 = vmatprep.subr.mxu0 0.0
        %2504 = vmatpush1.msra.mxu0 0.0
        %2505 = vmatprep.subr.mxu0 0.0
        %2506 = vmatpush1.msra.mxu0 0.0
        %2507 = vmatprep.subr.mxu0 0.0
        %2508 = vmatpush1.msra.mxu0 0.0
        %2509 = vmatprep.subr.mxu0 0.0
        %2510 = vmatpush1.msra.mxu0 0.0
        %2511 = vmatprep.subr.mxu0 0.0
        %2512 = vmatpush1.msra.mxu0 0.0
        %2513 = vmatprep.mubr.f32.mxu0 0.0
        %2514 = vmatmul.mubr.f32.gmra.mrb[0].mxu0 %v2444
        %v2515 = vpop.f32.mrb[0].mxu0
        %v2516 = vadd.f32 %v2440, %v2515
        %v2517 = vpop.f32.mrb[0].mxu0
        %2518 = vmatprep.mubr.f32.mxu0 0.0
        %2519 = vmatmul.mubr.f32.gmra.mrb[0].mxu0 %v2447
        %v2520 = vpop.f32.mrb[0].mxu0
        %v2521 = vadd.f32 %v2440, %v2520
        %v2522 = vpop.f32.mrb[0].mxu0
        %2523 = vdwg.mxu0
        %v2524 = vadd.f32 %v2315, %v2516
        %v2525 = vadd.f32 %v2316, %v2521
        %v2526 = vld [vmem:[%s22] sm:$0x1]
        %v2527 = vld [vmem:[%s23] sm:$0x1]
        %v2528 = vsel %vm946, %v2524, 0.0
        %2529 = vadd.xlane.f32.xlu0 %v2528
        %v2530 = vpop.xlane.xlu0 %2529
        %v2531 = vsel %vm1191, %v2525, 0.0
        %2532 = vadd.xlane.f32.xlu0 %v2531
        %v2533 = vpop.xlane.xlu0 %2532
        %v2534 = vmul.f32 %v2530, %v2280
        %v2535 = vmul.f32 %v2533, %v2280
        %v2536 = vsub.f32 %v2524, %v2534
        %v2537 = vsub.f32 %v2525, %v2535
        %v2538 = vmul.f32 %v2536, %v2536
        %v2539 = vmul.f32 %v2537, %v2537
        %v2540 = vsel %vm946, %v2538, 0.0
        %2541 = vadd.xlane.f32.xlu0 %v2540
        %v2542 = vpop.xlane.xlu0 %2541
        %v2543 = vsel %vm1191, %v2539, 0.0
        %2544 = vadd.xlane.f32.xlu0 %v2543
        %v2545 = vpop.xlane.xlu0 %2544
        %v2546 = vmul.f32 %v2542, %v2280
        %v2547 = vmul.f32 %v2545, %v2280
        %v2548 = vadd.f32 %v2546, 1e-05
        %v2549 = vadd.f32 %v2547, 1e-05
        %v2550 = vrsqrt.pop %v2548
        %v2551 = vrsqrt.pop %v2549
        %v2552 = vmul.f32 %v2536, %v2550
        %v2553 = vmul.f32 %v2537, %v2551
        %v2555 = vlaneseq
        %v2556 = vshrl.u32 %v2555, 7
        %v2557 = vsub.s32 0, %v2556
        %v2558 = vrot.slane %v2526, %v2557
        %v2560 = vmul.f32 %v2552, %v2558
        %v2561 = vmul.f32 %v2553, %v2558
        %v2563 = vlaneseq
        %v2564 = vshrl.u32 %v2563, 7
        %v2565 = vsub.s32 0, %v2564
        %v2566 = vrot.slane %v2527, %v2565
        %v2568 = vadd.f32 %v2560, %v2566
        %v2569 = vadd.f32 %v2561, %v2566
        %s2570 = scalar_lea.vmem %s12, 32
        %v2571 = vld [vmem:[%s2570] sm:$0xff]
        %v2572 = vld [vmem:[%s2570 + $0x8] sm:$0xff]
        %v2573 = vld [vmem:[%s2570 + $0x10] sm:$0xff]
        %v2574 = vld [vmem:[%s2570 + $0x18] sm:$0xff]
        %s2575 = scalar_lea.vmem [#allocation16], 1
        %v2576 = vld [vmem:[%s2575] sm:$0x1]
        %v2578 = vlaneseq
        %v2579 = vshrl.u32 %v2578, 7
        %v2580 = vsub.s32 0, %v2579
        %v2581 = vrot.slane %v2576, %v2580
        %v2584 = vsel %vm946, %v2568, 0
        %v2587 = vsel %vm946, %v2569, 0
        %2589 = vmatprep.subr.mxu0 0.0
        %2590 = vmatpush1.msra.mxu0 %v2571
        %2591 = vmatprep.subr.mxu0 0.0
        %2592 = vmatpush1.msra.mxu0 %v2572
        %2593 = vmatprep.subr.mxu0 0.0
        %2594 = vmatpush1.msra.mxu0 %v2573
        %2595 = vmatprep.subr.mxu0 0.0
        %2596 = vmatpush1.msra.mxu0 %v2574
        %2597 = vmatprep.subr.mxu0 0.0
        %2598 = vmatpush1.msra.mxu0 0.0
        %2599 = vmatprep.subr.mxu0 0.0
        %2600 = vmatpush1.msra.mxu0 0.0
        %2601 = vmatprep.subr.mxu0 0.0
        %2602 = vmatpush1.msra.mxu0 0.0
        %2603 = vmatprep.subr.mxu0 0.0
        %2604 = vmatpush1.msra.mxu0 0.0
        %2605 = vmatprep.subr.mxu0 0.0
        %2606 = vmatpush1.msra.mxu0 0.0
        %2607 = vmatprep.subr.mxu0 0.0
        %2608 = vmatpush1.msra.mxu0 0.0
        %2609 = vmatprep.subr.mxu0 0.0
        %2610 = vmatpush1.msra.mxu0 0.0
        %2611 = vmatprep.subr.mxu0 0.0
        %2612 = vmatpush1.msra.mxu0 0.0
        %2613 = vmatprep.subr.mxu0 0.0
        %2614 = vmatpush1.msra.mxu0 0.0
        %2615 = vmatprep.subr.mxu0 0.0
        %2616 = vmatpush1.msra.mxu0 0.0
        %2617 = vmatprep.subr.mxu0 0.0
        %2618 = vmatpush1.msra.mxu0 0.0
        %2619 = vmatprep.subr.mxu0 0.0
        %2620 = vmatpush1.msra.mxu0 0.0
        %2621 = vmatprep.subr.mxu0 0.0
        %2622 = vmatpush1.msra.mxu0 0.0
        %2623 = vmatprep.subr.mxu0 0.0
        %2624 = vmatpush1.msra.mxu0 0.0
        %2625 = vmatprep.subr.mxu0 0.0
        %2626 = vmatpush1.msra.mxu0 0.0
        %2627 = vmatprep.subr.mxu0 0.0
        %2628 = vmatpush1.msra.mxu0 0.0
        %2629 = vmatprep.subr.mxu0 0.0
        %2630 = vmatpush1.msra.mxu0 0.0
        %2631 = vmatprep.subr.mxu0 0.0
        %2632 = vmatpush1.msra.mxu0 0.0
        %2633 = vmatprep.subr.mxu0 0.0
        %2634 = vmatpush1.msra.mxu0 0.0
        %2635 = vmatprep.subr.mxu0 0.0
        %2636 = vmatpush1.msra.mxu0 0.0
        %2637 = vmatprep.subr.mxu0 0.0
        %2638 = vmatpush1.msra.mxu0 0.0
        %2639 = vmatprep.subr.mxu0 0.0
        %2640 = vmatpush1.msra.mxu0 0.0
        %2641 = vmatprep.subr.mxu0 0.0
        %2642 = vmatpush1.msra.mxu0 0.0
        %2643 = vmatprep.subr.mxu0 0.0
        %2644 = vmatpush1.msra.mxu0 0.0
        %2645 = vmatprep.subr.mxu0 0.0
        %2646 = vmatpush1.msra.mxu0 0.0
        %2647 = vmatprep.subr.mxu0 0.0
        %2648 = vmatpush1.msra.mxu0 0.0
        %2649 = vmatprep.subr.mxu0 0.0
        %2650 = vmatpush1.msra.mxu0 0.0
        %2651 = vmatprep.subr.mxu0 0.0
        %2652 = vmatpush1.msra.mxu0 0.0
        %2653 = vmatprep.mubr.f32.mxu0 0.0
        %2654 = vmatmul.mubr.f32.gmra.mrb[0].mxu0 %v2584
        %v2655 = vpop.f32.mrb[0].mxu0
        %v2656 = vadd.f32 %v2581, %v2655
        %v2657 = vpop.f32.mrb[0].mxu0
        %2658 = vmatprep.mubr.f32.mxu0 0.0
        %2659 = vmatmul.mubr.f32.gmra.mrb[0].mxu0 %v2587
        %v2660 = vpop.f32.mrb[0].mxu0
        %v2661 = vadd.f32 %v2581, %v2660
        %v2662 = vpop.f32.mrb[0].mxu0
        %2663 = vdwg.mxu0
        %2664 = vst.msk [vmem:[#allocation4] sm:$0xff] %vm1292, %v2656
        %2665 = vst.msk [vmem:[#allocation4 + $0x8] sm:$0x1] %vm1294, %v2661
        %v2666 = vld [vmem:[#allocation4] sm:$0xff]
        %v2667 = vld [vmem:[#allocation4 + $0x8] sm:$0x1]
        %2670 = vrot.lane.b32.xlu0 %v2666, 96
        %v2671 = vpop.permute.xlu0 %2670
        %2672 = vrot.lane.b32.xlu0 %v2667, 96
        %v2673 = vpop.permute.xlu0 %2672
        %v2674 = vsel %vm1116, %v2666, 0
        %v2676 = vsel %vm1116, %v2667, 0
        %v2678 = vsel %vm1116, %v2671, 0
        %v2680 = vsel %vm1116, %v2673, 0
        %2682 = vmatprep.subr.mxu0 0.0
        %2683 = vmatpush1.xpose.msra.mxu0 %v2678
        %2684 = vmatprep.subr.mxu0 0.0
        %2685 = vmatpush1.xpose.msra.mxu0 %v2680
        %2686 = vmatprep.subr.mxu0 0.0
        %2687 = vmatpush1.xpose.msra.mxu0 0.0
        %2688 = vmatprep.subr.mxu0 0.0
        %2689 = vmatpush1.xpose.msra.mxu0 0.0
        %2690 = vmatprep.subr.mxu0 0.0
        %2691 = vmatpush1.xpose.msra.mxu0 0.0
        %2692 = vmatprep.subr.mxu0 0.0
        %2693 = vmatpush1.xpose.msra.mxu0 0.0
        %2694 = vmatprep.subr.mxu0 0.0
        %2695 = vmatpush1.xpose.msra.mxu0 0.0
        %2696 = vmatprep.subr.mxu0 0.0
        %2697 = vmatpush1.xpose.msra.mxu0 0.0
        %2698 = vmatprep.subr.mxu0 0.0
        %2699 = vmatpush1.xpose.msra.mxu0 0.0
        %2700 = vmatprep.subr.mxu0 0.0
        %2701 = vmatpush1.xpose.msra.mxu0 0.0
        %2702 = vmatprep.subr.mxu0 0.0
        %2703 = vmatpush1.xpose.msra.mxu0 0.0
        %2704 = vmatprep.subr.mxu0 0.0
        %2705 = vmatpush1.xpose.msra.mxu0 0.0
        %2706 = vmatprep.subr.mxu0 0.0
        %2707 = vmatpush1.xpose.msra.mxu0 0.0
        %2708 = vmatprep.subr.mxu0 0.0
        %2709 = vmatpush1.xpose.msra.mxu0 0.0
        %2710 = vmatprep.subr.mxu0 0.0
        %2711 = vmatpush1.xpose.msra.mxu0 0.0
        %2712 = vmatprep.subr.mxu0 0.0
        %2713 = vmatpush1.xpose.msra.mxu0 0.0
        %2714 = vmatprep.subr.mxu0 0.0
        %2715 = vmatpush1.xpose.msra.mxu0 0.0
        %2716 = vmatprep.subr.mxu0 0.0
        %2717 = vmatpush1.xpose.msra.mxu0 0.0
        %2718 = vmatprep.subr.mxu0 0.0
        %2719 = vmatpush1.xpose.msra.mxu0 0.0
        %2720 = vmatprep.subr.mxu0 0.0
        %2721 = vmatpush1.xpose.msra.mxu0 0.0
        %2722 = vmatprep.subr.mxu0 0.0
        %2723 = vmatpush1.xpose.msra.mxu0 0.0
        %2724 = vmatprep.subr.mxu0 0.0
        %2725 = vmatpush1.xpose.msra.mxu0 0.0
        %2726 = vmatprep.subr.mxu0 0.0
        %2727 = vmatpush1.xpose.msra.mxu0 0.0
        %2728 = vmatprep.subr.mxu0 0.0
        %2729 = vmatpush1.xpose.msra.mxu0 0.0
        %2730 = vmatprep.subr.mxu0 0.0
        %2731 = vmatpush1.xpose.msra.mxu0 0.0
        %2732 = vmatprep.subr.mxu0 0.0
        %2733 = vmatpush1.xpose.msra.mxu0 0.0
        %2734 = vmatprep.subr.mxu0 0.0
        %2735 = vmatpush1.xpose.msra.mxu0 0.0
        %2736 = vmatprep.subr.mxu0 0.0
        %2737 = vmatpush1.xpose.msra.mxu0 0.0
        %2738 = vmatprep.subr.mxu0 0.0
        %2739 = vmatpush1.xpose.msra.mxu0 0.0
        %2740 = vmatprep.subr.mxu0 0.0
        %2741 = vmatpush1.xpose.msra.mxu0 0.0
        %2742 = vmatprep.subr.mxu0 0.0
        %2743 = vmatpush1.xpose.msra.mxu0 0.0
        %2744 = vmatprep.subr.mxu0 0.0
        %2745 = vmatpush1.xpose.msra.mxu0 0.0
        %2746 = vmatprep.mubr.f32.mxu0 0.0
        %2747 = vmatmul.mubr.f32.gmra.mrb[0].mxu0 %v2674
        %v2748 = vpop.f32.mrb[0].mxu0
        %v2749 = vadd.f32 0.0, %v2748
        %v2750 = vpop.f32.mrb[0].mxu0
        %2751 = vmatprep.mubr.f32.mxu0 0.0
        %2752 = vmatmul.mubr.f32.gmra.mrb[0].mxu0 %v2676
        %v2753 = vpop.f32.mrb[0].mxu0
        %v2754 = vadd.f32 0.0, %v2753
        %v2755 = vpop.f32.mrb[0].mxu0
        %2756 = vdwg.mxu0
        %v2757 = vmul.f32 %v2749, 0.35355338
        %v2758 = vmul.f32 %v2754, 0.35355338
        %v2759 = vadd.f32 %v2757, %v1393
        %v2760 = vadd.f32 %v2758, %v1393
        %v2761 = vsel %vm1397, %v2759, -inf
        %2762 = vmax.xlane.f32.xlu0 %v2761
        %v2763 = vpop.xlane.xlu0 %2762
        %v2764 = vsel %vm1401, %v2760, -inf
        %2765 = vmax.xlane.f32.xlu0 %v2764
        %v2766 = vpop.xlane.xlu0 %2765
        %v2767 = vsub.f32 %v2759, %v2763
        %v2768 = vsub.f32 %v2760, %v2766
        %v2769 = vmul.f32 %v2767, 1.442695
        %v2770 = vpow.pop %v2769
        %v2771 = vmul.f32 %v2768, 1.442695
        %v2772 = vpow.pop %v2771
        %2773 = vrot.lane.b32.xlu0 %v2666, 64
        %v2774 = vpop.permute.xlu0 %2773
        %2775 = vrot.lane.b32.xlu0 %v2667, 64
        %v2776 = vpop.permute.xlu0 %2775
        %v2779 = vsel %vm1397, %v2770, 0
        %v2782 = vsel %vm1397, %v2772, 0
        %v2784 = vsel %vm1422, %v2776, 0
        %2786 = vmatprep.subr.mxu0 0.0
        %2787 = vmatpush1.msra.mxu0 %v2774
        %2788 = vmatprep.subr.mxu0 0.0
        %2789 = vmatpush1.msra.mxu0 %v2784
        %2790 = vmatprep.subr.mxu0 0.0
        %2791 = vmatpush1.msra.mxu0 0.0
        %2792 = vmatprep.subr.mxu0 0.0
        %2793 = vmatpush1.msra.mxu0 0.0
        %2794 = vmatprep.subr.mxu0 0.0
        %2795 = vmatpush1.msra.mxu0 0.0
        %2796 = vmatprep.subr.mxu0 0.0
        %2797 = vmatpush1.msra.mxu0 0.0
        %2798 = vmatprep.subr.mxu0 0.0
        %2799 = vmatpush1.msra.mxu0 0.0
        %2800 = vmatprep.subr.mxu0 0.0
        %2801 = vmatpush1.msra.mxu0 0.0
        %2802 = vmatprep.subr.mxu0 0.0
        %2803 = vmatpush1.msra.mxu0 0.0
        %2804 = vmatprep.subr.mxu0 0.0
        %2805 = vmatpush1.msra.mxu0 0.0
        %2806 = vmatprep.subr.mxu0 0.0
        %2807 = vmatpush1.msra.mxu0 0.0
        %2808 = vmatprep.subr.mxu0 0.0
        %2809 = vmatpush1.msra.mxu0 0.0
        %2810 = vmatprep.subr.mxu0 0.0
        %2811 = vmatpush1.msra.mxu0 0.0
        %2812 = vmatprep.subr.mxu0 0.0
        %2813 = vmatpush1.msra.mxu0 0.0
        %2814 = vmatprep.subr.mxu0 0.0
        %2815 = vmatpush1.msra.mxu0 0.0
        %2816 = vmatprep.subr.mxu0 0.0
        %2817 = vmatpush1.msra.mxu0 0.0
        %2818 = vmatprep.subr.mxu0 0.0
        %2819 = vmatpush1.msra.mxu0 0.0
        %2820 = vmatprep.subr.mxu0 0.0
        %2821 = vmatpush1.msra.mxu0 0.0
        %2822 = vmatprep.subr.mxu0 0.0
        %2823 = vmatpush1.msra.mxu0 0.0
        %2824 = vmatprep.subr.mxu0 0.0
        %2825 = vmatpush1.msra.mxu0 0.0
        %2826 = vmatprep.subr.mxu0 0.0
        %2827 = vmatpush1.msra.mxu0 0.0
        %2828 = vmatprep.subr.mxu0 0.0
        %2829 = vmatpush1.msra.mxu0 0.0
        %2830 = vmatprep.subr.mxu0 0.0
        %2831 = vmatpush1.msra.mxu0 0.0
        %2832 = vmatprep.subr.mxu0 0.0
        %2833 = vmatpush1.msra.mxu0 0.0
        %2834 = vmatprep.subr.mxu0 0.0
        %2835 = vmatpush1.msra.mxu0 0.0
        %2836 = vmatprep.subr.mxu0 0.0
        %2837 = vmatpush1.msra.mxu0 0.0
        %2838 = vmatprep.subr.mxu0 0.0
        %2839 = vmatpush1.msra.mxu0 0.0
        %2840 = vmatprep.subr.mxu0 0.0
        %2841 = vmatpush1.msra.mxu0 0.0
        %2842 = vmatprep.subr.mxu0 0.0
        %2843 = vmatpush1.msra.mxu0 0.0
        %2844 = vmatprep.subr.mxu0 0.0
        %2845 = vmatpush1.msra.mxu0 0.0
        %2846 = vmatprep.subr.mxu0 0.0
        %2847 = vmatpush1.msra.mxu0 0.0
        %2848 = vmatprep.subr.mxu0 0.0
        %2849 = vmatpush1.msra.mxu0 0.0
        %2850 = vmatprep.mubr.f32.mxu0 0.0
        %2851 = vmatmul.mubr.f32.gmra.mrb[0].mxu0 %v2779
        %v2852 = vpop.f32.mrb[0].mxu0
        %v2853 = vadd.f32 0.0, %v2852
        %v2854 = vpop.f32.mrb[0].mxu0
        %2855 = vmatprep.mubr.f32.mxu0 0.0
        %2856 = vmatmul.mubr.f32.gmra.mrb[0].mxu0 %v2782
        %v2857 = vpop.f32.mrb[0].mxu0
        %v2858 = vadd.f32 0.0, %v2857
        %v2859 = vpop.f32.mrb[0].mxu0
        %2860 = vdwg.mxu0
        %v2861 = vsel %vm1397, %v2770, 0.0
        %2862 = vadd.xlane.f32.xlu0 %v2861
        %v2863 = vpop.xlane.xlu0 %2862
        %v2864 = vsel %vm1401, %v2772, 0.0
        %2865 = vadd.xlane.f32.xlu0 %v2864
        %v2866 = vpop.xlane.xlu0 %2865
        %v2867 = vrcp.pop %v2863
        %v2868 = vrcp.pop %v2866
        %v2869 = vmul.f32 %v2853, %v2867
        %v2870 = vmul.f32 %v2858, %v2868
        %2871 = vst.msk [vmem:[#allocation3] sm:$0xff] %vm1116, %v2869
        %2872 = vst.msk [vmem:[#allocation3 + $0x8] sm:$0x1] %vm1511, %v2870
        %v2873 = vld [vmem:[#allocation4] sm:$0xff]
        %v2874 = vld [vmem:[#allocation4 + $0x8] sm:$0x1]
        %2877 = vrot.lane.b32.xlu0 %v2873, 120
        %v2878 = vpop.permute.xlu0 %2877
        %2879 = vrot.lane.b32.xlu0 %v2874, 120
        %v2880 = vpop.permute.xlu0 %2879
        %2881 = vrot.lane.b32.xlu0 %v2873, 88
        %v2882 = vpop.permute.xlu0 %2881
        %2883 = vrot.lane.b32.xlu0 %v2874, 88
        %v2884 = vpop.permute.xlu0 %2883
        %v2885 = vsel %vm1116, %v2878, 0
        %v2887 = vsel %vm1116, %v2880, 0
        %v2889 = vsel %vm1116, %v2882, 0
        %v2891 = vsel %vm1116, %v2884, 0
        %2893 = vmatprep.subr.mxu0 0.0
        %2894 = vmatpush1.xpose.msra.mxu0 %v2889
        %2895 = vmatprep.subr.mxu0 0.0
        %2896 = vmatpush1.xpose.msra.mxu0 %v2891
        %2897 = vmatprep.subr.mxu0 0.0
        %2898 = vmatpush1.xpose.msra.mxu0 0.0
        %2899 = vmatprep.subr.mxu0 0.0
        %2900 = vmatpush1.xpose.msra.mxu0 0.0
        %2901 = vmatprep.subr.mxu0 0.0
        %2902 = vmatpush1.xpose.msra.mxu0 0.0
        %2903 = vmatprep.subr.mxu0 0.0
        %2904 = vmatpush1.xpose.msra.mxu0 0.0
        %2905 = vmatprep.subr.mxu0 0.0
        %2906 = vmatpush1.xpose.msra.mxu0 0.0
        %2907 = vmatprep.subr.mxu0 0.0
        %2908 = vmatpush1.xpose.msra.mxu0 0.0
        %2909 = vmatprep.subr.mxu0 0.0
        %2910 = vmatpush1.xpose.msra.mxu0 0.0
        %2911 = vmatprep.subr.mxu0 0.0
        %2912 = vmatpush1.xpose.msra.mxu0 0.0
        %2913 = vmatprep.subr.mxu0 0.0
        %2914 = vmatpush1.xpose.msra.mxu0 0.0
        %2915 = vmatprep.subr.mxu0 0.0
        %2916 = vmatpush1.xpose.msra.mxu0 0.0
        %2917 = vmatprep.subr.mxu0 0.0
        %2918 = vmatpush1.xpose.msra.mxu0 0.0
        %2919 = vmatprep.subr.mxu0 0.0
        %2920 = vmatpush1.xpose.msra.mxu0 0.0
        %2921 = vmatprep.subr.mxu0 0.0
        %2922 = vmatpush1.xpose.msra.mxu0 0.0
        %2923 = vmatprep.subr.mxu0 0.0
        %2924 = vmatpush1.xpose.msra.mxu0 0.0
        %2925 = vmatprep.subr.mxu0 0.0
        %2926 = vmatpush1.xpose.msra.mxu0 0.0
        %2927 = vmatprep.subr.mxu0 0.0
        %2928 = vmatpush1.xpose.msra.mxu0 0.0
        %2929 = vmatprep.subr.mxu0 0.0
        %2930 = vmatpush1.xpose.msra.mxu0 0.0
        %2931 = vmatprep.subr.mxu0 0.0
        %2932 = vmatpush1.xpose.msra.mxu0 0.0
        %2933 = vmatprep.subr.mxu0 0.0
        %2934 = vmatpush1.xpose.msra.mxu0 0.0
        %2935 = vmatprep.subr.mxu0 0.0
        %2936 = vmatpush1.xpose.msra.mxu0 0.0
        %2937 = vmatprep.subr.mxu0 0.0
        %2938 = vmatpush1.xpose.msra.mxu0 0.0
        %2939 = vmatprep.subr.mxu0 0.0
        %2940 = vmatpush1.xpose.msra.mxu0 0.0
        %2941 = vmatprep.subr.mxu0 0.0
        %2942 = vmatpush1.xpose.msra.mxu0 0.0
        %2943 = vmatprep.subr.mxu0 0.0
        %2944 = vmatpush1.xpose.msra.mxu0 0.0
        %2945 = vmatprep.subr.mxu0 0.0
        %2946 = vmatpush1.xpose.msra.mxu0 0.0
        %2947 = vmatprep.subr.mxu0 0.0
        %2948 = vmatpush1.xpose.msra.mxu0 0.0
        %2949 = vmatprep.subr.mxu0 0.0
        %2950 = vmatpush1.xpose.msra.mxu0 0.0
        %2951 = vmatprep.subr.mxu0 0.0
        %2952 = vmatpush1.xpose.msra.mxu0 0.0
        %2953 = vmatprep.subr.mxu0 0.0
        %2954 = vmatpush1.xpose.msra.mxu0 0.0
        %2955 = vmatprep.subr.mxu0 0.0
        %2956 = vmatpush1.xpose.msra.mxu0 0.0
        %2957 = vmatprep.mubr.f32.mxu0 0.0
        %2958 = vmatmul.mubr.f32.gmra.mrb[0].mxu0 %v2885
        %v2959 = vpop.f32.mrb[0].mxu0
        %v2960 = vadd.f32 0.0, %v2959
        %v2961 = vpop.f32.mrb[0].mxu0
        %2962 = vmatprep.mubr.f32.mxu0 0.0
        %2963 = vmatmul.mubr.f32.gmra.mrb[0].mxu0 %v2887
        %v2964 = vpop.f32.mrb[0].mxu0
        %v2965 = vadd.f32 0.0, %v2964
        %v2966 = vpop.f32.mrb[0].mxu0
        %2967 = vdwg.mxu0
        %v2968 = vmul.f32 %v2960, 0.35355338
        %v2969 = vmul.f32 %v2965, 0.35355338
        %v2970 = vadd.f32 %v2968, %v1393
        %v2971 = vadd.f32 %v2969, %v1393
        %v2972 = vsel %vm1397, %v2970, -inf
        %2973 = vmax.xlane.f32.xlu0 %v2972
        %v2974 = vpop.xlane.xlu0 %2973
        %v2975 = vsel %vm1401, %v2971, -inf
        %2976 = vmax.xlane.f32.xlu0 %v2975
        %v2977 = vpop.xlane.xlu0 %2976
        %v2978 = vsub.f32 %v2970, %v2974
        %v2979 = vsub.f32 %v2971, %v2977
        %v2980 = vmul.f32 %v2978, 1.442695
        %v2981 = vpow.pop %v2980
        %v2982 = vmul.f32 %v2979, 1.442695
        %v2983 = vpow.pop %v2982
        %2984 = vrot.lane.b32.xlu0 %v2873, 56
        %v2985 = vpop.permute.xlu0 %2984
        %2986 = vrot.lane.b32.xlu0 %v2874, 56
        %v2987 = vpop.permute.xlu0 %2986
        %v2990 = vsel %vm1397, %v2981, 0
        %v2993 = vsel %vm1397, %v2983, 0
        %v2995 = vsel %vm1422, %v2987, 0
        %2997 = vmatprep.subr.mxu0 0.0
        %2998 = vmatpush1.msra.mxu0 %v2985
        %2999 = vmatprep.subr.mxu0 0.0
        %3000 = vmatpush1.msra.mxu0 %v2995
        %3001 = vmatprep.subr.mxu0 0.0
        %3002 = vmatpush1.msra.mxu0 0.0
        %3003 = vmatprep.subr.mxu0 0.0
        %3004 = vmatpush1.msra.mxu0 0.0
        %3005 = vmatprep.subr.mxu0 0.0
        %3006 = vmatpush1.msra.mxu0 0.0
        %3007 = vmatprep.subr.mxu0 0.0
        %3008 = vmatpush1.msra.mxu0 0.0
        %3009 = vmatprep.subr.mxu0 0.0
        %3010 = vmatpush1.msra.mxu0 0.0
        %3011 = vmatprep.subr.mxu0 0.0
        %3012 = vmatpush1.msra.mxu0 0.0
        %3013 = vmatprep.subr.mxu0 0.0
        %3014 = vmatpush1.msra.mxu0 0.0
        %3015 = vmatprep.subr.mxu0 0.0
        %3016 = vmatpush1.msra.mxu0 0.0
        %3017 = vmatprep.subr.mxu0 0.0
        %3018 = vmatpush1.msra.mxu0 0.0
        %3019 = vmatprep.subr.mxu0 0.0
        %3020 = vmatpush1.msra.mxu0 0.0
        %3021 = vmatprep.subr.mxu0 0.0
        %3022 = vmatpush1.msra.mxu0 0.0
        %3023 = vmatprep.subr.mxu0 0.0
        %3024 = vmatpush1.msra.mxu0 0.0
        %3025 = vmatprep.subr.mxu0 0.0
        %3026 = vmatpush1.msra.mxu0 0.0
        %3027 = vmatprep.subr.mxu0 0.0
        %3028 = vmatpush1.msra.mxu0 0.0
        %3029 = vmatprep.subr.mxu0 0.0
        %3030 = vmatpush1.msra.mxu0 0.0
        %3031 = vmatprep.subr.mxu0 0.0
        %3032 = vmatpush1.msra.mxu0 0.0
        %3033 = vmatprep.subr.mxu0 0.0
        %3034 = vmatpush1.msra.mxu0 0.0
        %3035 = vmatprep.subr.mxu0 0.0
        %3036 = vmatpush1.msra.mxu0 0.0
        %3037 = vmatprep.subr.mxu0 0.0
        %3038 = vmatpush1.msra.mxu0 0.0
        %3039 = vmatprep.subr.mxu0 0.0
        %3040 = vmatpush1.msra.mxu0 0.0
        %3041 = vmatprep.subr.mxu0 0.0
        %3042 = vmatpush1.msra.mxu0 0.0
        %3043 = vmatprep.subr.mxu0 0.0
        %3044 = vmatpush1.msra.mxu0 0.0
        %3045 = vmatprep.subr.mxu0 0.0
        %3046 = vmatpush1.msra.mxu0 0.0
        %3047 = vmatprep.subr.mxu0 0.0
        %3048 = vmatpush1.msra.mxu0 0.0
        %3049 = vmatprep.subr.mxu0 0.0
        %3050 = vmatpush1.msra.mxu0 0.0
        %3051 = vmatprep.subr.mxu0 0.0
        %3052 = vmatpush1.msra.mxu0 0.0
        %3053 = vmatprep.subr.mxu0 0.0
        %3054 = vmatpush1.msra.mxu0 0.0
        %3055 = vmatprep.subr.mxu0 0.0
        %3056 = vmatpush1.msra.mxu0 0.0
        %3057 = vmatprep.subr.mxu0 0.0
        %3058 = vmatpush1.msra.mxu0 0.0
        %3059 = vmatprep.subr.mxu0 0.0
        %3060 = vmatpush1.msra.mxu0 0.0
        %3061 = vmatprep.mubr.f32.mxu0 0.0
        %3062 = vmatmul.mubr.f32.gmra.mrb[0].mxu0 %v2990
        %v3063 = vpop.f32.mrb[0].mxu0
        %v3064 = vadd.f32 0.0, %v3063
        %v3065 = vpop.f32.mrb[0].mxu0
        %3066 = vmatprep.mubr.f32.mxu0 0.0
        %3067 = vmatmul.mubr.f32.gmra.mrb[0].mxu0 %v2993
        %v3068 = vpop.f32.mrb[0].mxu0
        %v3069 = vadd.f32 0.0, %v3068
        %v3070 = vpop.f32.mrb[0].mxu0
        %3071 = vdwg.mxu0
        %v3072 = vsel %vm1397, %v2981, 0.0
        %3073 = vadd.xlane.f32.xlu0 %v3072
        %v3074 = vpop.xlane.xlu0 %3073
        %v3075 = vsel %vm1401, %v2983, 0.0
        %3076 = vadd.xlane.f32.xlu0 %v3075
        %v3077 = vpop.xlane.xlu0 %3076
        %v3078 = vrcp.pop %v3074
        %v3079 = vrcp.pop %v3077
        %v3080 = vmul.f32 %v3064, %v3078
        %v3081 = vmul.f32 %v3069, %v3079
        %3084 = vrot.lane.b32.xlu0 %v3080, 8
        %v3085 = vpop.permute.xlu0 %3084
        %3086 = vrot.lane.b32.xlu0 %v3081, 8
        %v3087 = vpop.permute.xlu0 %3086
        %3090 = vst.msk [vmem:[#allocation3] sm:$0xff] %vm1730, %v3085
        %3091 = vst.msk [vmem:[#allocation3 + $0x8] sm:$0x1] %vm1732, %v3087
        %v3092 = vld [vmem:[#allocation4] sm:$0xff]
        %v3093 = vld [vmem:[#allocation4 + $0x8] sm:$0x1]
        %3096 = vrot.lane.b32.xlu0 %v3092, 112
        %v3097 = vpop.permute.xlu0 %3096
        %3098 = vrot.lane.b32.xlu0 %v3093, 112
        %v3099 = vpop.permute.xlu0 %3098
        %3100 = vrot.lane.b32.xlu0 %v3092, 80
        %v3101 = vpop.permute.xlu0 %3100
        %3102 = vrot.lane.b32.xlu0 %v3093, 80
        %v3103 = vpop.permute.xlu0 %3102
        %v3104 = vsel %vm1116, %v3097, 0
        %v3106 = vsel %vm1116, %v3099, 0
        %v3108 = vsel %vm1116, %v3101, 0
        %v3110 = vsel %vm1116, %v3103, 0
        %3112 = vmatprep.subr.mxu0 0.0
        %3113 = vmatpush1.xpose.msra.mxu0 %v3108
        %3114 = vmatprep.subr.mxu0 0.0
        %3115 = vmatpush1.xpose.msra.mxu0 %v3110
        %3116 = vmatprep.subr.mxu0 0.0
        %3117 = vmatpush1.xpose.msra.mxu0 0.0
        %3118 = vmatprep.subr.mxu0 0.0
        %3119 = vmatpush1.xpose.msra.mxu0 0.0
        %3120 = vmatprep.subr.mxu0 0.0
        %3121 = vmatpush1.xpose.msra.mxu0 0.0
        %3122 = vmatprep.subr.mxu0 0.0
        %3123 = vmatpush1.xpose.msra.mxu0 0.0
        %3124 = vmatprep.subr.mxu0 0.0
        %3125 = vmatpush1.xpose.msra.mxu0 0.0
        %3126 = vmatprep.subr.mxu0 0.0
        %3127 = vmatpush1.xpose.msra.mxu0 0.0
        %3128 = vmatprep.subr.mxu0 0.0
        %3129 = vmatpush1.xpose.msra.mxu0 0.0
        %3130 = vmatprep.subr.mxu0 0.0
        %3131 = vmatpush1.xpose.msra.mxu0 0.0
        %3132 = vmatprep.subr.mxu0 0.0
        %3133 = vmatpush1.xpose.msra.mxu0 0.0
        %3134 = vmatprep.subr.mxu0 0.0
        %3135 = vmatpush1.xpose.msra.mxu0 0.0
        %3136 = vmatprep.subr.mxu0 0.0
        %3137 = vmatpush1.xpose.msra.mxu0 0.0
        %3138 = vmatprep.subr.mxu0 0.0
        %3139 = vmatpush1.xpose.msra.mxu0 0.0
        %3140 = vmatprep.subr.mxu0 0.0
        %3141 = vmatpush1.xpose.msra.mxu0 0.0
        %3142 = vmatprep.subr.mxu0 0.0
        %3143 = vmatpush1.xpose.msra.mxu0 0.0
        %3144 = vmatprep.subr.mxu0 0.0
        %3145 = vmatpush1.xpose.msra.mxu0 0.0
        %3146 = vmatprep.subr.mxu0 0.0
        %3147 = vmatpush1.xpose.msra.mxu0 0.0
        %3148 = vmatprep.subr.mxu0 0.0
        %3149 = vmatpush1.xpose.msra.mxu0 0.0
        %3150 = vmatprep.subr.mxu0 0.0
        %3151 = vmatpush1.xpose.msra.mxu0 0.0
        %3152 = vmatprep.subr.mxu0 0.0
        %3153 = vmatpush1.xpose.msra.mxu0 0.0
        %3154 = vmatprep.subr.mxu0 0.0
        %3155 = vmatpush1.xpose.msra.mxu0 0.0
        %3156 = vmatprep.subr.mxu0 0.0
        %3157 = vmatpush1.xpose.msra.mxu0 0.0
        %3158 = vmatprep.subr.mxu0 0.0
        %3159 = vmatpush1.xpose.msra.mxu0 0.0
        %3160 = vmatprep.subr.mxu0 0.0
        %3161 = vmatpush1.xpose.msra.mxu0 0.0
        %3162 = vmatprep.subr.mxu0 0.0
        %3163 = vmatpush1.xpose.msra.mxu0 0.0
        %3164 = vmatprep.subr.mxu0 0.0
        %3165 = vmatpush1.xpose.msra.mxu0 0.0
        %3166 = vmatprep.subr.mxu0 0.0
        %3167 = vmatpush1.xpose.msra.mxu0 0.0
        %3168 = vmatprep.subr.mxu0 0.0
        %3169 = vmatpush1.xpose.msra.mxu0 0.0
        %3170 = vmatprep.subr.mxu0 0.0
        %3171 = vmatpush1.xpose.msra.mxu0 0.0
        %3172 = vmatprep.subr.mxu0 0.0
        %3173 = vmatpush1.xpose.msra.mxu0 0.0
        %3174 = vmatprep.subr.mxu0 0.0
        %3175 = vmatpush1.xpose.msra.mxu0 0.0
        %3176 = vmatprep.mubr.f32.mxu0 0.0
        %3177 = vmatmul.mubr.f32.gmra.mrb[0].mxu0 %v3104
        %v3178 = vpop.f32.mrb[0].mxu0
        %v3179 = vadd.f32 0.0, %v3178
        %v3180 = vpop.f32.mrb[0].mxu0
        %3181 = vmatprep.mubr.f32.mxu0 0.0
        %3182 = vmatmul.mubr.f32.gmra.mrb[0].mxu0 %v3106
        %v3183 = vpop.f32.mrb[0].mxu0
        %v3184 = vadd.f32 0.0, %v3183
        %v3185 = vpop.f32.mrb[0].mxu0
        %3186 = vdwg.mxu0
        %v3187 = vmul.f32 %v3179, 0.35355338
        %v3188 = vmul.f32 %v3184, 0.35355338
        %v3189 = vadd.f32 %v3187, %v1393
        %v3190 = vadd.f32 %v3188, %v1393
        %v3191 = vsel %vm1397, %v3189, -inf
        %3192 = vmax.xlane.f32.xlu0 %v3191
        %v3193 = vpop.xlane.xlu0 %3192
        %v3194 = vsel %vm1401, %v3190, -inf
        %3195 = vmax.xlane.f32.xlu0 %v3194
        %v3196 = vpop.xlane.xlu0 %3195
        %v3197 = vsub.f32 %v3189, %v3193
        %v3198 = vsub.f32 %v3190, %v3196
        %v3199 = vmul.f32 %v3197, 1.442695
        %v3200 = vpow.pop %v3199
        %v3201 = vmul.f32 %v3198, 1.442695
        %v3202 = vpow.pop %v3201
        %3203 = vrot.lane.b32.xlu0 %v3092, 48
        %v3204 = vpop.permute.xlu0 %3203
        %3205 = vrot.lane.b32.xlu0 %v3093, 48
        %v3206 = vpop.permute.xlu0 %3205
        %v3209 = vsel %vm1397, %v3200, 0
        %v3212 = vsel %vm1397, %v3202, 0
        %v3214 = vsel %vm1422, %v3206, 0
        %3216 = vmatprep.subr.mxu0 0.0
        %3217 = vmatpush1.msra.mxu0 %v3204
        %3218 = vmatprep.subr.mxu0 0.0
        %3219 = vmatpush1.msra.mxu0 %v3214
        %3220 = vmatprep.subr.mxu0 0.0
        %3221 = vmatpush1.msra.mxu0 0.0
        %3222 = vmatprep.subr.mxu0 0.0
        %3223 = vmatpush1.msra.mxu0 0.0
        %3224 = vmatprep.subr.mxu0 0.0
        %3225 = vmatpush1.msra.mxu0 0.0
        %3226 = vmatprep.subr.mxu0 0.0
        %3227 = vmatpush1.msra.mxu0 0.0
        %3228 = vmatprep.subr.mxu0 0.0
        %3229 = vmatpush1.msra.mxu0 0.0
        %3230 = vmatprep.subr.mxu0 0.0
        %3231 = vmatpush1.msra.mxu0 0.0
        %3232 = vmatprep.subr.mxu0 0.0
        %3233 = vmatpush1.msra.mxu0 0.0
        %3234 = vmatprep.subr.mxu0 0.0
        %3235 = vmatpush1.msra.mxu0 0.0
        %3236 = vmatprep.subr.mxu0 0.0
        %3237 = vmatpush1.msra.mxu0 0.0
        %3238 = vmatprep.subr.mxu0 0.0
        %3239 = vmatpush1.msra.mxu0 0.0
        %3240 = vmatprep.subr.mxu0 0.0
        %3241 = vmatpush1.msra.mxu0 0.0
        %3242 = vmatprep.subr.mxu0 0.0
        %3243 = vmatpush1.msra.mxu0 0.0
        %3244 = vmatprep.subr.mxu0 0.0
        %3245 = vmatpush1.msra.mxu0 0.0
        %3246 = vmatprep.subr.mxu0 0.0
        %3247 = vmatpush1.msra.mxu0 0.0
        %3248 = vmatprep.subr.mxu0 0.0
        %3249 = vmatpush1.msra.mxu0 0.0
        %3250 = vmatprep.subr.mxu0 0.0
        %3251 = vmatpush1.msra.mxu0 0.0
        %3252 = vmatprep.subr.mxu0 0.0
        %3253 = vmatpush1.msra.mxu0 0.0
        %3254 = vmatprep.subr.mxu0 0.0
        %3255 = vmatpush1.msra.mxu0 0.0
        %3256 = vmatprep.subr.mxu0 0.0
        %3257 = vmatpush1.msra.mxu0 0.0
        %3258 = vmatprep.subr.mxu0 0.0
        %3259 = vmatpush1.msra.mxu0 0.0
        %3260 = vmatprep.subr.mxu0 0.0
        %3261 = vmatpush1.msra.mxu0 0.0
        %3262 = vmatprep.subr.mxu0 0.0
        %3263 = vmatpush1.msra.mxu0 0.0
        %3264 = vmatprep.subr.mxu0 0.0
        %3265 = vmatpush1.msra.mxu0 0.0
        %3266 = vmatprep.subr.mxu0 0.0
        %3267 = vmatpush1.msra.mxu0 0.0
        %3268 = vmatprep.subr.mxu0 0.0
        %3269 = vmatpush1.msra.mxu0 0.0
        %3270 = vmatprep.subr.mxu0 0.0
        %3271 = vmatpush1.msra.mxu0 0.0
        %3272 = vmatprep.subr.mxu0 0.0
        %3273 = vmatpush1.msra.mxu0 0.0
        %3274 = vmatprep.subr.mxu0 0.0
        %3275 = vmatpush1.msra.mxu0 0.0
        %3276 = vmatprep.subr.mxu0 0.0
        %3277 = vmatpush1.msra.mxu0 0.0
        %3278 = vmatprep.subr.mxu0 0.0
        %3279 = vmatpush1.msra.mxu0 0.0
        %3280 = vmatprep.mubr.f32.mxu0 0.0
        %3281 = vmatmul.mubr.f32.gmra.mrb[0].mxu0 %v3209
        %v3282 = vpop.f32.mrb[0].mxu0
        %v3283 = vadd.f32 0.0, %v3282
        %v3284 = vpop.f32.mrb[0].mxu0
        %3285 = vmatprep.mubr.f32.mxu0 0.0
        %3286 = vmatmul.mubr.f32.gmra.mrb[0].mxu0 %v3212
        %v3287 = vpop.f32.mrb[0].mxu0
        %v3288 = vadd.f32 0.0, %v3287
        %v3289 = vpop.f32.mrb[0].mxu0
        %3290 = vdwg.mxu0
        %v3291 = vsel %vm1397, %v3200, 0.0
        %3292 = vadd.xlane.f32.xlu0 %v3291
        %v3293 = vpop.xlane.xlu0 %3292
        %v3294 = vsel %vm1401, %v3202, 0.0
        %3295 = vadd.xlane.f32.xlu0 %v3294
        %v3296 = vpop.xlane.xlu0 %3295
        %v3297 = vrcp.pop %v3293
        %v3298 = vrcp.pop %v3296
        %v3299 = vmul.f32 %v3283, %v3297
        %v3300 = vmul.f32 %v3288, %v3298
        %3303 = vrot.lane.b32.xlu0 %v3299, 16
        %v3304 = vpop.permute.xlu0 %3303
        %3305 = vrot.lane.b32.xlu0 %v3300, 16
        %v3306 = vpop.permute.xlu0 %3305
        %3309 = vst.msk [vmem:[#allocation3] sm:$0xff] %vm1951, %v3304
        %3310 = vst.msk [vmem:[#allocation3 + $0x8] sm:$0x1] %vm1953, %v3306
        %v3311 = vld [vmem:[#allocation4] sm:$0xff]
        %v3312 = vld [vmem:[#allocation4 + $0x8] sm:$0x1]
        %3315 = vrot.lane.b32.xlu0 %v3311, 104
        %v3316 = vpop.permute.xlu0 %3315
        %3317 = vrot.lane.b32.xlu0 %v3312, 104
        %v3318 = vpop.permute.xlu0 %3317
        %3319 = vrot.lane.b32.xlu0 %v3311, 72
        %v3320 = vpop.permute.xlu0 %3319
        %3321 = vrot.lane.b32.xlu0 %v3312, 72
        %v3322 = vpop.permute.xlu0 %3321
        %v3323 = vsel %vm1116, %v3316, 0
        %v3325 = vsel %vm1116, %v3318, 0
        %v3327 = vsel %vm1116, %v3320, 0
        %v3329 = vsel %vm1116, %v3322, 0
        %3331 = vmatprep.subr.mxu0 0.0
        %3332 = vmatpush1.xpose.msra.mxu0 %v3327
        %3333 = vmatprep.subr.mxu0 0.0
        %3334 = vmatpush1.xpose.msra.mxu0 %v3329
        %3335 = vmatprep.subr.mxu0 0.0
        %3336 = vmatpush1.xpose.msra.mxu0 0.0
        %3337 = vmatprep.subr.mxu0 0.0
        %3338 = vmatpush1.xpose.msra.mxu0 0.0
        %3339 = vmatprep.subr.mxu0 0.0
        %3340 = vmatpush1.xpose.msra.mxu0 0.0
        %3341 = vmatprep.subr.mxu0 0.0
        %3342 = vmatpush1.xpose.msra.mxu0 0.0
        %3343 = vmatprep.subr.mxu0 0.0
        %3344 = vmatpush1.xpose.msra.mxu0 0.0
        %3345 = vmatprep.subr.mxu0 0.0
        %3346 = vmatpush1.xpose.msra.mxu0 0.0
        %3347 = vmatprep.subr.mxu0 0.0
        %3348 = vmatpush1.xpose.msra.mxu0 0.0
        %3349 = vmatprep.subr.mxu0 0.0
        %3350 = vmatpush1.xpose.msra.mxu0 0.0
        %3351 = vmatprep.subr.mxu0 0.0
        %3352 = vmatpush1.xpose.msra.mxu0 0.0
        %3353 = vmatprep.subr.mxu0 0.0
        %3354 = vmatpush1.xpose.msra.mxu0 0.0
        %3355 = vmatprep.subr.mxu0 0.0
        %3356 = vmatpush1.xpose.msra.mxu0 0.0
        %3357 = vmatprep.subr.mxu0 0.0
        %3358 = vmatpush1.xpose.msra.mxu0 0.0
        %3359 = vmatprep.subr.mxu0 0.0
        %3360 = vmatpush1.xpose.msra.mxu0 0.0
        %3361 = vmatprep.subr.mxu0 0.0
        %3362 = vmatpush1.xpose.msra.mxu0 0.0
        %3363 = vmatprep.subr.mxu0 0.0
        %3364 = vmatpush1.xpose.msra.mxu0 0.0
        %3365 = vmatprep.subr.mxu0 0.0
        %3366 = vmatpush1.xpose.msra.mxu0 0.0
        %3367 = vmatprep.subr.mxu0 0.0
        %3368 = vmatpush1.xpose.msra.mxu0 0.0
        %3369 = vmatprep.subr.mxu0 0.0
        %3370 = vmatpush1.xpose.msra.mxu0 0.0
        %3371 = vmatprep.subr.mxu0 0.0
        %3372 = vmatpush1.xpose.msra.mxu0 0.0
        %3373 = vmatprep.subr.mxu0 0.0
        %3374 = vmatpush1.xpose.msra.mxu0 0.0
        %3375 = vmatprep.subr.mxu0 0.0
        %3376 = vmatpush1.xpose.msra.mxu0 0.0
        %3377 = vmatprep.subr.mxu0 0.0
        %3378 = vmatpush1.xpose.msra.mxu0 0.0
        %3379 = vmatprep.subr.mxu0 0.0
        %3380 = vmatpush1.xpose.msra.mxu0 0.0
        %3381 = vmatprep.subr.mxu0 0.0
        %3382 = vmatpush1.xpose.msra.mxu0 0.0
        %3383 = vmatprep.subr.mxu0 0.0
        %3384 = vmatpush1.xpose.msra.mxu0 0.0
        %3385 = vmatprep.subr.mxu0 0.0
        %3386 = vmatpush1.xpose.msra.mxu0 0.0
        %3387 = vmatprep.subr.mxu0 0.0
        %3388 = vmatpush1.xpose.msra.mxu0 0.0
        %3389 = vmatprep.subr.mxu0 0.0
        %3390 = vmatpush1.xpose.msra.mxu0 0.0
        %3391 = vmatprep.subr.mxu0 0.0
        %3392 = vmatpush1.xpose.msra.mxu0 0.0
        %3393 = vmatprep.subr.mxu0 0.0
        %3394 = vmatpush1.xpose.msra.mxu0 0.0
        %3395 = vmatprep.mubr.f32.mxu0 0.0
        %3396 = vmatmul.mubr.f32.gmra.mrb[0].mxu0 %v3323
        %v3397 = vpop.f32.mrb[0].mxu0
        %v3398 = vadd.f32 0.0, %v3397
        %v3399 = vpop.f32.mrb[0].mxu0
        %3400 = vmatprep.mubr.f32.mxu0 0.0
        %3401 = vmatmul.mubr.f32.gmra.mrb[0].mxu0 %v3325
        %v3402 = vpop.f32.mrb[0].mxu0
        %v3403 = vadd.f32 0.0, %v3402
        %v3404 = vpop.f32.mrb[0].mxu0
        %3405 = vdwg.mxu0
        %v3406 = vmul.f32 %v3398, 0.35355338
        %v3407 = vmul.f32 %v3403, 0.35355338
        %v3408 = vadd.f32 %v3406, %v1393
        %v3409 = vadd.f32 %v3407, %v1393
        %v3410 = vsel %vm1397, %v3408, -inf
        %3411 = vmax.xlane.f32.xlu0 %v3410
        %v3412 = vpop.xlane.xlu0 %3411
        %v3413 = vsel %vm1401, %v3409, -inf
        %3414 = vmax.xlane.f32.xlu0 %v3413
        %v3415 = vpop.xlane.xlu0 %3414
        %v3416 = vsub.f32 %v3408, %v3412
        %v3417 = vsub.f32 %v3409, %v3415
        %v3418 = vmul.f32 %v3416, 1.442695
        %v3419 = vpow.pop %v3418
        %v3420 = vmul.f32 %v3417, 1.442695
        %v3421 = vpow.pop %v3420
        %3422 = vrot.lane.b32.xlu0 %v3311, 40
        %v3423 = vpop.permute.xlu0 %3422
        %3424 = vrot.lane.b32.xlu0 %v3312, 40
        %v3425 = vpop.permute.xlu0 %3424
        %v3428 = vsel %vm1397, %v3419, 0
        %v3431 = vsel %vm1397, %v3421, 0
        %v3433 = vsel %vm1422, %v3425, 0
        %3435 = vmatprep.subr.mxu0 0.0
        %3436 = vmatpush1.msra.mxu0 %v3423
        %3437 = vmatprep.subr.mxu0 0.0
        %3438 = vmatpush1.msra.mxu0 %v3433
        %3439 = vmatprep.subr.mxu0 0.0
        %3440 = vmatpush1.msra.mxu0 0.0
        %3441 = vmatprep.subr.mxu0 0.0
        %3442 = vmatpush1.msra.mxu0 0.0
        %3443 = vmatprep.subr.mxu0 0.0
        %3444 = vmatpush1.msra.mxu0 0.0
        %3445 = vmatprep.subr.mxu0 0.0
        %3446 = vmatpush1.msra.mxu0 0.0
        %3447 = vmatprep.subr.mxu0 0.0
        %3448 = vmatpush1.msra.mxu0 0.0
        %3449 = vmatprep.subr.mxu0 0.0
        %3450 = vmatpush1.msra.mxu0 0.0
        %3451 = vmatprep.subr.mxu0 0.0
        %3452 = vmatpush1.msra.mxu0 0.0
        %3453 = vmatprep.subr.mxu0 0.0
        %3454 = vmatpush1.msra.mxu0 0.0
        %3455 = vmatprep.subr.mxu0 0.0
        %3456 = vmatpush1.msra.mxu0 0.0
        %3457 = vmatprep.subr.mxu0 0.0
        %3458 = vmatpush1.msra.mxu0 0.0
        %3459 = vmatprep.subr.mxu0 0.0
        %3460 = vmatpush1.msra.mxu0 0.0
        %3461 = vmatprep.subr.mxu0 0.0
        %3462 = vmatpush1.msra.mxu0 0.0
        %3463 = vmatprep.subr.mxu0 0.0
        %3464 = vmatpush1.msra.mxu0 0.0
        %3465 = vmatprep.subr.mxu0 0.0
        %3466 = vmatpush1.msra.mxu0 0.0
        %3467 = vmatprep.subr.mxu0 0.0
        %3468 = vmatpush1.msra.mxu0 0.0
        %3469 = vmatprep.subr.mxu0 0.0
        %3470 = vmatpush1.msra.mxu0 0.0
        %3471 = vmatprep.subr.mxu0 0.0
        %3472 = vmatpush1.msra.mxu0 0.0
        %3473 = vmatprep.subr.mxu0 0.0
        %3474 = vmatpush1.msra.mxu0 0.0
        %3475 = vmatprep.subr.mxu0 0.0
        %3476 = vmatpush1.msra.mxu0 0.0
        %3477 = vmatprep.subr.mxu0 0.0
        %3478 = vmatpush1.msra.mxu0 0.0
        %3479 = vmatprep.subr.mxu0 0.0
        %3480 = vmatpush1.msra.mxu0 0.0
        %3481 = vmatprep.subr.mxu0 0.0
        %3482 = vmatpush1.msra.mxu0 0.0
        %3483 = vmatprep.subr.mxu0 0.0
        %3484 = vmatpush1.msra.mxu0 0.0
        %3485 = vmatprep.subr.mxu0 0.0
        %3486 = vmatpush1.msra.mxu0 0.0
        %3487 = vmatprep.subr.mxu0 0.0
        %3488 = vmatpush1.msra.mxu0 0.0
        %3489 = vmatprep.subr.mxu0 0.0
        %3490 = vmatpush1.msra.mxu0 0.0
        %3491 = vmatprep.subr.mxu0 0.0
        %3492 = vmatpush1.msra.mxu0 0.0
        %3493 = vmatprep.subr.mxu0 0.0
        %3494 = vmatpush1.msra.mxu0 0.0
        %3495 = vmatprep.subr.mxu0 0.0
        %3496 = vmatpush1.msra.mxu0 0.0
        %3497 = vmatprep.subr.mxu0 0.0
        %3498 = vmatpush1.msra.mxu0 0.0
        %3499 = vmatprep.mubr.f32.mxu0 0.0
        %3500 = vmatmul.mubr.f32.gmra.mrb[0].mxu0 %v3428
        %v3501 = vpop.f32.mrb[0].mxu0
        %v3502 = vadd.f32 0.0, %v3501
        %v3503 = vpop.f32.mrb[0].mxu0
        %3504 = vmatprep.mubr.f32.mxu0 0.0
        %3505 = vmatmul.mubr.f32.gmra.mrb[0].mxu0 %v3431
        %v3506 = vpop.f32.mrb[0].mxu0
        %v3507 = vadd.f32 0.0, %v3506
        %v3508 = vpop.f32.mrb[0].mxu0
        %3509 = vdwg.mxu0
        %v3510 = vsel %vm1397, %v3419, 0.0
        %3511 = vadd.xlane.f32.xlu0 %v3510
        %v3512 = vpop.xlane.xlu0 %3511
        %v3513 = vsel %vm1401, %v3421, 0.0
        %3514 = vadd.xlane.f32.xlu0 %v3513
        %v3515 = vpop.xlane.xlu0 %3514
        %v3516 = vrcp.pop %v3512
        %v3517 = vrcp.pop %v3515
        %v3518 = vmul.f32 %v3502, %v3516
        %v3519 = vmul.f32 %v3507, %v3517
        %3522 = vrot.lane.b32.xlu0 %v3518, 24
        %v3523 = vpop.permute.xlu0 %3522
        %3524 = vrot.lane.b32.xlu0 %v3519, 24
        %v3525 = vpop.permute.xlu0 %3524
        %3528 = vst.msk [vmem:[#allocation3] sm:$0xff] %vm2172, %v3523
        %3529 = vst.msk [vmem:[#allocation3 + $0x8] sm:$0x1] %vm2174, %v3525
        %v3530 = vld [vmem:[#allocation3] sm:$0xff]
        %v3531 = vld [vmem:[#allocation3 + $0x8] sm:$0x1]
        %s3532 = scalar_lea.vmem %s14, 32
        %v3533 = vld [vmem:[%s3532] sm:$0xff]
        %v3534 = vld [vmem:[%s3532 + $0x8] sm:$0xff]
        %v3535 = vld [vmem:[%s3532 + $0x10] sm:$0xff]
        %v3536 = vld [vmem:[%s3532 + $0x18] sm:$0xff]
        %s3537 = scalar_lea.vmem [#allocation18], 1
        %v3538 = vld [vmem:[%s3537] sm:$0x1]
        %v3540 = vlaneseq
        %v3541 = vshrl.u32 %v3540, 7
        %v3542 = vsub.s32 0, %v3541
        %v3543 = vrot.slane %v3538, %v3542
        %v3546 = vsel %vm946, %v3530, 0
        %v3549 = vsel %vm946, %v3531, 0
        %3551 = vmatprep.subr.mxu0 0.0
        %3552 = vmatpush1.msra.mxu0 %v3533
        %3553 = vmatprep.subr.mxu0 0.0
        %3554 = vmatpush1.msra.mxu0 %v3534
        %3555 = vmatprep.subr.mxu0 0.0
        %3556 = vmatpush1.msra.mxu0 %v3535
        %3557 = vmatprep.subr.mxu0 0.0
        %3558 = vmatpush1.msra.mxu0 %v3536
        %3559 = vmatprep.subr.mxu0 0.0
        %3560 = vmatpush1.msra.mxu0 0.0
        %3561 = vmatprep.subr.mxu0 0.0
        %3562 = vmatpush1.msra.mxu0 0.0
        %3563 = vmatprep.subr.mxu0 0.0
        %3564 = vmatpush1.msra.mxu0 0.0
        %3565 = vmatprep.subr.mxu0 0.0
        %3566 = vmatpush1.msra.mxu0 0.0
        %3567 = vmatprep.subr.mxu0 0.0
        %3568 = vmatpush1.msra.mxu0 0.0
        %3569 = vmatprep.subr.mxu0 0.0
        %3570 = vmatpush1.msra.mxu0 0.0
        %3571 = vmatprep.subr.mxu0 0.0
        %3572 = vmatpush1.msra.mxu0 0.0
        %3573 = vmatprep.subr.mxu0 0.0
        %3574 = vmatpush1.msra.mxu0 0.0
        %3575 = vmatprep.subr.mxu0 0.0
        %3576 = vmatpush1.msra.mxu0 0.0
        %3577 = vmatprep.subr.mxu0 0.0
        %3578 = vmatpush1.msra.mxu0 0.0
        %3579 = vmatprep.subr.mxu0 0.0
        %3580 = vmatpush1.msra.mxu0 0.0
        %3581 = vmatprep.subr.mxu0 0.0
        %3582 = vmatpush1.msra.mxu0 0.0
        %3583 = vmatprep.subr.mxu0 0.0
        %3584 = vmatpush1.msra.mxu0 0.0
        %3585 = vmatprep.subr.mxu0 0.0
        %3586 = vmatpush1.msra.mxu0 0.0
        %3587 = vmatprep.subr.mxu0 0.0
        %3588 = vmatpush1.msra.mxu0 0.0
        %3589 = vmatprep.subr.mxu0 0.0
        %3590 = vmatpush1.msra.mxu0 0.0
        %3591 = vmatprep.subr.mxu0 0.0
        %3592 = vmatpush1.msra.mxu0 0.0
        %3593 = vmatprep.subr.mxu0 0.0
        %3594 = vmatpush1.msra.mxu0 0.0
        %3595 = vmatprep.subr.mxu0 0.0
        %3596 = vmatpush1.msra.mxu0 0.0
        %3597 = vmatprep.subr.mxu0 0.0
        %3598 = vmatpush1.msra.mxu0 0.0
        %3599 = vmatprep.subr.mxu0 0.0
        %3600 = vmatpush1.msra.mxu0 0.0
        %3601 = vmatprep.subr.mxu0 0.0
        %3602 = vmatpush1.msra.mxu0 0.0
        %3603 = vmatprep.subr.mxu0 0.0
        %3604 = vmatpush1.msra.mxu0 0.0
        %3605 = vmatprep.subr.mxu0 0.0
        %3606 = vmatpush1.msra.mxu0 0.0
        %3607 = vmatprep.subr.mxu0 0.0
        %3608 = vmatpush1.msra.mxu0 0.0
        %3609 = vmatprep.subr.mxu0 0.0
        %3610 = vmatpush1.msra.mxu0 0.0
        %3611 = vmatprep.subr.mxu0 0.0
        %3612 = vmatpush1.msra.mxu0 0.0
        %3613 = vmatprep.subr.mxu0 0.0
        %3614 = vmatpush1.msra.mxu0 0.0
        %3615 = vmatprep.mubr.f32.mxu0 0.0
        %3616 = vmatmul.mubr.f32.gmra.mrb[0].mxu0 %v3546
        %v3617 = vpop.f32.mrb[0].mxu0
        %v3618 = vadd.f32 %v3543, %v3617
        %v3619 = vpop.f32.mrb[0].mxu0
        %3620 = vmatprep.mubr.f32.mxu0 0.0
        %3621 = vmatmul.mubr.f32.gmra.mrb[0].mxu0 %v3549
        %v3622 = vpop.f32.mrb[0].mxu0
        %v3623 = vadd.f32 %v3543, %v3622
        %v3624 = vpop.f32.mrb[0].mxu0
        %3625 = vdwg.mxu0
        %v3626 = vadd.f32 %v2568, %v3618
        %v3627 = vadd.f32 %v2569, %v3623
        %s3628 = scalar_lea.vmem [#allocation19], 1
        %v3629 = vld [vmem:[%s3628] sm:$0x1]
        %s3630 = scalar_lea.vmem [#allocation21], 1
        %v3631 = vld [vmem:[%s3630] sm:$0x1]
        %v3632 = vsel %vm946, %v3626, 0.0
        %3633 = vadd.xlane.f32.xlu0 %v3632
        %v3634 = vpop.xlane.xlu0 %3633
        %v3635 = vsel %vm1191, %v3627, 0.0
        %3636 = vadd.xlane.f32.xlu0 %v3635
        %v3637 = vpop.xlane.xlu0 %3636
        %v3638 = vmul.f32 %v3634, %v2280
        %v3639 = vmul.f32 %v3637, %v2280
        %v3640 = vsub.f32 %v3626, %v3638
        %v3641 = vsub.f32 %v3627, %v3639
        %v3642 = vmul.f32 %v3640, %v3640
        %v3643 = vmul.f32 %v3641, %v3641
        %v3644 = vsel %vm946, %v3642, 0.0
        %3645 = vadd.xlane.f32.xlu0 %v3644
        %v3646 = vpop.xlane.xlu0 %3645
        %v3647 = vsel %vm1191, %v3643, 0.0
        %3648 = vadd.xlane.f32.xlu0 %v3647
        %v3649 = vpop.xlane.xlu0 %3648
        %v3650 = vmul.f32 %v3646, %v2280
        %v3651 = vmul.f32 %v3649, %v2280
        %v3652 = vadd.f32 %v3650, 1e-05
        %v3653 = vadd.f32 %v3651, 1e-05
        %v3654 = vrsqrt.pop %v3652
        %v3655 = vrsqrt.pop %v3653
        %v3656 = vmul.f32 %v3640, %v3654
        %v3657 = vmul.f32 %v3641, %v3655
        %v3659 = vlaneseq
        %v3660 = vshrl.u32 %v3659, 7
        %v3661 = vsub.s32 0, %v3660
        %v3662 = vrot.slane %v3629, %v3661
        %v3664 = vmul.f32 %v3656, %v3662
        %v3665 = vmul.f32 %v3657, %v3662
        %v3667 = vlaneseq
        %v3668 = vshrl.u32 %v3667, 7
        %v3669 = vsub.s32 0, %v3668
        %v3670 = vrot.slane %v3631, %v3669
        %v3672 = vadd.f32 %v3664, %v3670
        %v3673 = vadd.f32 %v3665, %v3670
        %s3674 = scalar_lea.vmem %s18, 32
        %v3675 = vld [vmem:[%s3674] sm:$0xff]
        %v3676 = vld [vmem:[%s3674 + $0x8] sm:$0xff]
        %v3677 = vld [vmem:[%s3674 + $0x10] sm:$0xff]
        %v3678 = vld [vmem:[%s3674 + $0x18] sm:$0xff]
        %s3679 = scalar_lea.vmem [#allocation22], 1
        %v3680 = vld [vmem:[%s3679] sm:$0x1]
        %v3682 = vlaneseq
        %v3683 = vshrl.u32 %v3682, 7
        %v3684 = vsub.s32 0, %v3683
        %v3685 = vrot.slane %v3680, %v3684
        %v3688 = vsel %vm946, %v3672, 0
        %v3691 = vsel %vm946, %v3673, 0
        %3693 = vmatprep.subr.mxu0 0.0
        %3694 = vmatpush1.msra.mxu0 %v3675
        %3695 = vmatprep.subr.mxu0 0.0
        %3696 = vmatpush1.msra.mxu0 %v3676
        %3697 = vmatprep.subr.mxu0 0.0
        %3698 = vmatpush1.msra.mxu0 %v3677
        %3699 = vmatprep.subr.mxu0 0.0
        %3700 = vmatpush1.msra.mxu0 %v3678
        %3701 = vmatprep.subr.mxu0 0.0
        %3702 = vmatpush1.msra.mxu0 0.0
        %3703 = vmatprep.subr.mxu0 0.0
        %3704 = vmatpush1.msra.mxu0 0.0
        %3705 = vmatprep.subr.mxu0 0.0
        %3706 = vmatpush1.msra.mxu0 0.0
        %3707 = vmatprep.subr.mxu0 0.0
        %3708 = vmatpush1.msra.mxu0 0.0
        %3709 = vmatprep.subr.mxu0 0.0
        %3710 = vmatpush1.msra.mxu0 0.0
        %3711 = vmatprep.subr.mxu0 0.0
        %3712 = vmatpush1.msra.mxu0 0.0
        %3713 = vmatprep.subr.mxu0 0.0
        %3714 = vmatpush1.msra.mxu0 0.0
        %3715 = vmatprep.subr.mxu0 0.0
        %3716 = vmatpush1.msra.mxu0 0.0
        %3717 = vmatprep.subr.mxu0 0.0
        %3718 = vmatpush1.msra.mxu0 0.0
        %3719 = vmatprep.subr.mxu0 0.0
        %3720 = vmatpush1.msra.mxu0 0.0
        %3721 = vmatprep.subr.mxu0 0.0
        %3722 = vmatpush1.msra.mxu0 0.0
        %3723 = vmatprep.subr.mxu0 0.0
        %3724 = vmatpush1.msra.mxu0 0.0
        %3725 = vmatprep.subr.mxu0 0.0
        %3726 = vmatpush1.msra.mxu0 0.0
        %3727 = vmatprep.subr.mxu0 0.0
        %3728 = vmatpush1.msra.mxu0 0.0
        %3729 = vmatprep.subr.mxu0 0.0
        %3730 = vmatpush1.msra.mxu0 0.0
        %3731 = vmatprep.subr.mxu0 0.0
        %3732 = vmatpush1.msra.mxu0 0.0
        %3733 = vmatprep.subr.mxu0 0.0
        %3734 = vmatpush1.msra.mxu0 0.0
        %3735 = vmatprep.subr.mxu0 0.0
        %3736 = vmatpush1.msra.mxu0 0.0
        %3737 = vmatprep.subr.mxu0 0.0
        %3738 = vmatpush1.msra.mxu0 0.0
        %3739 = vmatprep.subr.mxu0 0.0
        %3740 = vmatpush1.msra.mxu0 0.0
        %3741 = vmatprep.subr.mxu0 0.0
        %3742 = vmatpush1.msra.mxu0 0.0
        %3743 = vmatprep.subr.mxu0 0.0
        %3744 = vmatpush1.msra.mxu0 0.0
        %3745 = vmatprep.subr.mxu0 0.0
        %3746 = vmatpush1.msra.mxu0 0.0
        %3747 = vmatprep.subr.mxu0 0.0
        %3748 = vmatpush1.msra.mxu0 0.0
        %3749 = vmatprep.subr.mxu0 0.0
        %3750 = vmatpush1.msra.mxu0 0.0
        %3751 = vmatprep.subr.mxu0 0.0
        %3752 = vmatpush1.msra.mxu0 0.0
        %3753 = vmatprep.subr.mxu0 0.0
        %3754 = vmatpush1.msra.mxu0 0.0
        %3755 = vmatprep.subr.mxu0 0.0
        %3756 = vmatpush1.msra.mxu0 0.0
        %3757 = vmatprep.mubr.f32.mxu0 0.0
        %3758 = vmatmul.mubr.f32.gmra.mrb[0].mxu0 %v3688
        %v3759 = vpop.f32.mrb[0].mxu0
        %v3760 = vadd.f32 %v3685, %v3759
        %v3761 = vpop.f32.mrb[0].mxu0
        %3762 = vmatprep.mubr.f32.mxu0 0.0
        %3763 = vmatmul.mubr.f32.gmra.mrb[0].mxu0 %v3691
        %v3764 = vpop.f32.mrb[0].mxu0
        %v3765 = vadd.f32 %v3685, %v3764
        %v3766 = vpop.f32.mrb[0].mxu0
        %3767 = vdwg.mxu0
        %v3768 = vmul.f32 %v3760, 0.5
        %v3769 = vmul.f32 %v3765, 0.5
        %v3770 = vmul.f32 %v3760, 0.044715
        %v3771 = vmul.f32 %v3765, 0.044715
        %v3772 = vmul.f32 %v3770, %v3760
        %v3773 = vmul.f32 %v3771, %v3765
        %v3774 = vmul.f32 %v3772, %v3760
        %v3775 = vmul.f32 %v3773, %v3765
        %v3776 = vadd.f32 %v3760, %v3774
        %v3777 = vadd.f32 %v3765, %v3775
        %v3778 = vmul.f32 %v3776, 0.7978846
        %v3779 = vmul.f32 %v3777, 0.7978846
        %v3780 = vtanh.pop %v3778
        %v3781 = vtanh.pop %v3779
        %v3782 = vadd.f32 %v3780, 1.0
        %v3783 = vadd.f32 %v3781, 1.0
        %v3784 = vmul.f32 %v3768, %v3782
        %v3785 = vmul.f32 %v3769, %v3783
        %s3786 = scalar_lea.vmem %s20, 64
        %v3787 = vld [vmem:[%s3786] sm:$0xff]
        %v3788 = vld [vmem:[%s3786 + $0x8] sm:$0xff]
        %v3789 = vld [vmem:[%s3786 + $0x10] sm:$0xff]
        %v3790 = vld [vmem:[%s3786 + $0x18] sm:$0xff]
        %v3791 = vld [vmem:[%s3786 + $0x20] sm:$0xff]
        %v3792 = vld [vmem:[%s3786 + $0x28] sm:$0xff]
        %v3793 = vld [vmem:[%s3786 + $0x30] sm:$0xff]
        %v3794 = vld [vmem:[%s3786 + $0x38] sm:$0xff]
        %s3795 = scalar_lea.vmem %s21, 1
        %v3796 = vld [vmem:[%s3795] sm:$0x1]
        %v3798 = vlaneseq
        %v3799 = vshrl.u32 %v3798, 7
        %v3800 = vsub.s32 0, %v3799
        %v3801 = vrot.slane %v3796, %v3800
        %v3804 = vsel %vm2442, %v3784, 0
        %v3807 = vsel %vm2442, %v3785, 0
        %3809 = vmatprep.subr.mxu0 0.0
        %3810 = vmatpush1.msra.mxu0 %v3787
        %3811 = vmatprep.subr.mxu0 0.0
        %3812 = vmatpush1.msra.mxu0 %v3788
        %3813 = vmatprep.subr.mxu0 0.0
        %3814 = vmatpush1.msra.mxu0 %v3789
        %3815 = vmatprep.subr.mxu0 0.0
        %3816 = vmatpush1.msra.mxu0 %v3790
        %3817 = vmatprep.subr.mxu0 0.0
        %3818 = vmatpush1.msra.mxu0 %v3791
        %3819 = vmatprep.subr.mxu0 0.0
        %3820 = vmatpush1.msra.mxu0 %v3792
        %3821 = vmatprep.subr.mxu0 0.0
        %3822 = vmatpush1.msra.mxu0 %v3793
        %3823 = vmatprep.subr.mxu0 0.0
        %3824 = vmatpush1.msra.mxu0 %v3794
        %3825 = vmatprep.subr.mxu0 0.0
        %3826 = vmatpush1.msra.mxu0 0.0
        %3827 = vmatprep.subr.mxu0 0.0
        %3828 = vmatpush1.msra.mxu0 0.0
        %3829 = vmatprep.subr.mxu0 0.0
        %3830 = vmatpush1.msra.mxu0 0.0
        %3831 = vmatprep.subr.mxu0 0.0
        %3832 = vmatpush1.msra.mxu0 0.0
        %3833 = vmatprep.subr.mxu0 0.0
        %3834 = vmatpush1.msra.mxu0 0.0
        %3835 = vmatprep.subr.mxu0 0.0
        %3836 = vmatpush1.msra.mxu0 0.0
        %3837 = vmatprep.subr.mxu0 0.0
        %3838 = vmatpush1.msra.mxu0 0.0
        %3839 = vmatprep.subr.mxu0 0.0
        %3840 = vmatpush1.msra.mxu0 0.0
        %3841 = vmatprep.subr.mxu0 0.0
        %3842 = vmatpush1.msra.mxu0 0.0
        %3843 = vmatprep.subr.mxu0 0.0
        %3844 = vmatpush1.msra.mxu0 0.0
        %3845 = vmatprep.subr.mxu0 0.0
        %3846 = vmatpush1.msra.mxu0 0.0
        %3847 = vmatprep.subr.mxu0 0.0
        %3848 = vmatpush1.msra.mxu0 0.0
        %3849 = vmatprep.subr.mxu0 0.0
        %3850 = vmatpush1.msra.mxu0 0.0
        %3851 = vmatprep.subr.mxu0 0.0
        %3852 = vmatpush1.msra.mxu0 0.0
        %3853 = vmatprep.subr.mxu0 0.0
        %3854 = vmatpush1.msra.mxu0 0.0
        %3855 = vmatprep.subr.mxu0 0.0
        %3856 = vmatpush1.msra.mxu0 0.0
        %3857 = vmatprep.subr.mxu0 0.0
        %3858 = vmatpush1.msra.mxu0 0.0
        %3859 = vmatprep.subr.mxu0 0.0
        %3860 = vmatpush1.msra.mxu0 0.0
        %3861 = vmatprep.subr.mxu0 0.0
        %3862 = vmatpush1.msra.mxu0 0.0
        %3863 = vmatprep.subr.mxu0 0.0
        %3864 = vmatpush1.msra.mxu0 0.0
        %3865 = vmatprep.subr.mxu0 0.0
        %3866 = vmatpush1.msra.mxu0 0.0
        %3867 = vmatprep.subr.mxu0 0.0
        %3868 = vmatpush1.msra.mxu0 0.0
        %3869 = vmatprep.subr.mxu0 0.0
        %3870 = vmatpush1.msra.mxu0 0.0
        %3871 = vmatprep.subr.mxu0 0.0
        %3872 = vmatpush1.msra.mxu0 0.0
        %3873 = vmatprep.mubr.f32.mxu0 0.0
        %3874 = vmatmul.mubr.f32.gmra.mrb[0].mxu0 %v3804
        %v3875 = vpop.f32.mrb[0].mxu0
        %v3876 = vadd.f32 %v3801, %v3875
        %v3877 = vpop.f32.mrb[0].mxu0
        %3878 = vmatprep.mubr.f32.mxu0 0.0
        %3879 = vmatmul.mubr.f32.gmra.mrb[0].mxu0 %v3807
        %v3880 = vpop.f32.mrb[0].mxu0
        %v3881 = vpop.f32.mrb[0].mxu0
        %3882 = vdwg.mxu0
        %v3883 = vadd.f32 %v3672, %v3876
        %s3884 = scalar_lea.vmem %s22, 1
        %v3885 = vld [vmem:[%s3884] sm:$0x1]
        %s3886 = scalar_lea.vmem %s23, 1
        %v3887 = vld [vmem:[%s3886] sm:$0x1]
        %v3888 = vsel %vm946, %v3883, 0.0
        %3889 = vadd.xlane.f32.xlu0 %v3888
        %v3890 = vpop.xlane.xlu0 %3889
        %v3891 = vmul.f32 %v3890, %v2280
        %v3892 = vsub.f32 %v3883, %v3891
        %v3893 = vmul.f32 %v3892, %v3892
        %v3894 = vsel %vm946, %v3893, 0.0
        %3895 = vadd.xlane.f32.xlu0 %v3894
        %v3896 = vpop.xlane.xlu0 %3895
        %v3897 = vmul.f32 %v3896, %v2280
        %v3898 = vadd.f32 %v3897, 1e-05
        %v3899 = vrsqrt.pop %v3898
        %v3900 = vmul.f32 %v3892, %v3899
        %v3902 = vlaneseq
        %v3903 = vshrl.u32 %v3902, 7
        %v3904 = vsub.s32 0, %v3903
        %v3905 = vrot.slane %v3885, %v3904
        %v3907 = vmul.f32 %v3900, %v3905
        %v3909 = vlaneseq
        %v3910 = vshrl.u32 %v3909, 7
        %v3911 = vsub.s32 0, %v3910
        %v3912 = vrot.slane %v3887, %v3911
        %v3914 = vadd.f32 %v3907, %v3912
        %v3915 = vld [vmem:[%s10] sm:$0xff]
        %v3916 = vld [vmem:[%s10 + $0x8] sm:$0xff]
        %v3917 = vld [vmem:[%s10 + $0x10] sm:$0xff]
        %v3918 = vld [vmem:[%s10 + $0x18] sm:$0xff]
        %v3919 = vld [vmem:[#allocation15] sm:$0x1]
        %v3921 = vlaneseq
        %v3922 = vshrl.u32 %v3921, 7
        %v3923 = vsub.s32 0, %v3922
        %v3924 = vrot.slane %v3919, %v3923
        %v3927 = vsel %vm946, %v3914, 0
        %3929 = vmatprep.subr.mxu0 0.0
        %3930 = vmatpush1.msra.mxu0 %v3915
        %3931 = vmatprep.subr.mxu0 0.0
        %3932 = vmatpush1.msra.mxu0 %v3916
        %3933 = vmatprep.subr.mxu0 0.0
        %3934 = vmatpush1.msra.mxu0 %v3917
        %3935 = vmatprep.subr.mxu0 0.0
        %3936 = vmatpush1.msra.mxu0 %v3918
        %3937 = vmatprep.subr.mxu0 0.0
        %3938 = vmatpush1.msra.mxu0 0.0
        %3939 = vmatprep.subr.mxu0 0.0
        %3940 = vmatpush1.msra.mxu0 0.0
        %3941 = vmatprep.subr.mxu0 0.0
        %3942 = vmatpush1.msra.mxu0 0.0
        %3943 = vmatprep.subr.mxu0 0.0
        %3944 = vmatpush1.msra.mxu0 0.0
        %3945 = vmatprep.subr.mxu0 0.0
        %3946 = vmatpush1.msra.mxu0 0.0
        %3947 = vmatprep.subr.mxu0 0.0
        %3948 = vmatpush1.msra.mxu0 0.0
        %3949 = vmatprep.subr.mxu0 0.0
        %3950 = vmatpush1.msra.mxu0 0.0
        %3951 = vmatprep.subr.mxu0 0.0
        %3952 = vmatpush1.msra.mxu0 0.0
        %3953 = vmatprep.subr.mxu0 0.0
        %3954 = vmatpush1.msra.mxu0 0.0
        %3955 = vmatprep.subr.mxu0 0.0
        %3956 = vmatpush1.msra.mxu0 0.0
        %3957 = vmatprep.subr.mxu0 0.0
        %3958 = vmatpush1.msra.mxu0 0.0
        %3959 = vmatprep.subr.mxu0 0.0
        %3960 = vmatpush1.msra.mxu0 0.0
        %3961 = vmatprep.subr.mxu0 0.0
        %3962 = vmatpush1.msra.mxu0 0.0
        %3963 = vmatprep.subr.mxu0 0.0
        %3964 = vmatpush1.msra.mxu0 0.0
        %3965 = vmatprep.subr.mxu0 0.0
        %3966 = vmatpush1.msra.mxu0 0.0
        %3967 = vmatprep.subr.mxu0 0.0
        %3968 = vmatpush1.msra.mxu0 0.0
        %3969 = vmatprep.subr.mxu0 0.0
        %3970 = vmatpush1.msra.mxu0 0.0
        %3971 = vmatprep.subr.mxu0 0.0
        %3972 = vmatpush1.msra.mxu0 0.0
        %3973 = vmatprep.subr.mxu0 0.0
        %3974 = vmatpush1.msra.mxu0 0.0
        %3975 = vmatprep.subr.mxu0 0.0
        %3976 = vmatpush1.msra.mxu0 0.0
        %3977 = vmatprep.subr.mxu0 0.0
        %3978 = vmatpush1.msra.mxu0 0.0
        %3979 = vmatprep.subr.mxu0 0.0
        %3980 = vmatpush1.msra.mxu0 0.0
        %3981 = vmatprep.subr.mxu0 0.0
        %3982 = vmatpush1.msra.mxu0 0.0
        %3983 = vmatprep.subr.mxu0 0.0
        %3984 = vmatpush1.msra.mxu0 0.0
        %3985 = vmatprep.subr.mxu0 0.0
        %3986 = vmatpush1.msra.mxu0 0.0
        %3987 = vmatprep.subr.mxu0 0.0
        %3988 = vmatpush1.msra.mxu0 0.0
        %3989 = vmatprep.subr.mxu0 0.0
        %3990 = vmatpush1.msra.mxu0 0.0
        %3991 = vmatprep.subr.mxu0 0.0
        %3992 = vmatpush1.msra.mxu0 0.0
        %3993 = vmatprep.mubr.f32.mxu0 0.0
        %3994 = vmatmul.mubr.f32.gmra.mrb[0].mxu0 %v3927
        %v3995 = vpop.f32.mrb[0].mxu0
        %v3996 = vadd.f32 %v3924, %v3995
        %v3997 = vpop.f32.mrb[0].mxu0
        %3998 = vdwg.mxu0
        %vm3999 = vcmask 31744
        %4000 = vst.msk [vmem:[%s939] sm:$0xff] %vm3999, %v3996
        %p4001 = scmp.lt.s32.totalorder %s46, 1
        %s4002 = scalar_select %p4001, %s46, 1
        %s4003 = smul.addr %s4002, 8
        %s4004 = scalar_lea.vmem %s24, %s4003
        // Predicated region
        $region165: #{tpu_custom_call.1} parent=115 // pred_check
          %p4005 = pneg %p583
        $region166: #{tpu_custom_call.1} parent=115 // pred_check_branch
          %4007 = sbr.rel (%p4005) target = $region168
        $region167: #{tpu_custom_call.1} parent=115 // pred_region
          _
        $region168: #{tpu_custom_call.1} parent=115 // pred_fallthru
          _
      $region116: #{tpu_custom_call.1} parent=5 // pred_fallthru
        _
      %p4008 = scmp.le.s32.totalorder 2, %s41
      // Predicated region
      $region169: #{tpu_custom_call.1} parent=5 // pred_check
        %p4009 = pneg %p4008
      $region170: #{tpu_custom_call.1} parent=5 // pred_check_branch
        %4011 = sbr.rel (%p4009) target = $region172
      $region171: #{tpu_custom_call.1} parent=5 // pred_region
        %s4012 = ssub.s32 %s41, 2
        // Predicated region
        $region173: #{tpu_custom_call.1} parent=171 // pred_check
          %p4013 = pneg %p589
        $region174: #{tpu_custom_call.1} parent=171 // pred_check_branch
          %4015 = sbr.rel (%p4013) target = $region176
        $region175: #{tpu_custom_call.1} parent=171 // pred_region
          %p4016 = scmp.lt.s32.totalorder %s47, 1
          %s4017 = scalar_select %p4016, %s47, 1
          %s4018 = smul.addr %s4017, 8
          %s4019 = scalar_lea.vmem %s24, %s4018
        $region176: #{tpu_custom_call.1} parent=171 // pred_fallthru
          _
      $region172: #{tpu_custom_call.1} parent=5 // pred_fallthru
        _
    $region6: #{tpu_custom_call.1} parent=1 // loop_footer
      %s45 = sadd.s32 1, %s41
    $region7: #{tpu_custom_call.1} parent=1 // loop_footer_branch
      %40 = sbr.rel target = $region3
    $region8: #{tpu_custom_call.1} parent=1 // loop_exit
      _
    %4020 = vsyncpa [#allocation6], 1
    %s4021 = scalar_lea.sflag [#allocation6], 1
    %4022 = vsyncpa %s4021, 1
    %4023 = vsyncpa [#allocation8], 1
    %s4024 = scalar_lea.sflag [#allocation8], 1
    %4025 = vsyncpa %s4024, 1
    %4026 = vsyncpa [#allocation11], 1
    %4027 = vsyncpa [#allocation14], 1
    %4028 = vsyncpa [#allocation17], 1
    %4029 = vsyncpa [#allocation20], 1
    %4030 = vsyncpa [#allocation23], 1

</llo_original>
